<compile_context>
chip_gen: v6e
topology: v6e:2x2x1
jax: 0.10.0
libtpu: 0.0.40
codegen_flags: <defaults>
</compile_context>

<pallas_src>
import math

import jax
import jax.numpy as jnp
from jax import lax
from jax.experimental import pallas as pl
from jax.experimental.pallas import tpu as pltpu

_BN_EPS = 1e-5        # torch.nn.BatchNorm1d default eps
_LANES = 128


def _round8(x):
    return ((x + 7) // 8) * 8


def _pad2(m, rows, cols):
    return jnp.pad(m, ((0, rows - m.shape[0]), (0, cols - m.shape[1])))


# ---------------------------------------------------------------------------
# Parameter-slab layout (static, size-derived).
#   weight slab: bf16 [w_rows, 128]   biases / BN gamma,beta: f32 [16, 128]
# ---------------------------------------------------------------------------
def _weight_layout(f_node, g, lp0, lp1, hid, lat):
    shapes = [
        ("wg",  f_node, lp0),      # node gating Linear (out padded 7 -> 8)
        ("w1c", lp0, 3 * lp0),     # TAGConv layer 1, [w0 | w1 | w2] (Horner form)
        ("w2c", lp0, 3 * lp1),     # TAGConv layer 2, [w0 | w1 | w2]
        ("wd",  lp1, g),           # final dense projection
        ("we1", g, hid),           # VAE enc1
        ("we2", hid, 2 * lat),     # VAE [enc21 | enc22]
        ("wd1", lat, hid),         # VAE dec1
        ("wd2", hid, 2 * g),       # VAE [dec21 | dec22]
    ]
    layout, off = {}, 0
    for name, r, c in shapes:
        assert c <= _LANES
        layout[name] = (off, r, c)
        off += _round8(r)
    return layout, off


_VEC_ORDER = ("bg", "g1", "b1", "g2", "b2", "bd", "be1", "be2", "bd1", "bd2")


def pack_weight_slab(ep, vp, layout, total_rows):
    lp0 = layout["w1c"][1]
    lp1 = layout["w2c"][2] // 3
    mats = {
        "wg":  _pad2(ep["wg"], ep["wg"].shape[0], lp0),
        "w1c": jnp.concatenate([_pad2(ep["w10"], lp0, lp0),
                                _pad2(ep["w11"], lp0, lp0),
                                _pad2(ep["w12"], lp0, lp0)], axis=1),
        "w2c": jnp.concatenate([_pad2(ep["w20"], lp0, lp1),
                                _pad2(ep["w21"], lp0, lp1),
                                _pad2(ep["w22"], lp0, lp1)], axis=1),
        "wd":  _pad2(ep["wd"], lp1, ep["wd"].shape[1]),
        "we1": vp["we1"],
        "we2": jnp.concatenate([vp["we21"], vp["we22"]], axis=1),
        "wd1": vp["wd1"],
        "wd2": jnp.concatenate([vp["wd21"], vp["wd22"]], axis=1),
    }
    slab = jnp.zeros((total_rows, _LANES), jnp.float32)
    for name, mat in mats.items():
        off, r, c = layout[name]
        assert mat.shape == (r, c), (name, mat.shape, (r, c))
        slab = slab.at[off:off + r, :c].set(mat)
    return slab.astype(jnp.bfloat16)      # bf16 MXU operands; halves the weight DMA


def pack_vector_slab(ep, vp, layout):
    lp0 = layout["w1c"][1]
    lp1 = layout["w2c"][2] // 3

    def padv(v, width):
        return jnp.pad(v, ((0, 0), (0, width - v.shape[1])))

    vecs = {
        "bg":  padv(ep["bg"], lp0),
        "g1":  padv(ep["g1"], lp0), "b1": padv(ep["b1"], lp0),
        "g2":  padv(ep["g2"], lp1), "b2": padv(ep["b2"], lp1),
        "bd":  ep["bd"],
        "be1": vp["be1"],
        "be2": jnp.concatenate([vp["be21"], vp["be22"]], axis=1),
        "bd1": vp["bd1"],
        "bd2": jnp.concatenate([vp["bd21"], vp["bd22"]], axis=1),
    }
    slab = jnp.zeros((_round8(len(_VEC_ORDER)), _LANES), jnp.float32)
    for i, name in enumerate(_VEC_ORDER):
        v = vecs[name]
        slab = slab.at[i:i + 1, :v.shape[1]].set(v)
    return slab


# ---------------------------------------------------------------------------
# Fused, batched kernel: GraphEmbed + GraphRegionEncoder.autoencode
# ---------------------------------------------------------------------------
def make_graph_region_encoder(*, n_nodes, f_node, g, l0, l1, hid, lat,
                              graphs_per_block=8):
    lp0, lp1 = _round8(l0), _round8(l1)
    layout, w_rows = _weight_layout(f_node, g, lp0, lp1, hid, lat)
    v_rows = _round8(len(_VEC_ORDER))
    vrow_idx = {name: i for i, name in enumerate(_VEC_ORDER)}
    bg_ = graphs_per_block
    m = bg_ * n_nodes                       # sublane rows per grid step
    assert m % 8 == 0
    assert 2 * g + 1 <= _LANES and lat + g <= _LANES

    log2pi = float(math.log2(math.pi))      # mirrors torch.log2(torch.tensor([pi]))

    def kernel(feats_ref, adj_ref, eps_ref, w_ref, v_ref, out_ref):
        f32, bf16 = jnp.float32, jnp.bfloat16

        def wmat(name):
            off, r, c = layout[name]
            return w_ref[off:off + r, :c]

        def vrow(name, c):
            i = vrow_idx[name]
            return v_ref[i:i + 1, :c]

        def mxdot(x, w):                    # bf16 MXU matmul, f32 accumulate
            return jnp.dot(x.astype(bf16), w, preferred_element_type=f32)

        def f32dot(a, b):                   # tiny f32 matmuls (pooling / BN stats)
            return jnp.dot(a, b, preferred_element_type=f32)

        feats = feats_ref[...]              # [M, F]  bf16
        adj = adj_ref[...]                  # [M, M]  bf16, block-diag over BG graphs

        # Segment-pooling operators (constant structure, built from iota; pooling via MXU
        # avoids sublane reshapes for the per-graph BatchNorm statistics / mean pooling).
        col = lax.broadcasted_iota(jnp.int32, (bg_, m), 1)
        row = lax.broadcasted_iota(jnp.int32, (bg_, m), 0)
        pool = ((col >= row * n_nodes) & (col < (row + 1) * n_nodes)).astype(f32)  # [BG, M]
        rowt = lax.broadcasted_iota(jnp.int32, (m, bg_), 0)
        colt = lax.broadcasted_iota(jnp.int32, (m, bg_), 1)
        bcast = ((rowt >= colt * n_nodes)
                 & (rowt < (colt + 1) * n_nodes)).astype(f32)                       # [M, BG]
        inv_n = f32(1.0 / n_nodes)

        # ---- GraphEmbed ----
        # node gating: sigmoid(Linear(features))
        h = jax.nn.sigmoid(mxdot(feats, wmat("wg")) + vrow("bg", lp0))   # [M, lp0] f32

        def tag_bn_relu(h, wcat, lout, gamma, beta):
            # TAGConv K=2 (bias=False), Horner form: t = h @ [w0|w1|w2]
            #   y = t0 + A (t1 + A t2)   ==  h w0 + (A h) w1 + (A^2 h) w2
            t = mxdot(h, wcat)                                          # [M, 3*lout]
            t0 = t[:, 0:lout]
            t1 = t[:, lout:2 * lout]
            t2 = t[:, 2 * lout:3 * lout]
            inner = t1 + jnp.dot(adj, t2.astype(jnp.bfloat16),
                                 preferred_element_type=jnp.float32)
            y = t0 + jnp.dot(adj, inner.astype(jnp.bfloat16),
                             preferred_element_type=jnp.float32)
            # BatchNorm1d per graph (training-mode batch stats, biased variance)
            mean = f32dot(pool, y) * inv_n                              # [BG, lout]
            d = y - f32dot(bcast, mean)                                 # centered
            var = f32dot(pool, d * d) * inv_n                           # [BG, lout]
            s = gamma * lax.rsqrt(var + _BN_EPS)                        # hoisted scale
            y = d * f32dot(bcast, s) + beta
            return jnp.maximum(y, 0.0)                                  # ReLU

        h = tag_bn_relu(h, wmat("w1c"), lp0, vrow("g1", lp0), vrow("b1", lp0))
        h = tag_bn_relu(h, wmat("w2c"), lp1, vrow("g2", lp1), vrow("b2", lp1))

        h = mxdot(h, wmat("wd")) + vrow("bd", g)                        # [M, G]
        z = f32dot(pool, h) * inv_n                                     # [BG, G] node-mean

        # ---- GraphRegionEncoder.autoencode (batched over BG graphs) ----
        h1 = jnp.maximum(mxdot(z, wmat("we1")) + vrow("be1", hid), 0.0)
        ml = mxdot(h1, wmat("we2")) + vrow("be2", 2 * lat)
        mu = ml[:, :lat]
        logvar = ml[:, lat:2 * lat]

        e1 = jnp.exp(0.5 * logvar)                                      # std (single exp)
        latent = mu + eps_ref[:, 0:lat] * e1                            # reparameterize

        hd = jnp.maximum(mxdot(latent, wmat("wd1")) + vrow("bd1", hid), 0.0)
        zml = mxdot(hd, wmat("wd2")) + vrow("bd2", 2 * g)
        zmu = zml[:, :g]
        zlogvar = zml[:, g:2 * g]

        e2 = jnp.exp(0.5 * zlogvar)                                     # std (single exp)
        zest = zmu + eps_ref[:, lat:lat + g] * e2
        # (z-zmu)^2 / (2 exp(zlogvar)) == 0.5 (z-zmu)^2 * recip(e2*e2)  (EUP approx recip)
        lrec = (log2pi + zlogvar
                + 0.5 * (z - zmu) ** 2 * pl.reciprocal(e2 * e2, approx=True))
        # exp(logvar) == e1*e1  (re-uses the single exp)
        kld = -0.5 * jnp.sum(1.0 + logvar - mu * mu - e1 * e1,
                             axis=1, keepdims=True)                     # [BG, 1]

        # Single unmasked lane-dense store: [zest | lrec | kld | 0-pad]
        pad = jnp.zeros((bg_, _LANES - (2 * g + 1)), jnp.float32)
        out_ref[...] = jnp.concatenate([zest, lrec, kld, pad], axis=1)

    def forward(feats_nodes, adj_blockdiag, eps_pack, w_slab, v_slab):
        total_nodes = feats_nodes.shape[0]
        n_graphs = total_nodes // n_nodes
        assert n_graphs % bg_ == 0
        n_blocks = n_graphs // bg_

        flops_block = 2 * (
            m * f_node * lp0                                    # gating
            + 2 * (m * lp0 * 3 * lp0 + 2 * m * m * lp0)         # TAG layers (approx)
            + m * lp1 * g                                       # dense projection
            + 2 * bg_ * m * g                                   # pooling / BN matmuls
            + bg_ * (g * hid + hid * 2 * lat + lat * hid + hid * 2 * g))
        cost = pl.CostEstimate(
            flops=int(flops_block * n_blocks),
            transcendentals=int((m * lp0 + bg_ * (2 * lat + 2 * g)) * n_blocks),
            bytes_accessed=int(feats_nodes.size * 2 + adj_blockdiag.size * 2
                               + eps_pack.size * 4 + w_slab.size * 2
                               + v_slab.size * 4 + n_graphs * _LANES * 4))

        out = pl.pallas_call(
            kernel,
            out_shape=jax.ShapeDtypeStruct((n_graphs, _LANES), jnp.float32),
            grid=(n_blocks,),
            in_specs=[
                pl.BlockSpec((m, f_node), lambda i: (i, 0)),          # node features
                pl.BlockSpec((m, m), lambda i: (i, i)),               # diagonal adj blocks
                pl.BlockSpec((bg_, _LANES), lambda i: (i, 0)),        # packed eps noise
                # parameter slabs: constant index -> fetched once, VMEM-resident across grid
                pl.BlockSpec((w_rows, _LANES), lambda i: (0, 0)),
                pl.BlockSpec((v_rows, _LANES), lambda i: (0, 0)),
            ],
            out_specs=pl.BlockSpec((bg_, _LANES), lambda i: (i, 0)),
            compiler_params=pltpu.CompilerParams(
                dimension_semantics=("parallel",)),   # shards blocks over v7x's 2 TCs
            cost_estimate=cost,
        )(feats_nodes, adj_blockdiag, eps_pack, w_slab, v_slab)
        # per-graph outputs: z_estimate [B, G], loss_rec [B, G], KLD [B]
        return out[:, :g], out[:, g:2 * g], out[:, 2 * g]

    return jax.jit(forward), layout, w_rows, v_rows


# ---------------------------------------------------------------------------
# Pure-JAX per-graph reference (numerics check of kernel + slab packing)
# ---------------------------------------------------------------------------
def _reference_forward(feats, adj, ep, vp, eps1, eps2):
    hp = jax.lax.Precision.HIGHEST
    dot = lambda a, b: jnp.dot(a, b, precision=hp)
    h = jax.nn.sigmoid(dot(feats, ep["wg"]) + ep["bg"])

    def tag_bn_relu(h, w0, w1, w2, gamma, beta):
        ah = dot(adj, h)
        a2h = dot(adj, ah)
        y = dot(h, w0) + dot(ah, w1) + dot(a2h, w2)
        mean = jnp.mean(y, axis=0, keepdims=True)
        var = jnp.mean((y - mean) ** 2, axis=0, keepdims=True)
        y = gamma * (y - mean) * jax.lax.rsqrt(var + _BN_EPS) + beta
        return jnp.maximum(y, 0.0)

    h = tag_bn_relu(h, ep["w10"], ep["w11"], ep["w12"], ep["g1"], ep["b1"])
    h = tag_bn_relu(h, ep["w20"], ep["w21"], ep["w22"], ep["g2"], ep["b2"])
    h = dot(h, ep["wd"]) + ep["bd"]
    z = jnp.mean(h, axis=0, keepdims=True)

    h1 = jnp.maximum(dot(z, vp["we1"]) + vp["be1"], 0.0)
    mu = dot(h1, vp["we21"]) + vp["be21"]
    logvar = dot(h1, vp["we22"]) + vp["be22"]
    latent = mu + eps1 * jnp.exp(0.5 * logvar)
    hd = jnp.maximum(dot(latent, vp["wd1"]) + vp["bd1"], 0.0)
    zmu = dot(hd, vp["wd21"]) + vp["bd21"]
    zlogvar = dot(hd, vp["wd22"]) + vp["bd22"]
    zest = zmu + eps2 * jnp.exp(0.5 * zlogvar)
    log2pi = jnp.float32(math.log2(math.pi))
    lrec = log2pi + zlogvar + (z - zmu) ** 2 / (2.0 * jnp.exp(zlogvar))
    kld = -0.5 * jnp.sum(1.0 + logvar - mu * mu - jnp.exp(logvar))
    return zest[0], lrec[0], kld


# ---------------------------------------------------------------------------
# Deterministic parameter / input construction + checks
# ---------------------------------------------------------------------------
if __name__ == "__main__":
    key = jax.random.PRNGKey(0)

    # sizes implied by the module (kept small)
    B = 32                       # graphs per call (batched for grid/MXU efficiency)
    BG = 8                       # graphs per grid step -> 8*16 = 128 sublane rows
    N = 16                       # nodes per graph
    F_NODE = 32                  # node_emb_size
    G_EMB = 32                   # graph_emb_size (= _navigation_space)
    L0, L1 = 7, 7                # size_layers (module default)
    HID = max(G_EMB // 2, 5)     # 16
    LAT = max(HID // 2, 5)       # 8

    keys = jax.random.split(key, 20)

    # Make weight / input values exactly bf16-representable so the f32 reference sees the
    # same numbers the bf16 kernel slabs see (isolates kernel-math error from quantization).
    def bf16_round(x):
        return x.astype(jnp.bfloat16).astype(jnp.float32)

    # per-graph dense symmetric adjacency, symmetric normalization D^-1/2 A D^-1/2
    a = (jax.random.uniform(keys[0], (B, N, N)) > 0.7).astype(jnp.float32)
    a = jnp.maximum(a, jnp.swapaxes(a, 1, 2)) * (1.0 - jnp.eye(N, dtype=jnp.float32))[None]
    deg = jnp.maximum(a.sum(axis=2), 1.0)
    dinv = 1.0 / jnp.sqrt(deg)
    adj = bf16_round(dinv[:, :, None] * a * dinv[:, None, :])          # [B, N, N]
    feats = bf16_round(jax.random.normal(keys[1], (B, N, F_NODE), jnp.float32))

    def _lin(k, fan_in, fan_out):
        kw, kb = jax.random.split(k)
        bound = 1.0 / math.sqrt(fan_in)
        w = jax.random.uniform(kw, (fan_in, fan_out), jnp.float32, -bound, bound)
        b = jax.random.uniform(kb, (1, fan_out), jnp.float32, -bound, bound)
        return bf16_round(w), b

    # GraphEmbed parameters
    wg, bg = _lin(keys[2], F_NODE, L0)
    w10 = bf16_round(jax.random.normal(keys[3], (L0, L0), jnp.float32) * 0.2)
    w11 = bf16_round(jax.random.normal(keys[4], (L0, L0), jnp.float32) * 0.2)
    w12 = bf16_round(jax.random.normal(keys[5], (L0, L0), jnp.float32) * 0.2)
    w20 = bf16_round(jax.random.normal(keys[6], (L0, L1), jnp.float32) * 0.2)
    w21 = bf16_round(jax.random.normal(keys[7], (L0, L1), jnp.float32) * 0.2)
    w22 = bf16_round(jax.random.normal(keys[8], (L0, L1), jnp.float32) * 0.2)
    wd, bd = _lin(keys[9], L1, G_EMB)
    embed_params = dict(
        wg=wg, bg=bg,
        w10=w10, w11=w11, w12=w12,
        g1=jnp.ones((1, L0), jnp.float32), b1=jnp.zeros((1, L0), jnp.float32),
        w20=w20, w21=w21, w22=w22,
        g2=jnp.ones((1, L1), jnp.float32), b2=jnp.zeros((1, L1), jnp.float32),
        wd=wd, bd=bd,
    )

    # VAE (GraphRegionEncoder) parameters
    we1, be1 = _lin(keys[10], G_EMB, HID)
    we21, be21 = _lin(keys[11], HID, LAT)
    we22, be22 = _lin(keys[12], HID, LAT)
    wd1, bd1 = _lin(keys[13], LAT, HID)
    wd21, bd21 = _lin(keys[14], HID, G_EMB)
    wd22, bd22 = _lin(keys[15], HID, G_EMB)
    vae_params = dict(
        we1=we1, be1=be1, we21=we21, be21=be21, we22=we22, be22=be22,
        wd1=wd1, bd1=bd1, wd21=wd21, bd21=bd21, wd22=wd22, bd22=bd22,
    )

    # torch.randn_like noise, precomputed per graph (deterministic), lane-dense packed
    eps1 = jax.random.normal(keys[16], (B, LAT), jnp.float32)
    eps2 = jax.random.normal(keys[17], (B, G_EMB), jnp.float32)
    eps_pack = jnp.zeros((B, _LANES), jnp.float32)
    eps_pack = eps_pack.at[:, :LAT].set(eps1)
    eps_pack = eps_pack.at[:, LAT:LAT + G_EMB].set(eps2)

    # kernel inputs: stacked node features + block-diagonal normalized adjacency (bf16)
    feats_nodes = feats.reshape(B * N, F_NODE).astype(jnp.bfloat16)
    adj_bd = (jnp.eye(B, dtype=jnp.float32)[:, None, :, None]
              * adj[:, :, None, :]).reshape(B * N, B * N).astype(jnp.bfloat16)

    forward, layout, w_rows, v_rows = make_graph_region_encoder(
        n_nodes=N, f_node=F_NODE, g=G_EMB, l0=L0, l1=L1, hid=HID, lat=LAT,
        graphs_per_block=BG)
    w_slab = pack_weight_slab(embed_params, vae_params, layout, w_rows)
    v_slab = pack_vector_slab(embed_params, vae_params, layout)

    z_estimate, loss_rec, kld = jax.block_until_ready(
        forward(feats_nodes, adj_bd, eps_pack, w_slab, v_slab))

    # shape / finiteness checks
    assert z_estimate.shape == (B, G_EMB)
    assert loss_rec.shape == (B, G_EMB)
    assert kld.shape == (B,)
    assert bool(jnp.all(jnp.isfinite(z_estimate)))
    assert bool(jnp.all(jnp.isfinite(loss_rec)))
    assert bool(jnp.all(jnp.isfinite(kld)))

    # numerics check against a pure-JAX f32 per-graph reference of the same forward math
    # (tolerances account for bf16 MXU activation rounding in the kernel)
    ref = jax.vmap(lambda f, a_, e1, e2: _reference_forward(
        f, a_, embed_params, vae_params, e1[None, :], e2[None, :]))
    z_ref, lrec_ref, kld_ref = ref(feats, adj, eps1, eps2)

    assert bool(jnp.allclose(z_estimate, z_ref, rtol=2e-2, atol=5e-2))
    assert bool(jnp.allclose(loss_rec, lrec_ref, rtol=2e-2, atol=5e-2))
    assert bool(jnp.allclose(kld, kld_ref, rtol=5e-2, atol=1e-1))

    print("KERNEL_OK")
</pallas_src>

<mosaic_0001>
module attributes {stable_mosaic.version = 11 : i64} {
  func.func @kernel(%arg0: i32, %arg1: memref<128x32xbf16, #tpu.memory_space<vmem>>, %arg2: memref<128x128xbf16, #tpu.memory_space<vmem>>, %arg3: memref<8x128xf32, #tpu.memory_space<vmem>>, %arg4: memref<128x128xbf16, #tpu.memory_space<vmem>>, %arg5: memref<16x128xf32, #tpu.memory_space<vmem>>, %arg6: memref<8x128xf32, #tpu.memory_space<vmem>>) attributes {dimension_semantics = [#tpu.dimension_semantics<parallel>], iteration_bounds = array<i64: 4>, scalar_prefetch = 0 : i64, scratch_operands = 0 : i64, tpu.core_type = #tpu.core_type<tc>, window_params = [{transform_indices = @transform_0, window_bounds = array<i64: 128, 32>}, {transform_indices = @transform_1, window_bounds = array<i64: 128, 128>}, {transform_indices = @transform_2, window_bounds = array<i64: 8, 128>}, {pipeline_mode = #tpu.pipeline_mode<synchronous>, transform_indices = @transform_3, window_bounds = array<i64: 128, 128>}, {pipeline_mode = #tpu.pipeline_mode<synchronous>, transform_indices = @transform_4, window_bounds = array<i64: 16, 128>}, {transform_indices = @transform_5, window_bounds = array<i64: 8, 128>}]} {
    %c0 = arith.constant 0 : index
    %c0_0 = arith.constant 0 : index
    %0 = vector.load %arg1[%c0, %c0_0] : memref<128x32xbf16, #tpu.memory_space<vmem>>, vector<128x32xbf16>
    %c0_1 = arith.constant 0 : index
    %c0_2 = arith.constant 0 : index
    %1 = vector.load %arg2[%c0_1, %c0_2] : memref<128x128xbf16, #tpu.memory_space<vmem>>, vector<128x128xbf16>
    %2 = tpu.iota {dimensions = array<i32: 1>} : vector<8x128xi32>
    %3 = tpu.iota {dimensions = array<i32: 0>} : vector<8x128xi32>
    %c16_i32 = arith.constant 16 : i32
    %4 = vector.broadcast %c16_i32 : i32 to vector<8x128xi32>
    %5 = arith.muli %3, %4 : vector<8x128xi32>
    %6 = arith.cmpi sge, %2, %5 : vector<8x128xi32>
    %c1_i32 = arith.constant 1 : i32
    %7 = vector.broadcast %c1_i32 : i32 to vector<8x128xi32>
    %8 = arith.addi %3, %7 : vector<8x128xi32>
    %c16_i32_3 = arith.constant 16 : i32
    %9 = vector.broadcast %c16_i32_3 : i32 to vector<8x128xi32>
    %10 = arith.muli %8, %9 : vector<8x128xi32>
    %11 = arith.cmpi slt, %2, %10 : vector<8x128xi32>
    %12 = arith.andi %6, %11 : vector<8x128xi1>
    %13 = arith.extui %12 : vector<8x128xi1> to vector<8x128xi32>
    %14 = arith.sitofp %13 : vector<8x128xi32> to vector<8x128xf32>
    %15 = tpu.iota {dimensions = array<i32: 0>} : vector<128x8xi32>
    %16 = tpu.iota {dimensions = array<i32: 1>} : vector<128x8xi32>
    %c16_i32_4 = arith.constant 16 : i32
    %17 = vector.broadcast %c16_i32_4 : i32 to vector<128x8xi32>
    %18 = arith.muli %16, %17 : vector<128x8xi32>
    %19 = arith.cmpi sge, %15, %18 : vector<128x8xi32>
    %c1_i32_5 = arith.constant 1 : i32
    %20 = vector.broadcast %c1_i32_5 : i32 to vector<128x8xi32>
    %21 = arith.addi %16, %20 : vector<128x8xi32>
    %c16_i32_6 = arith.constant 16 : i32
    %22 = vector.broadcast %c16_i32_6 : i32 to vector<128x8xi32>
    %23 = arith.muli %21, %22 : vector<128x8xi32>
    %24 = arith.cmpi slt, %15, %23 : vector<128x8xi32>
    %25 = arith.andi %19, %24 : vector<128x8xi1>
    %26 = arith.extui %25 : vector<128x8xi1> to vector<128x8xi32>
    %27 = arith.sitofp %26 : vector<128x8xi32> to vector<128x8xf32>
    %c0_7 = arith.constant 0 : index
    %c0_8 = arith.constant 0 : index
    %28 = vector.load %arg4[%c0_7, %c0_8] : memref<128x128xbf16, #tpu.memory_space<vmem>>, vector<32x8xbf16>
    %cst = arith.constant dense<0.000000e+00> : vector<128x8xf32>
    %29 = tpu.matmul %0, %28, %cst {dimension_numbers = #tpu.dot_dimension_numbers<[1], [0], [0], [1], [0, 0, 1, 1], [], []>} : vector<128x32xbf16>, vector<32x8xbf16>, vector<128x8xf32> -> vector<128x8xf32>
    %c0_9 = arith.constant 0 : index
    %c0_10 = arith.constant 0 : index
    %30 = vector.load %arg5[%c0_9, %c0_10] : memref<16x128xf32, #tpu.memory_space<vmem>>, vector<1x8xf32>
    %31 = vector.broadcast %30 : vector<1x8xf32> to vector<128x8xf32>
    %32 = arith.addf %29, %31 : vector<128x8xf32>
    %33 = arith.negf %32 : vector<128x8xf32>
    %34 = math.exp %33 : vector<128x8xf32>
    %cst_11 = arith.constant 1.000000e+00 : f32
    %35 = vector.broadcast %cst_11 : f32 to vector<128x8xf32>
    %36 = arith.addf %35, %34 : vector<128x8xf32>
    %37 = arith.divf %35, %36 : vector<128x8xf32>
    %c32 = arith.constant 32 : index
    %c0_12 = arith.constant 0 : index
    %38 = vector.load %arg4[%c32, %c0_12] : memref<128x128xbf16, #tpu.memory_space<vmem>>, vector<8x24xbf16>
    %c1 = arith.constant 1 : index
    %c0_13 = arith.constant 0 : index
    %39 = vector.load %arg5[%c1, %c0_13] : memref<16x128xf32, #tpu.memory_space<vmem>>, vector<1x8xf32>
    %c2 = arith.constant 2 : index
    %c0_14 = arith.constant 0 : index
    %40 = vector.load %arg5[%c2, %c0_14] : memref<16x128xf32, #tpu.memory_space<vmem>>, vector<1x8xf32>
    %41 = arith.truncf %37 : vector<128x8xf32> to vector<128x8xbf16>
    %cst_15 = arith.constant dense<0.000000e+00> : vector<128x24xf32>
    %42 = tpu.matmul %41, %38, %cst_15 {dimension_numbers = #tpu.dot_dimension_numbers<[1], [0], [0], [1], [0, 0, 1, 1], [], []>} : vector<128x8xbf16>, vector<8x24xbf16>, vector<128x24xf32> -> vector<128x24xf32>
    %43 = vector.extract_strided_slice %42 {offsets = [0, 0], sizes = [128, 8], strides = [1, 1]} : vector<128x24xf32> to vector<128x8xf32>
    %44 = vector.extract_strided_slice %42 {offsets = [0, 8], sizes = [128, 8], strides = [1, 1]} : vector<128x24xf32> to vector<128x8xf32>
    %45 = vector.extract_strided_slice %42 {offsets = [0, 16], sizes = [128, 8], strides = [1, 1]} : vector<128x24xf32> to vector<128x8xf32>
    %46 = arith.truncf %45 : vector<128x8xf32> to vector<128x8xbf16>
    %cst_16 = arith.constant dense<0.000000e+00> : vector<128x8xf32>
    %47 = tpu.matmul %1, %46, %cst_16 {dimension_numbers = #tpu.dot_dimension_numbers<[1], [0], [0], [1], [0, 0, 1, 1], [], []>} : vector<128x128xbf16>, vector<128x8xbf16>, vector<128x8xf32> -> vector<128x8xf32>
    %48 = arith.addf %44, %47 : vector<128x8xf32>
    %49 = arith.truncf %48 : vector<128x8xf32> to vector<128x8xbf16>
    %cst_17 = arith.constant dense<0.000000e+00> : vector<128x8xf32>
    %50 = tpu.matmul %1, %49, %cst_17 {dimension_numbers = #tpu.dot_dimension_numbers<[1], [0], [0], [1], [0, 0, 1, 1], [], []>} : vector<128x128xbf16>, vector<128x8xbf16>, vector<128x8xf32> -> vector<128x8xf32>
    %51 = arith.addf %43, %50 : vector<128x8xf32>
    %cst_18 = arith.constant dense<0.000000e+00> : vector<8x8xf32>
    %52 = tpu.matmul %14, %51, %cst_18 {dimension_numbers = #tpu.dot_dimension_numbers<[1], [0], [0], [1], [0, 0, 1, 1], [], []>} : vector<8x128xf32>, vector<128x8xf32>, vector<8x8xf32> -> vector<8x8xf32>
    %cst_19 = arith.constant 6.250000e-02 : f32
    %53 = vector.broadcast %cst_19 : f32 to vector<8x8xf32>
    %54 = arith.mulf %52, %53 : vector<8x8xf32>
    %cst_20 = arith.constant dense<0.000000e+00> : vector<128x8xf32>
    %55 = tpu.matmul %27, %54, %cst_20 {dimension_numbers = #tpu.dot_dimension_numbers<[1], [0], [0], [1], [0, 0, 1, 1], [], []>} : vector<128x8xf32>, vector<8x8xf32>, vector<128x8xf32> -> vector<128x8xf32>
    %56 = arith.subf %51, %55 : vector<128x8xf32>
    %57 = arith.mulf %56, %56 : vector<128x8xf32>
    %cst_21 = arith.constant dense<0.000000e+00> : vector<8x8xf32>
    %58 = tpu.matmul %14, %57, %cst_21 {dimension_numbers = #tpu.dot_dimension_numbers<[1], [0], [0], [1], [0, 0, 1, 1], [], []>} : vector<8x128xf32>, vector<128x8xf32>, vector<8x8xf32> -> vector<8x8xf32>
    %cst_22 = arith.constant 6.250000e-02 : f32
    %59 = vector.broadcast %cst_22 : f32 to vector<8x8xf32>
    %60 = arith.mulf %58, %59 : vector<8x8xf32>
    %cst_23 = arith.constant 9.99999974E-6 : f32
    %61 = vector.broadcast %cst_23 : f32 to vector<8x8xf32>
    %62 = arith.addf %60, %61 : vector<8x8xf32>
    %63 = math.rsqrt %62 : vector<8x8xf32>
    %64 = vector.broadcast %39 : vector<1x8xf32> to vector<8x8xf32>
    %65 = arith.mulf %64, %63 : vector<8x8xf32>
    %cst_24 = arith.constant dense<0.000000e+00> : vector<128x8xf32>
    %66 = tpu.matmul %27, %65, %cst_24 {dimension_numbers = #tpu.dot_dimension_numbers<[1], [0], [0], [1], [0, 0, 1, 1], [], []>} : vector<128x8xf32>, vector<8x8xf32>, vector<128x8xf32> -> vector<128x8xf32>
    %67 = arith.mulf %56, %66 : vector<128x8xf32>
    %68 = vector.broadcast %40 : vector<1x8xf32> to vector<128x8xf32>
    %69 = arith.addf %67, %68 : vector<128x8xf32>
    %cst_25 = arith.constant 0.000000e+00 : f32
    %70 = vector.broadcast %cst_25 : f32 to vector<128x8xf32>
    %71 = arith.maximumf %69, %70 : vector<128x8xf32>
    %c40 = arith.constant 40 : index
    %c0_26 = arith.constant 0 : index
    %72 = vector.load %arg4[%c40, %c0_26] : memref<128x128xbf16, #tpu.memory_space<vmem>>, vector<8x24xbf16>
    %c3 = arith.constant 3 : index
    %c0_27 = arith.constant 0 : index
    %73 = vector.load %arg5[%c3, %c0_27] : memref<16x128xf32, #tpu.memory_space<vmem>>, vector<1x8xf32>
    %c4 = arith.constant 4 : index
    %c0_28 = arith.constant 0 : index
    %74 = vector.load %arg5[%c4, %c0_28] : memref<16x128xf32, #tpu.memory_space<vmem>>, vector<1x8xf32>
    %75 = arith.truncf %71 : vector<128x8xf32> to vector<128x8xbf16>
    %cst_29 = arith.constant dense<0.000000e+00> : vector<128x24xf32>
    %76 = tpu.matmul %75, %72, %cst_29 {dimension_numbers = #tpu.dot_dimension_numbers<[1], [0], [0], [1], [0, 0, 1, 1], [], []>} : vector<128x8xbf16>, vector<8x24xbf16>, vector<128x24xf32> -> vector<128x24xf32>
    %77 = vector.extract_strided_slice %76 {offsets = [0, 0], sizes = [128, 8], strides = [1, 1]} : vector<128x24xf32> to vector<128x8xf32>
    %78 = vector.extract_strided_slice %76 {offsets = [0, 8], sizes = [128, 8], strides = [1, 1]} : vector<128x24xf32> to vector<128x8xf32>
    %79 = vector.extract_strided_slice %76 {offsets = [0, 16], sizes = [128, 8], strides = [1, 1]} : vector<128x24xf32> to vector<128x8xf32>
    %80 = arith.truncf %79 : vector<128x8xf32> to vector<128x8xbf16>
    %cst_30 = arith.constant dense<0.000000e+00> : vector<128x8xf32>
    %81 = tpu.matmul %1, %80, %cst_30 {dimension_numbers = #tpu.dot_dimension_numbers<[1], [0], [0], [1], [0, 0, 1, 1], [], []>} : vector<128x128xbf16>, vector<128x8xbf16>, vector<128x8xf32> -> vector<128x8xf32>
    %82 = arith.addf %78, %81 : vector<128x8xf32>
    %83 = arith.truncf %82 : vector<128x8xf32> to vector<128x8xbf16>
    %cst_31 = arith.constant dense<0.000000e+00> : vector<128x8xf32>
    %84 = tpu.matmul %1, %83, %cst_31 {dimension_numbers = #tpu.dot_dimension_numbers<[1], [0], [0], [1], [0, 0, 1, 1], [], []>} : vector<128x128xbf16>, vector<128x8xbf16>, vector<128x8xf32> -> vector<128x8xf32>
    %85 = arith.addf %77, %84 : vector<128x8xf32>
    %cst_32 = arith.constant dense<0.000000e+00> : vector<8x8xf32>
    %86 = tpu.matmul %14, %85, %cst_32 {dimension_numbers = #tpu.dot_dimension_numbers<[1], [0], [0], [1], [0, 0, 1, 1], [], []>} : vector<8x128xf32>, vector<128x8xf32>, vector<8x8xf32> -> vector<8x8xf32>
    %cst_33 = arith.constant 6.250000e-02 : f32
    %87 = vector.broadcast %cst_33 : f32 to vector<8x8xf32>
    %88 = arith.mulf %86, %87 : vector<8x8xf32>
    %cst_34 = arith.constant dense<0.000000e+00> : vector<128x8xf32>
    %89 = tpu.matmul %27, %88, %cst_34 {dimension_numbers = #tpu.dot_dimension_numbers<[1], [0], [0], [1], [0, 0, 1, 1], [], []>} : vector<128x8xf32>, vector<8x8xf32>, vector<128x8xf32> -> vector<128x8xf32>
    %90 = arith.subf %85, %89 : vector<128x8xf32>
    %91 = arith.mulf %90, %90 : vector<128x8xf32>
    %cst_35 = arith.constant dense<0.000000e+00> : vector<8x8xf32>
    %92 = tpu.matmul %14, %91, %cst_35 {dimension_numbers = #tpu.dot_dimension_numbers<[1], [0], [0], [1], [0, 0, 1, 1], [], []>} : vector<8x128xf32>, vector<128x8xf32>, vector<8x8xf32> -> vector<8x8xf32>
    %cst_36 = arith.constant 6.250000e-02 : f32
    %93 = vector.broadcast %cst_36 : f32 to vector<8x8xf32>
    %94 = arith.mulf %92, %93 : vector<8x8xf32>
    %cst_37 = arith.constant 9.99999974E-6 : f32
    %95 = vector.broadcast %cst_37 : f32 to vector<8x8xf32>
    %96 = arith.addf %94, %95 : vector<8x8xf32>
    %97 = math.rsqrt %96 : vector<8x8xf32>
    %98 = vector.broadcast %73 : vector<1x8xf32> to vector<8x8xf32>
    %99 = arith.mulf %98, %97 : vector<8x8xf32>
    %cst_38 = arith.constant dense<0.000000e+00> : vector<128x8xf32>
    %100 = tpu.matmul %27, %99, %cst_38 {dimension_numbers = #tpu.dot_dimension_numbers<[1], [0], [0], [1], [0, 0, 1, 1], [], []>} : vector<128x8xf32>, vector<8x8xf32>, vector<128x8xf32> -> vector<128x8xf32>
    %101 = arith.mulf %90, %100 : vector<128x8xf32>
    %102 = vector.broadcast %74 : vector<1x8xf32> to vector<128x8xf32>
    %103 = arith.addf %101, %102 : vector<128x8xf32>
    %cst_39 = arith.constant 0.000000e+00 : f32
    %104 = vector.broadcast %cst_39 : f32 to vector<128x8xf32>
    %105 = arith.maximumf %103, %104 : vector<128x8xf32>
    %c48 = arith.constant 48 : index
    %c0_40 = arith.constant 0 : index
    %106 = vector.load %arg4[%c48, %c0_40] : memref<128x128xbf16, #tpu.memory_space<vmem>>, vector<8x32xbf16>
    %107 = arith.truncf %105 : vector<128x8xf32> to vector<128x8xbf16>
    %cst_41 = arith.constant dense<0.000000e+00> : vector<128x32xf32>
    %108 = tpu.matmul %107, %106, %cst_41 {dimension_numbers = #tpu.dot_dimension_numbers<[1], [0], [0], [1], [0, 0, 1, 1], [], []>} : vector<128x8xbf16>, vector<8x32xbf16>, vector<128x32xf32> -> vector<128x32xf32>
    %c5 = arith.constant 5 : index
    %c0_42 = arith.constant 0 : index
    %109 = vector.load %arg5[%c5, %c0_42] : memref<16x128xf32, #tpu.memory_space<vmem>>, vector<1x32xf32>
    %110 = vector.broadcast %109 : vector<1x32xf32> to vector<128x32xf32>
    %111 = arith.addf %108, %110 : vector<128x32xf32>
    %cst_43 = arith.constant dense<0.000000e+00> : vector<8x32xf32>
    %112 = tpu.matmul %14, %111, %cst_43 {dimension_numbers = #tpu.dot_dimension_numbers<[1], [0], [0], [1], [0, 0, 1, 1], [], []>} : vector<8x128xf32>, vector<128x32xf32>, vector<8x32xf32> -> vector<8x32xf32>
    %cst_44 = arith.constant 6.250000e-02 : f32
    %113 = vector.broadcast %cst_44 : f32 to vector<8x32xf32>
    %114 = arith.mulf %112, %113 : vector<8x32xf32>
    %c56 = arith.constant 56 : index
    %c0_45 = arith.constant 0 : index
    %115 = vector.load %arg4[%c56, %c0_45] : memref<128x128xbf16, #tpu.memory_space<vmem>>, vector<32x16xbf16>
    %116 = arith.truncf %114 : vector<8x32xf32> to vector<8x32xbf16>
    %cst_46 = arith.constant dense<0.000000e+00> : vector<8x16xf32>
    %117 = tpu.matmul %116, %115, %cst_46 {dimension_numbers = #tpu.dot_dimension_numbers<[1], [0], [0], [1], [0, 0, 1, 1], [], []>} : vector<8x32xbf16>, vector<32x16xbf16>, vector<8x16xf32> -> vector<8x16xf32>
    %c6 = arith.constant 6 : index
    %c0_47 = arith.constant 0 : index
    %118 = vector.load %arg5[%c6, %c0_47] : memref<16x128xf32, #tpu.memory_space<vmem>>, vector<1x16xf32>
    %119 = vector.broadcast %118 : vector<1x16xf32> to vector<8x16xf32>
    %120 = arith.addf %117, %119 : vector<8x16xf32>
    %cst_48 = arith.constant 0.000000e+00 : f32
    %121 = vector.broadcast %cst_48 : f32 to vector<8x16xf32>
    %122 = arith.maximumf %120, %121 : vector<8x16xf32>
    %c88 = arith.constant 88 : index
    %c0_49 = arith.constant 0 : index
    %123 = vector.load %arg4[%c88, %c0_49] : memref<128x128xbf16, #tpu.memory_space<vmem>>, vector<16x16xbf16>
    %124 = arith.truncf %122 : vector<8x16xf32> to vector<8x16xbf16>
    %cst_50 = arith.constant dense<0.000000e+00> : vector<8x16xf32>
    %125 = tpu.matmul %124, %123, %cst_50 {dimension_numbers = #tpu.dot_dimension_numbers<[1], [0], [0], [1], [0, 0, 1, 1], [], []>} : vector<8x16xbf16>, vector<16x16xbf16>, vector<8x16xf32> -> vector<8x16xf32>
    %c7 = arith.constant 7 : index
    %c0_51 = arith.constant 0 : index
    %126 = vector.load %arg5[%c7, %c0_51] : memref<16x128xf32, #tpu.memory_space<vmem>>, vector<1x16xf32>
    %127 = vector.broadcast %126 : vector<1x16xf32> to vector<8x16xf32>
    %128 = arith.addf %125, %127 : vector<8x16xf32>
    %129 = vector.extract_strided_slice %128 {offsets = [0, 0], sizes = [8, 8], strides = [1, 1]} : vector<8x16xf32> to vector<8x8xf32>
    %130 = vector.extract_strided_slice %128 {offsets = [0, 8], sizes = [8, 8], strides = [1, 1]} : vector<8x16xf32> to vector<8x8xf32>
    %cst_52 = arith.constant 5.000000e-01 : f32
    %131 = vector.broadcast %cst_52 : f32 to vector<8x8xf32>
    %132 = arith.mulf %131, %130 : vector<8x8xf32>
    %133 = math.exp %132 : vector<8x8xf32>
    %c0_53 = arith.constant 0 : index
    %c0_54 = arith.constant 0 : index
    %134 = vector.load %arg3[%c0_53, %c0_54] : memref<8x128xf32, #tpu.memory_space<vmem>>, vector<8x8xf32>
    %135 = arith.mulf %134, %133 : vector<8x8xf32>
    %136 = arith.addf %129, %135 : vector<8x8xf32>
    %c104 = arith.constant 104 : index
    %c0_55 = arith.constant 0 : index
    %137 = vector.load %arg4[%c104, %c0_55] : memref<128x128xbf16, #tpu.memory_space<vmem>>, vector<8x16xbf16>
    %138 = arith.truncf %136 : vector<8x8xf32> to vector<8x8xbf16>
    %cst_56 = arith.constant dense<0.000000e+00> : vector<8x16xf32>
    %139 = tpu.matmul %138, %137, %cst_56 {dimension_numbers = #tpu.dot_dimension_numbers<[1], [0], [0], [1], [0, 0, 1, 1], [], []>} : vector<8x8xbf16>, vector<8x16xbf16>, vector<8x16xf32> -> vector<8x16xf32>
    %c8 = arith.constant 8 : index
    %c0_57 = arith.constant 0 : index
    %140 = vector.load %arg5[%c8, %c0_57] : memref<16x128xf32, #tpu.memory_space<vmem>>, vector<1x16xf32>
    %141 = vector.broadcast %140 : vector<1x16xf32> to vector<8x16xf32>
    %142 = arith.addf %139, %141 : vector<8x16xf32>
    %cst_58 = arith.constant 0.000000e+00 : f32
    %143 = vector.broadcast %cst_58 : f32 to vector<8x16xf32>
    %144 = arith.maximumf %142, %143 : vector<8x16xf32>
    %c112 = arith.constant 112 : index
    %c0_59 = arith.constant 0 : index
    %145 = vector.load %arg4[%c112, %c0_59] : memref<128x128xbf16, #tpu.memory_space<vmem>>, vector<16x64xbf16>
    %146 = arith.truncf %144 : vector<8x16xf32> to vector<8x16xbf16>
    %cst_60 = arith.constant dense<0.000000e+00> : vector<8x64xf32>
    %147 = tpu.matmul %146, %145, %cst_60 {dimension_numbers = #tpu.dot_dimension_numbers<[1], [0], [0], [1], [0, 0, 1, 1], [], []>} : vector<8x16xbf16>, vector<16x64xbf16>, vector<8x64xf32> -> vector<8x64xf32>
    %c9 = arith.constant 9 : index
    %c0_61 = arith.constant 0 : index
    %148 = vector.load %arg5[%c9, %c0_61] : memref<16x128xf32, #tpu.memory_space<vmem>>, vector<1x64xf32>
    %149 = vector.broadcast %148 : vector<1x64xf32> to vector<8x64xf32>
    %150 = arith.addf %147, %149 : vector<8x64xf32>
    %151 = vector.extract_strided_slice %150 {offsets = [0, 0], sizes = [8, 32], strides = [1, 1]} : vector<8x64xf32> to vector<8x32xf32>
    %152 = vector.extract_strided_slice %150 {offsets = [0, 32], sizes = [8, 32], strides = [1, 1]} : vector<8x64xf32> to vector<8x32xf32>
    %cst_62 = arith.constant 5.000000e-01 : f32
    %153 = vector.broadcast %cst_62 : f32 to vector<8x32xf32>
    %154 = arith.mulf %153, %152 : vector<8x32xf32>
    %155 = math.exp %154 : vector<8x32xf32>
    %c0_63 = arith.constant 0 : index
    %c8_64 = arith.constant 8 : index
    %156 = vector.load %arg3[%c0_63, %c8_64] : memref<8x128xf32, #tpu.memory_space<vmem>>, vector<8x32xf32>
    %157 = arith.mulf %156, %155 : vector<8x32xf32>
    %158 = arith.addf %151, %157 : vector<8x32xf32>
    %cst_65 = arith.constant 1.65149617 : f32
    %159 = vector.broadcast %cst_65 : f32 to vector<8x32xf32>
    %160 = arith.addf %159, %152 : vector<8x32xf32>
    %161 = arith.subf %114, %151 : vector<8x32xf32>
    %162 = arith.mulf %161, %161 : vector<8x32xf32>
    %cst_66 = arith.constant 5.000000e-01 : f32
    %163 = vector.broadcast %cst_66 : f32 to vector<8x32xf32>
    %164 = arith.mulf %163, %162 : vector<8x32xf32>
    %165 = arith.mulf %155, %155 : vector<8x32xf32>
    %166 = tpu.reciprocal %165 {approx = true} : vector<8x32xf32> -> vector<8x32xf32>
    %167 = arith.mulf %164, %166 : vector<8x32xf32>
    %168 = arith.addf %160, %167 : vector<8x32xf32>
    %cst_67 = arith.constant 1.000000e+00 : f32
    %169 = vector.broadcast %cst_67 : f32 to vector<8x8xf32>
    %170 = arith.addf %169, %130 : vector<8x8xf32>
    %171 = arith.mulf %129, %129 : vector<8x8xf32>
    %172 = arith.subf %170, %171 : vector<8x8xf32>
    %173 = arith.mulf %133, %133 : vector<8x8xf32>
    %174 = arith.subf %172, %173 : vector<8x8xf32>
    %cst_68 = arith.constant dense<0.000000e+00> : vector<8xf32>
    %175 = vector.multi_reduction <add>, %174, %cst_68 [1] : vector<8x8xf32> to vector<8xf32>
    %176 = vector.shape_cast %175 : vector<8xf32> to vector<8x1xf32>
    %cst_69 = arith.constant -5.000000e-01 : f32
    %177 = vector.broadcast %cst_69 : f32 to vector<8x1xf32>
    %178 = arith.mulf %177, %176 : vector<8x1xf32>
    %cst_70 = arith.constant 0.000000e+00 : f32
    %179 = vector.broadcast %cst_70 : f32 to vector<8x63xf32>
    %180 = tpu.concatenate %158, %168, %178, %179 in 1 : vector<8x32xf32>, vector<8x32xf32>, vector<8x1xf32>, vector<8x63xf32> -> vector<8x128xf32>
    %c0_71 = arith.constant 0 : index
    %c0_72 = arith.constant 0 : index
    %181 = vector.load %arg6[%c0_71, %c0_72] : memref<8x128xf32, #tpu.memory_space<vmem>>, vector<8x128xf32>
    tpu.vector_store %arg6[%c0_71, %c0_72], %180 {strides = array<i32>} : memref<8x128xf32, #tpu.memory_space<vmem>>, vector<8x128xf32>,
    return
  }
  func.func @transform_0(%arg0: i32) -> (i32, i32) {
    %c0_i32 = arith.constant 0 : i32
    %c0_i32_0 = arith.constant 0 : i32
    return %arg0, %c0_i32 : i32, i32
  }
  func.func @transform_1(%arg0: i32) -> (i32, i32) {
    %c0_i32 = arith.constant 0 : i32
    return %arg0, %arg0 : i32, i32
  }
  func.func @transform_2(%arg0: i32) -> (i32, i32) {
    %c0_i32 = arith.constant 0 : i32
    %c0_i32_0 = arith.constant 0 : i32
    return %arg0, %c0_i32 : i32, i32
  }
  func.func @transform_3(%arg0: i32) -> (i32, i32) {
    %c0_i32 = arith.constant 0 : i32
    %c0_i32_0 = arith.constant 0 : i32
    %c0_i32_1 = arith.constant 0 : i32
    return %c0_i32, %c0_i32_0 : i32, i32
  }
  func.func @transform_4(%arg0: i32) -> (i32, i32) {
    %c0_i32 = arith.constant 0 : i32
    %c0_i32_0 = arith.constant 0 : i32
    %c0_i32_1 = arith.constant 0 : i32
    return %c0_i32, %c0_i32_0 : i32, i32
  }
  func.func @transform_5(%arg0: i32) -> (i32, i32) {
    %c0_i32 = arith.constant 0 : i32
    %c0_i32_0 = arith.constant 0 : i32
    return %arg0, %c0_i32 : i32, i32
  }
}

</mosaic_0001>

<llo_original>
// kernel: forward.1
$region0: #{forward.1}
  #allocation0 [shape = 'u32[]', space=smem, size = 0x4, offset = 0x4, fixed_abs, tag = 'smem constant byte address 0x4 - core index']
  #allocation1 [shape = 'u32[144,128]{1,0:T(1,128)}', space=vmem, size = 0x12000, scoped, tag = 'internal scratch']
  %s0 = inlined_call_operand.vmem [shape: bf16[512,32], index: 0, kind: input, shape index: {}]
  %s1 = inlined_call_operand.hbm [shape: bf16[512,512], index: 1, kind: input, shape index: {}]
  %s2 = inlined_call_operand.vmem [shape: f32[32,128], index: 2, kind: input, shape index: {}]
  %s3 = inlined_call_operand.vmem [shape: bf16[128,128], index: 3, kind: input, shape index: {}]
  %s4 = inlined_call_operand.vmem [shape: f32[16,128], index: 4, kind: input, shape index: {}]
  %s5 = inlined_call_operand.vmem [shape: f32[32,128], index: 5, kind: output, shape index: {}]
  %s6 = sld [smem:[#allocation0]]
  $region57: #{forward.1} parent=0
    _
  %s8 = ssub.s32 1, %s6
  %s9 = scalar_select 0, %s8, %s6
  $region1: #{forward.1} parent=0
    #allocation2 [shape = 'u8[65536]{0}', space=vmem, size = 0x10000, scoped, tag = 'input window, operand 1']
    #allocation3 [shape = 's32[2]{0}', space=sflag, size = 0x8, scoped, tag = 'scoped memory for forward.1']
    %10 = vsyncpa [#allocation3], 0
    %s11 = scalar_lea.sflag [#allocation3], 1
    %12 = vsyncpa %s11, 0
    loop: start=0, step=1, limit=6
    $region2: #{forward.1} parent=1 // loop_pre_header
      _
    $region3: #{forward.1} parent=1 // loop_header
      %s14 = sphi 0, %s18
      %p15 = scmp.ge.s32.totalorder %s14, 6
      %s24 = sphi 0, %s26
      %s27 = sphi 0, %s24
      %s28 = sphi 0, %s27
      %s44 = sphi 0, %s28
      %s52 = sphi 0, %s54
      %s55 = sphi 0, %s52
      %s56 = sphi 0, %s55
      %s72 = sphi 0, %s56
      %s78 = sphi 0, %s80
      %s81 = sphi 0, %s78
      %s82 = sphi 0, %s81
      %s98 = sphi 0, %s82
      %s102 = sphi 0, %s102
      %s104 = sphi 0, %s102
      %s105 = sphi 0, %s104
      %s119 = sphi 0, %s105
      %s123 = sphi 0, %s123
      %s125 = sphi 0, %s123
      %s126 = sphi 0, %s125
      %s140 = sphi 0, %s126
      %s146 = sphi 0, %s148
      %s149 = sphi 0, %s146
      %s150 = sphi 0, %s149
      %s166 = sphi 0, %s150
    $region4: #{forward.1} parent=1 // loop_header_branch
      %17 = sbr.rel (%p15) target = $region8
    $region5: #{forward.1} parent=1 // loop_body
      %s19 = ssub.s32 %s14, 1
      %s20 = ssub.s32 %s14, 2
      %s21 = sadd.s32 %s14, 1
      %s22 = ssub.s32 %s14, %s21
      %p23 = scmp.eq.s32.totalorder %s22, 0
      %s25 = sadd.s32 %s24, 1
      %s26 = scalar_select %p23, %s24, %s25
      %p29 = pneg %p23
      %p30 = scmp.eq.s32.totalorder %s14, 3
      %p31 = por %p29, %p30
      %p32 = scmp.ne.s32.totalorder %s24, %s27
      %p33 = scmp.eq.s32.totalorder %s14, 0
      %p34 = por %p32, %p33
      %p35 = scmp.ne.s32.totalorder %s24, %s27
      %p36 = scmp.eq.s32.totalorder %s19, 3
      %p37 = por %p35, %p36
      %p38 = scmp.ne.s32.totalorder %s27, %s28
      %p39 = scmp.eq.s32.totalorder %s19, 0
      %p40 = por %p38, %p39
      %p41 = scmp.ne.s32.totalorder %s27, %s28
      %p42 = scmp.eq.s32.totalorder %s20, 3
      %p43 = por %p41, %p42
      %p45 = scmp.ne.s32.totalorder %s28, %s44
      %p46 = scmp.eq.s32.totalorder %s20, 0
      %p47 = por %p45, %p46
      %s48 = ssub.s32 %s14, %s21
      %s49 = ssub.s32 %s14, %s21
      %s50 = sor.u32 %s48, %s49
      %p51 = scmp.eq.s32.totalorder %s50, 0
      %s53 = sadd.s32 %s52, 1
      %s54 = scalar_select %p51, %s52, %s53
      %p57 = pneg %p51
      %p58 = scmp.eq.s32.totalorder %s14, 3
      %p59 = por %p57, %p58
      %p60 = scmp.ne.s32.totalorder %s52, %s55
      %p61 = scmp.eq.s32.totalorder %s14, 0
      %p62 = por %p60, %p61
      %p63 = scmp.ne.s32.totalorder %s52, %s55
      %p64 = scmp.eq.s32.totalorder %s19, 3
      %p65 = por %p63, %p64
      %p66 = scmp.ne.s32.totalorder %s55, %s56
      %p67 = scmp.eq.s32.totalorder %s19, 0
      %p68 = por %p66, %p67
      %p69 = scmp.ne.s32.totalorder %s55, %s56
      %p70 = scmp.eq.s32.totalorder %s20, 3
      %p71 = por %p69, %p70
      %p73 = scmp.ne.s32.totalorder %s56, %s72
      %p74 = scmp.eq.s32.totalorder %s20, 0
      %p75 = por %p73, %p74
      %s76 = ssub.s32 %s14, %s21
      %p77 = scmp.eq.s32.totalorder %s76, 0
      %s79 = sadd.s32 %s78, 1
      %s80 = scalar_select %p77, %s78, %s79
      %p83 = pneg %p77
      %p84 = scmp.eq.s32.totalorder %s14, 3
      %p85 = por %p83, %p84
      %p86 = scmp.ne.s32.totalorder %s78, %s81
      %p87 = scmp.eq.s32.totalorder %s14, 0
      %p88 = por %p86, %p87
      %p89 = scmp.ne.s32.totalorder %s78, %s81
      %p90 = scmp.eq.s32.totalorder %s19, 3
      %p91 = por %p89, %p90
      %p92 = scmp.ne.s32.totalorder %s81, %s82
      %p93 = scmp.eq.s32.totalorder %s19, 0
      %p94 = por %p92, %p93
      %p95 = scmp.ne.s32.totalorder %s81, %s82
      %p96 = scmp.eq.s32.totalorder %s20, 3
      %p97 = por %p95, %p96
      %p99 = scmp.ne.s32.totalorder %s82, %s98
      %p100 = scmp.eq.s32.totalorder %s20, 0
      %p101 = por %p99, %p100
      %s103 = sadd.s32 %s102, 1
      %p106 = scmp.eq.s32.totalorder %s14, 3
      %p107 = scmp.ne.s32.totalorder %s102, %s104
      %p108 = scmp.eq.s32.totalorder %s14, 0
      %p109 = por %p107, %p108
      %p110 = scmp.ne.s32.totalorder %s102, %s104
      %p111 = scmp.eq.s32.totalorder %s19, 3
      %p112 = por %p110, %p111
      %p113 = scmp.ne.s32.totalorder %s104, %s105
      %p114 = scmp.eq.s32.totalorder %s19, 0
      %p115 = por %p113, %p114
      %p116 = scmp.ne.s32.totalorder %s104, %s105
      %p117 = scmp.eq.s32.totalorder %s20, 3
      %p118 = por %p116, %p117
      %p120 = scmp.ne.s32.totalorder %s105, %s119
      %p121 = scmp.eq.s32.totalorder %s20, 0
      %p122 = por %p120, %p121
      %s124 = sadd.s32 %s123, 1
      %p127 = scmp.eq.s32.totalorder %s14, 3
      %p128 = scmp.ne.s32.totalorder %s123, %s125
      %p129 = scmp.eq.s32.totalorder %s14, 0
      %p130 = por %p128, %p129
      %p131 = scmp.ne.s32.totalorder %s123, %s125
      %p132 = scmp.eq.s32.totalorder %s19, 3
      %p133 = por %p131, %p132
      %p134 = scmp.ne.s32.totalorder %s125, %s126
      %p135 = scmp.eq.s32.totalorder %s19, 0
      %p136 = por %p134, %p135
      %p137 = scmp.ne.s32.totalorder %s125, %s126
      %p138 = scmp.eq.s32.totalorder %s20, 3
      %p139 = por %p137, %p138
      %p141 = scmp.ne.s32.totalorder %s126, %s140
      %p142 = scmp.eq.s32.totalorder %s20, 0
      %p143 = por %p141, %p142
      %s144 = ssub.s32 %s14, %s21
      %p145 = scmp.eq.s32.totalorder %s144, 0
      %s147 = sadd.s32 %s146, 1
      %s148 = scalar_select %p145, %s146, %s147
      %p151 = pneg %p145
      %p152 = scmp.eq.s32.totalorder %s14, 3
      %p153 = por %p151, %p152
      %p154 = scmp.ne.s32.totalorder %s146, %s149
      %p155 = scmp.eq.s32.totalorder %s14, 0
      %p156 = por %p154, %p155
      %p157 = scmp.ne.s32.totalorder %s146, %s149
      %p158 = scmp.eq.s32.totalorder %s19, 3
      %p159 = por %p157, %p158
      %p160 = scmp.ne.s32.totalorder %s149, %s150
      %p161 = scmp.eq.s32.totalorder %s19, 0
      %p162 = por %p160, %p161
      %p163 = scmp.ne.s32.totalorder %s149, %s150
      %p164 = scmp.eq.s32.totalorder %s20, 3
      %p165 = por %p163, %p164
      %p167 = scmp.ne.s32.totalorder %s150, %s166
      %p168 = scmp.eq.s32.totalorder %s20, 0
      %p169 = por %p167, %p168
      %p170 = scmp.le.s32.totalorder 1, %s14
      %p171 = scmp.lt.s32.totalorder %s14, 5
      %p172 = pnand %p170, %p171
      %p173 = pneg %p172
      // Predicated region
      $region9: #{forward.1} parent=5 // pred_check
        _
      $region10: #{forward.1} parent=5 // pred_check_branch
        %175 = sbr.rel (%p172) target = $region12
      $region11: #{forward.1} parent=5 // pred_region
        %s176 = ssub.s32 %s14, 1
        // Predicated region
        $region13: #{forward.1} parent=11 // pred_check
          %p177 = pneg %p115
        $region14: #{forward.1} parent=11 // pred_check_branch
          %179 = sbr.rel (%p177) target = $region16
        $region15: #{forward.1} parent=11 // pred_region
          _
        $region16: #{forward.1} parent=11 // pred_fallthru
          _
        // Predicated region
        $region17: #{forward.1} parent=11 // pred_check
          %p180 = pneg %p136
        $region18: #{forward.1} parent=11 // pred_check_branch
          %182 = sbr.rel (%p180) target = $region20
        $region19: #{forward.1} parent=11 // pred_region
          _
        $region20: #{forward.1} parent=11 // pred_fallthru
          _
      $region12: #{forward.1} parent=5 // pred_fallthru
        _
      %p183 = scmp.lt.s32.totalorder %s14, 4
      // Predicated region
      $region21: #{forward.1} parent=5 // pred_check
        %p184 = pneg %p183
      $region22: #{forward.1} parent=5 // pred_check_branch
        %186 = sbr.rel (%p184) target = $region24
      $region23: #{forward.1} parent=5 // pred_region
        // Predicated region
        $region25: #{forward.1} parent=23 // pred_check
          %p187 = pneg %p34
        $region26: #{forward.1} parent=23 // pred_check_branch
          %189 = sbr.rel (%p187) target = $region28
        $region27: #{forward.1} parent=23 // pred_region
          %s190 = smul.u32 16, %s14
          %p191 = scmp.lt.s32.totalorder %s190, 63
          %s192 = scalar_select %p191, %s190, 63
          %s193 = smul.addr %s192, 4
          %s194 = scalar_lea.vmem %s0, %s193
          %s195 = smul.u32 16, %s14
        $region28: #{forward.1} parent=23 // pred_fallthru
          _
        // Predicated region
        $region29: #{forward.1} parent=23 // pred_check
          %p196 = pneg %p62
        $region30: #{forward.1} parent=23 // pred_check_branch
          %198 = sbr.rel (%p196) target = $region32
        $region31: #{forward.1} parent=23 // pred_region
          %s199 = sand.u32 %s52, 1
          %s200 = scalar_lea.sflag [#allocation3], %s199
          %s201 = sand.u32 %s52, 1
          %s202 = smul.addr %s201, 64
          %s203 = scalar_lea.vmem [#allocation2], %s202
          %s204 = smul.u32 16, %s14
          %s206 = ssub.s32 1024, 1024
          %207 = vsyncadd %s200, %s206
          %s208 = smul.addr %s204, 4
          %s209 = sadd.s32 %s14, %s208
          %s210 = smul.addr %s209, 64
          %s211 = scalar_lea.hbm %s1, %s210
          %s212 = sshll.u32 %s203, 4
          %s213 = int_to_ptr.vmem [resolvable:$true] %s212
          %218 = dma.hbm_to_vmem [thread:$0]  %s211, 1024, %s213, %s200, 256, 64, 4
        $region32: #{forward.1} parent=23 // pred_fallthru
          _
        // Predicated region
        $region33: #{forward.1} parent=23 // pred_check
          %p219 = pneg %p88
        $region34: #{forward.1} parent=23 // pred_check_branch
          %221 = sbr.rel (%p219) target = $region36
        $region35: #{forward.1} parent=23 // pred_region
          %p222 = scmp.lt.s32.totalorder %s14, 3
          %s223 = scalar_select %p222, %s14, 3
          %s224 = smul.addr %s223, 8
          %s225 = scalar_lea.vmem %s2, %s224
        $region36: #{forward.1} parent=23 // pred_fallthru
          _
      $region24: #{forward.1} parent=5 // pred_fallthru
        _
      %p226 = scmp.le.s32.totalorder 1, %s14
      %p227 = scmp.lt.s32.totalorder %s14, 5
      %p228 = pnand %p226, %p227
      %p229 = pneg %p228
      // Predicated region
      $region37: #{forward.1} parent=5 // pred_check
        _
      $region38: #{forward.1} parent=5 // pred_check_branch
        %231 = sbr.rel (%p228) target = $region40
      $region39: #{forward.1} parent=5 // pred_region
        %s232 = ssub.s32 %s14, 1
        %s233 = sand.u32 %s55, 1
        %s234 = scalar_lea.sflag [#allocation3], %s233
        %s235 = sand.u32 %s55, 1
        %s236 = smul.addr %s235, 64
        %s237 = scalar_lea.vmem [#allocation2], %s236
        // Predicated region
        $region41: #{forward.1} parent=39 // pred_check
          %p238 = pneg %p68
        $region42: #{forward.1} parent=39 // pred_check_branch
          %240 = sbr.rel (%p238) target = $region44
        $region43: #{forward.1} parent=39 // pred_region
          %241 = dma.done %s234, 1024
        $region44: #{forward.1} parent=39 // pred_fallthru
          _
        %s242 = smul.u32 16, %s19
        %p243 = scmp.lt.s32.totalorder %s242, 63
        %s244 = scalar_select %p243, %s242, 63
        %s245 = smul.addr %s244, 4
        %s246 = scalar_lea.vmem %s0, %s245
        %p247 = pneg %p40
        %p248 = pneg %p37
        %s249 = sand.u32 %s55, 1
        %s250 = scalar_lea.sflag [#allocation3], %s249
        %s251 = sand.u32 %s55, 1
        %s252 = smul.addr %s251, 64
        %s253 = scalar_lea.vmem [#allocation2], %s252
        %p254 = pneg %p68
        %p255 = pneg %p65
        %p256 = scmp.lt.s32.totalorder %s19, 3
        %s257 = scalar_select %p256, %s19, 3
        %s258 = smul.addr %s257, 8
        %s259 = scalar_lea.vmem %s2, %s258
        %p260 = pneg %p94
        %p261 = pneg %p91
        %p262 = pneg %p115
        %p263 = pneg %p112
        %p264 = pneg %p136
        %p265 = pneg %p133
        %p266 = pneg %p162
        %p267 = pneg %p159
        %p268 = scmp.lt.s32.totalorder %s19, 3
        %s269 = scalar_select %p268, %s19, 3
        %s270 = smul.addr %s269, 8
        %s271 = scalar_lea.vmem %s5, %s270
        %s272 = smul.u32 16, %s19
        %p273 = scmp.lt.s32.totalorder %s272, 63
        %s274 = scalar_select %p273, %s272, 63
        %s275 = smul.addr %s274, 4
        %s276 = scalar_lea.vmem %s0, %s275
        %s277 = smul.u32 16, %s19
        %s278 = smul.u32 16, %s19
        %p279 = scmp.lt.s32.totalorder %s19, 3
        %s280 = scalar_select %p279, %s19, 3
        %s281 = smul.addr %s280, 8
        %s282 = scalar_lea.vmem %s2, %s281
        %p283 = scmp.lt.s32.totalorder %s19, 3
        %s284 = scalar_select %p283, %s19, 3
        %s285 = smul.addr %s284, 8
        %s286 = scalar_lea.vmem %s5, %s285
        %v288 = vld [vmem:[%s276] sm:$0xf]
        %v289 = vld [vmem:[%s276 + $0x4] sm:$0xf]
        %v290 = vld [vmem:[%s276 + $0x8] sm:$0xf]
        %v291 = vld [vmem:[%s276 + $0xc] sm:$0xf]
        %v292 = vld [vmem:[%s276 + $0x10] sm:$0xf]
        %v293 = vld [vmem:[%s276 + $0x14] sm:$0xf]
        %v294 = vld [vmem:[%s276 + $0x18] sm:$0xf]
        %v295 = vld [vmem:[%s276 + $0x1c] sm:$0xf]
        %v296 = vld [vmem:[%s276 + $0x20] sm:$0xf]
        %v297 = vld [vmem:[%s276 + $0x24] sm:$0xf]
        %v298 = vld [vmem:[%s276 + $0x28] sm:$0xf]
        %v299 = vld [vmem:[%s276 + $0x2c] sm:$0xf]
        %v300 = vld [vmem:[%s276 + $0x30] sm:$0xf]
        %v301 = vld [vmem:[%s276 + $0x34] sm:$0xf]
        %v302 = vld [vmem:[%s276 + $0x38] sm:$0xf]
        %v303 = vld [vmem:[%s276 + $0x3c] sm:$0xf]
        %v304 = vld [vmem:[%s237] sm:$0xf]
        %v305 = vld [vmem:[%s237 + $0x4] sm:$0xf]
        %v306 = vld [vmem:[%s237 + $0x8] sm:$0xf]
        %v307 = vld [vmem:[%s237 + $0xc] sm:$0xf]
        %v308 = vld [vmem:[%s237 + $0x10] sm:$0xf]
        %v309 = vld [vmem:[%s237 + $0x14] sm:$0xf]
        %v310 = vld [vmem:[%s237 + $0x18] sm:$0xf]
        %v311 = vld [vmem:[%s237 + $0x1c] sm:$0xf]
        %v312 = vld [vmem:[%s237 + $0x20] sm:$0xf]
        %v313 = vld [vmem:[%s237 + $0x24] sm:$0xf]
        %v314 = vld [vmem:[%s237 + $0x28] sm:$0xf]
        %v315 = vld [vmem:[%s237 + $0x2c] sm:$0xf]
        %v316 = vld [vmem:[%s237 + $0x30] sm:$0xf]
        %v317 = vld [vmem:[%s237 + $0x34] sm:$0xf]
        %v318 = vld [vmem:[%s237 + $0x38] sm:$0xf]
        %v319 = vld [vmem:[%s237 + $0x3c] sm:$0xf]
        %v320 = vlaneseq
        %v321 = vand.u32 %v320, 127
        %v322 = vlaneseq
        %v323 = vshrl.u32 %v322, 7
        %v324 = vmul.u32 %v323, 16
        %vm325 = vcmp.ge.s32.totalorder %v321, %v324
        %v326 = vadd.s32 %v323, 1
        %v327 = vmul.u32 %v326, 16
        %vm328 = vcmp.lt.s32.totalorder %v321, %v327
        %vm329 = vmand %vm325, %vm328
        %v330 = vsel %vm329, 1, 0
        %v331 = vcvt.s32.f32 %v330
        %v332 = vadd.s32 %v323, 8
        %v333 = vadd.s32 %v323, 16
        %v334 = vadd.s32 %v323, 24
        %v335 = vadd.s32 %v323, 32
        %v336 = vadd.s32 %v323, 40
        %v337 = vadd.s32 %v323, 48
        %v338 = vadd.s32 %v323, 56
        %v339 = vadd.s32 %v323, 64
        %v340 = vadd.s32 %v323, 72
        %v341 = vadd.s32 %v323, 80
        %v342 = vadd.s32 %v323, 88
        %v343 = vadd.s32 %v323, 96
        %v344 = vadd.s32 %v323, 104
        %v345 = vadd.s32 %v323, 112
        %v346 = vadd.s32 %v323, 120
        %v347 = vmul.u32 %v321, 16
        %vm348 = vcmp.ge.s32.totalorder %v323, %v347
        %vm349 = vcmp.ge.s32.totalorder %v332, %v347
        %vm350 = vcmp.ge.s32.totalorder %v333, %v347
        %vm351 = vcmp.ge.s32.totalorder %v334, %v347
        %vm352 = vcmp.ge.s32.totalorder %v335, %v347
        %vm353 = vcmp.ge.s32.totalorder %v336, %v347
        %vm354 = vcmp.ge.s32.totalorder %v337, %v347
        %vm355 = vcmp.ge.s32.totalorder %v338, %v347
        %vm356 = vcmp.ge.s32.totalorder %v339, %v347
        %vm357 = vcmp.ge.s32.totalorder %v340, %v347
        %vm358 = vcmp.ge.s32.totalorder %v341, %v347
        %vm359 = vcmp.ge.s32.totalorder %v342, %v347
        %vm360 = vcmp.ge.s32.totalorder %v343, %v347
        %vm361 = vcmp.ge.s32.totalorder %v344, %v347
        %vm362 = vcmp.ge.s32.totalorder %v345, %v347
        %vm363 = vcmp.ge.s32.totalorder %v346, %v347
        %v364 = vadd.s32 %v321, 1
        %v365 = vmul.u32 %v364, 16
        %vm366 = vcmp.lt.s32.totalorder %v323, %v365
        %vm367 = vcmp.lt.s32.totalorder %v332, %v365
        %vm368 = vcmp.lt.s32.totalorder %v333, %v365
        %vm369 = vcmp.lt.s32.totalorder %v334, %v365
        %vm370 = vcmp.lt.s32.totalorder %v335, %v365
        %vm371 = vcmp.lt.s32.totalorder %v336, %v365
        %vm372 = vcmp.lt.s32.totalorder %v337, %v365
        %vm373 = vcmp.lt.s32.totalorder %v338, %v365
        %vm374 = vcmp.lt.s32.totalorder %v339, %v365
        %vm375 = vcmp.lt.s32.totalorder %v340, %v365
        %vm376 = vcmp.lt.s32.totalorder %v341, %v365
        %vm377 = vcmp.lt.s32.totalorder %v342, %v365
        %vm378 = vcmp.lt.s32.totalorder %v343, %v365
        %vm379 = vcmp.lt.s32.totalorder %v344, %v365
        %vm380 = vcmp.lt.s32.totalorder %v345, %v365
        %vm381 = vcmp.lt.s32.totalorder %v346, %v365
        %vm382 = vmand %vm348, %vm366
        %vm383 = vmand %vm349, %vm367
        %vm384 = vmand %vm350, %vm368
        %vm385 = vmand %vm351, %vm369
        %vm386 = vmand %vm352, %vm370
        %vm387 = vmand %vm353, %vm371
        %vm388 = vmand %vm354, %vm372
        %vm389 = vmand %vm355, %vm373
        %vm390 = vmand %vm356, %vm374
        %vm391 = vmand %vm357, %vm375
        %vm392 = vmand %vm358, %vm376
        %vm393 = vmand %vm359, %vm377
        %vm394 = vmand %vm360, %vm378
        %vm395 = vmand %vm361, %vm379
        %vm396 = vmand %vm362, %vm380
        %vm397 = vmand %vm363, %vm381
        %v398 = vsel %vm382, 1, 0
        %v399 = vsel %vm383, 1, 0
        %v400 = vsel %vm384, 1, 0
        %v401 = vsel %vm385, 1, 0
        %v402 = vsel %vm386, 1, 0
        %v403 = vsel %vm387, 1, 0
        %v404 = vsel %vm388, 1, 0
        %v405 = vsel %vm389, 1, 0
        %v406 = vsel %vm390, 1, 0
        %v407 = vsel %vm391, 1, 0
        %v408 = vsel %vm392, 1, 0
        %v409 = vsel %vm393, 1, 0
        %v410 = vsel %vm394, 1, 0
        %v411 = vsel %vm395, 1, 0
        %v412 = vsel %vm396, 1, 0
        %v413 = vsel %vm397, 1, 0
        %v414 = vcvt.s32.f32 %v398
        %v415 = vcvt.s32.f32 %v399
        %v416 = vcvt.s32.f32 %v400
        %v417 = vcvt.s32.f32 %v401
        %v418 = vcvt.s32.f32 %v402
        %v419 = vcvt.s32.f32 %v403
        %v420 = vcvt.s32.f32 %v404
        %v421 = vcvt.s32.f32 %v405
        %v422 = vcvt.s32.f32 %v406
        %v423 = vcvt.s32.f32 %v407
        %v424 = vcvt.s32.f32 %v408
        %v425 = vcvt.s32.f32 %v409
        %v426 = vcvt.s32.f32 %v410
        %v427 = vcvt.s32.f32 %v411
        %v428 = vcvt.s32.f32 %v412
        %v429 = vcvt.s32.f32 %v413
        %v430 = vld [vmem:[%s3] sm:$0xf]
        %v431 = vld [vmem:[%s3 + $0x4] sm:$0xf]
        %v432 = vld [vmem:[%s3 + $0x8] sm:$0xf]
        %v433 = vld [vmem:[%s3 + $0xc] sm:$0xf]
        %v434 = vld [vmem:[%s4] sm:$0x1]
        %v435 = vlaneseq
        %v436 = vshrl.u32 %v435, 7
        %v437 = vsub.s32 0, %v436
        %v438 = vrot.slane %v434, %v437
        %v455 = vunpack.c.l.b16 %v288
        %v456 = vunpack.c.l.b16 %v289
        %v457 = vunpack.c.l.b16 %v290
        %v458 = vunpack.c.l.b16 %v291
        %v459 = vunpack.c.l.b16 %v292
        %v460 = vunpack.c.l.b16 %v293
        %v461 = vunpack.c.l.b16 %v294
        %v462 = vunpack.c.l.b16 %v295
        %v463 = vunpack.c.l.b16 %v296
        %v464 = vunpack.c.l.b16 %v297
        %v465 = vunpack.c.l.b16 %v298
        %v466 = vunpack.c.l.b16 %v299
        %v467 = vunpack.c.l.b16 %v300
        %v468 = vunpack.c.l.b16 %v301
        %v469 = vunpack.c.l.b16 %v302
        %v470 = vunpack.c.l.b16 %v303
        %v471 = vpack.c.b16 %v456, %v455
        %v472 = vpack.c.b16 %v458, %v457
        %v473 = vpack.c.b16 %v460, %v459
        %v474 = vpack.c.b16 %v462, %v461
        %v475 = vpack.c.b16 %v464, %v463
        %v476 = vpack.c.b16 %v466, %v465
        %v477 = vpack.c.b16 %v468, %v467
        %v478 = vpack.c.b16 %v470, %v469
        %v483 = vunpack.c.l.b16 %v430
        %v484 = vunpack.c.l.b16 %v431
        %v485 = vunpack.c.l.b16 %v432
        %v486 = vunpack.c.l.b16 %v433
        %v487 = vpack.c.b16 %v484, %v483
        %v488 = vpack.c.b16 %v486, %v485
        %vm491 = vcmask 261120
        %v493 = vsel %vm491, %v471, 0
        %v496 = vsel %vm491, %v472, 0
        %v499 = vsel %vm491, %v473, 0
        %v502 = vsel %vm491, %v474, 0
        %v505 = vsel %vm491, %v475, 0
        %v508 = vsel %vm491, %v476, 0
        %v511 = vsel %vm491, %v477, 0
        %v514 = vsel %vm491, %v478, 0
        %516 = vmatprep.subr.bf16.mxu0 0
        %517 = vmatpush1.bf16.msra.mxu0 0
        %518 = vmatprep.subr.bf16.mxu0 0
        %519 = vmatpush1.bf16.msra.mxu0 0
        %520 = vmatprep.subr.bf16.mxu0 0
        %521 = vmatpush1.bf16.msra.mxu0 0
        %522 = vmatprep.subr.bf16.mxu0 0
        %523 = vmatpush1.bf16.msra.mxu0 0
        %524 = vmatprep.subr.bf16.mxu0 0
        %525 = vmatpush1.bf16.msra.mxu0 0
        %526 = vmatprep.subr.bf16.mxu0 0
        %527 = vmatpush1.bf16.msra.mxu0 0
        %528 = vmatprep.subr.bf16.mxu0 0
        %529 = vmatpush1.bf16.msra.mxu0 %v488
        %530 = vmatprep.subr.bf16.mxu0 0
        %531 = vmatpush1.bf16.msra.mxu0 %v487
        %532 = vmatprep.subr.bf16.mxu0 0
        %533 = vmatpush2.bf16.msra.mxu0 0
        %534 = vmatprep.subr.bf16.mxu0 0
        %535 = vmatpush2.bf16.msra.mxu0 0
        %536 = vmatprep.subr.bf16.mxu0 0
        %537 = vmatpush2.bf16.msra.mxu0 0
        %538 = vmatprep.subr.bf16.mxu0 0
        %539 = vmatpush2.bf16.msra.mxu0 0
        %540 = vmatprep.subr.bf16.mxu0 0
        %541 = vmatpush2.bf16.msra.mxu0 0
        %542 = vmatprep.subr.bf16.mxu0 0
        %543 = vmatpush2.bf16.msra.mxu0 0
        %544 = vmatprep.subr.bf16.mxu0 0
        %545 = vmatpush2.bf16.msra.mxu0 0
        %546 = vmatprep.subr.bf16.mxu0 0
        %547 = vmatpush2.bf16.msra.mxu0 0
        %548 = vmatprep.mubr.bf16.mxu0 0
        %549 = vmatmul.mubr.bf16.gmra.mxu0 %v493
        %v550 = vpop.f32.mrf.mxu0
        %v551 = vadd.f32 %v438, %v550
        %v552 = vpop.f32.mrf.mxu0
        %v553 = vpop.f32.mrf.mxu0
        %v554 = vadd.f32 %v438, %v553
        %v555 = vpop.f32.mrf.mxu0
        %556 = vmatprep.mubr.bf16.mxu0 0
        %557 = vmatmul.mubr.bf16.gmra.mxu0 %v496
        %v558 = vpop.f32.mrf.mxu0
        %v559 = vadd.f32 %v438, %v558
        %v560 = vpop.f32.mrf.mxu0
        %v561 = vpop.f32.mrf.mxu0
        %v562 = vadd.f32 %v438, %v561
        %v563 = vpop.f32.mrf.mxu0
        %564 = vmatprep.mubr.bf16.mxu0 0
        %565 = vmatmul.mubr.bf16.gmra.mxu0 %v499
        %v566 = vpop.f32.mrf.mxu0
        %v567 = vadd.f32 %v438, %v566
        %v568 = vpop.f32.mrf.mxu0
        %v569 = vpop.f32.mrf.mxu0
        %v570 = vadd.f32 %v438, %v569
        %v571 = vpop.f32.mrf.mxu0
        %572 = vmatprep.mubr.bf16.mxu0 0
        %573 = vmatmul.mubr.bf16.gmra.mxu0 %v502
        %v574 = vpop.f32.mrf.mxu0
        %v575 = vadd.f32 %v438, %v574
        %v576 = vpop.f32.mrf.mxu0
        %v577 = vpop.f32.mrf.mxu0
        %v578 = vadd.f32 %v438, %v577
        %v579 = vpop.f32.mrf.mxu0
        %580 = vmatprep.mubr.bf16.mxu0 0
        %581 = vmatmul.mubr.bf16.gmra.mxu0 %v505
        %v582 = vpop.f32.mrf.mxu0
        %v583 = vadd.f32 %v438, %v582
        %v584 = vpop.f32.mrf.mxu0
        %v585 = vpop.f32.mrf.mxu0
        %v586 = vadd.f32 %v438, %v585
        %v587 = vpop.f32.mrf.mxu0
        %588 = vmatprep.mubr.bf16.mxu0 0
        %589 = vmatmul.mubr.bf16.gmra.mxu0 %v508
        %v590 = vpop.f32.mrf.mxu0
        %v591 = vadd.f32 %v438, %v590
        %v592 = vpop.f32.mrf.mxu0
        %v593 = vpop.f32.mrf.mxu0
        %v594 = vadd.f32 %v438, %v593
        %v595 = vpop.f32.mrf.mxu0
        %596 = vmatprep.mubr.bf16.mxu0 0
        %597 = vmatmul.mubr.bf16.gmra.mxu0 %v511
        %v598 = vpop.f32.mrf.mxu0
        %v599 = vadd.f32 %v438, %v598
        %v600 = vpop.f32.mrf.mxu0
        %v601 = vpop.f32.mrf.mxu0
        %v602 = vadd.f32 %v438, %v601
        %v603 = vpop.f32.mrf.mxu0
        %604 = vmatprep.mubr.bf16.mxu0 0
        %605 = vmatmul.mubr.bf16.gmra.mxu0 %v514
        %v606 = vpop.f32.mrf.mxu0
        %v607 = vadd.f32 %v438, %v606
        %v608 = vpop.f32.mrf.mxu0
        %v609 = vpop.f32.mrf.mxu0
        %v610 = vadd.f32 %v438, %v609
        %v611 = vpop.f32.mrf.mxu0
        %612 = vdwg.mxu0
        %v613 = vxor.u32 %v551, 2147483648
        %v614 = vxor.u32 %v554, 2147483648
        %v615 = vxor.u32 %v559, 2147483648
        %v616 = vxor.u32 %v562, 2147483648
        %v617 = vxor.u32 %v567, 2147483648
        %v618 = vxor.u32 %v570, 2147483648
        %v619 = vxor.u32 %v575, 2147483648
        %v620 = vxor.u32 %v578, 2147483648
        %v621 = vxor.u32 %v583, 2147483648
        %v622 = vxor.u32 %v586, 2147483648
        %v623 = vxor.u32 %v591, 2147483648
        %v624 = vxor.u32 %v594, 2147483648
        %v625 = vxor.u32 %v599, 2147483648
        %v626 = vxor.u32 %v602, 2147483648
        %v627 = vxor.u32 %v607, 2147483648
        %v628 = vxor.u32 %v610, 2147483648
        %v629 = vmul.f32 %v613, 1.442695
        %v630 = vpow.pop %v629
        %v631 = vmul.f32 %v614, 1.442695
        %v632 = vpow.pop %v631
        %v633 = vmul.f32 %v615, 1.442695
        %v634 = vpow.pop %v633
        %v635 = vmul.f32 %v616, 1.442695
        %v636 = vpow.pop %v635
        %v637 = vmul.f32 %v617, 1.442695
        %v638 = vpow.pop %v637
        %v639 = vmul.f32 %v618, 1.442695
        %v640 = vpow.pop %v639
        %v641 = vmul.f32 %v619, 1.442695
        %v642 = vpow.pop %v641
        %v643 = vmul.f32 %v620, 1.442695
        %v644 = vpow.pop %v643
        %v645 = vmul.f32 %v621, 1.442695
        %v646 = vpow.pop %v645
        %v647 = vmul.f32 %v622, 1.442695
        %v648 = vpow.pop %v647
        %v649 = vmul.f32 %v623, 1.442695
        %v650 = vpow.pop %v649
        %v651 = vmul.f32 %v624, 1.442695
        %v652 = vpow.pop %v651
        %v653 = vmul.f32 %v625, 1.442695
        %v654 = vpow.pop %v653
        %v655 = vmul.f32 %v626, 1.442695
        %v656 = vpow.pop %v655
        %v657 = vmul.f32 %v627, 1.442695
        %v658 = vpow.pop %v657
        %v659 = vmul.f32 %v628, 1.442695
        %v660 = vpow.pop %v659
        %v661 = vadd.f32 %v630, 1.0
        %v662 = vadd.f32 %v632, 1.0
        %v663 = vadd.f32 %v634, 1.0
        %v664 = vadd.f32 %v636, 1.0
        %v665 = vadd.f32 %v638, 1.0
        %v666 = vadd.f32 %v640, 1.0
        %v667 = vadd.f32 %v642, 1.0
        %v668 = vadd.f32 %v644, 1.0
        %v669 = vadd.f32 %v646, 1.0
        %v670 = vadd.f32 %v648, 1.0
        %v671 = vadd.f32 %v650, 1.0
        %v672 = vadd.f32 %v652, 1.0
        %v673 = vadd.f32 %v654, 1.0
        %v674 = vadd.f32 %v656, 1.0
        %v675 = vadd.f32 %v658, 1.0
        %v676 = vadd.f32 %v660, 1.0
        %v677 = vrcp.pop %v661
        %v678 = vmul.f32 1.0, %v677
        %v679 = vrcp.pop %v662
        %v680 = vmul.f32 1.0, %v679
        %v681 = vrcp.pop %v663
        %v682 = vmul.f32 1.0, %v681
        %v683 = vrcp.pop %v664
        %v684 = vmul.f32 1.0, %v683
        %v685 = vrcp.pop %v665
        %v686 = vmul.f32 1.0, %v685
        %v687 = vrcp.pop %v666
        %v688 = vmul.f32 1.0, %v687
        %v689 = vrcp.pop %v667
        %v690 = vmul.f32 1.0, %v689
        %v691 = vrcp.pop %v668
        %v692 = vmul.f32 1.0, %v691
        %v693 = vrcp.pop %v669
        %v694 = vmul.f32 1.0, %v693
        %v695 = vrcp.pop %v670
        %v696 = vmul.f32 1.0, %v695
        %v697 = vrcp.pop %v671
        %v698 = vmul.f32 1.0, %v697
        %v699 = vrcp.pop %v672
        %v700 = vmul.f32 1.0, %v699
        %v701 = vrcp.pop %v673
        %v702 = vmul.f32 1.0, %v701
        %v703 = vrcp.pop %v674
        %v704 = vmul.f32 1.0, %v703
        %v705 = vrcp.pop %v675
        %v706 = vmul.f32 1.0, %v705
        %v707 = vrcp.pop %v676
        %v708 = vmul.f32 1.0, %v707
        %v709 = vld [vmem:[%s3 + $0x10] sm:$0xf]
        %v710 = vld [vmem:[%s4 + $0x1] sm:$0x1]
        %v711 = vld [vmem:[%s4 + $0x2] sm:$0x1]
        %v712 = vpack.c.bf16 %v680, %v678
        %v713 = vpack.c.bf16 %v684, %v682
        %v714 = vpack.c.bf16 %v688, %v686
        %v715 = vpack.c.bf16 %v692, %v690
        %v716 = vpack.c.bf16 %v696, %v694
        %v717 = vpack.c.bf16 %v700, %v698
        %v718 = vpack.c.bf16 %v704, %v702
        %v719 = vpack.c.bf16 %v708, %v706
        %vm720 = vcmask 64512
        %v722 = vsel %vm720, %v712, 0
        %v725 = vsel %vm720, %v713, 0
        %v728 = vsel %vm720, %v714, 0
        %v731 = vsel %vm720, %v715, 0
        %v734 = vsel %vm720, %v716, 0
        %v737 = vsel %vm720, %v717, 0
        %v740 = vsel %vm720, %v718, 0
        %v743 = vsel %vm720, %v719, 0
        %vm745 = vcmask 1043456
        %v747 = vsel %vm745, %v709, 0
        %749 = vmatprep.subr.bf16.mxu0 0
        %750 = vmatpush1.bf16.msra.mxu0 0
        %751 = vmatprep.subr.bf16.mxu0 0
        %752 = vmatpush1.bf16.msra.mxu0 0
        %753 = vmatprep.subr.bf16.mxu0 0
        %754 = vmatpush1.bf16.msra.mxu0 0
        %755 = vmatprep.subr.bf16.mxu0 0
        %756 = vmatpush1.bf16.msra.mxu0 0
        %757 = vmatprep.subr.bf16.mxu0 0
        %758 = vmatpush1.bf16.msra.mxu0 0
        %759 = vmatprep.subr.bf16.mxu0 0
        %760 = vmatpush1.bf16.msra.mxu0 0
        %761 = vmatprep.subr.bf16.mxu0 0
        %762 = vmatpush1.bf16.msra.mxu0 0
        %763 = vmatprep.subr.bf16.mxu0 0
        %764 = vmatpush1.bf16.msra.mxu0 %v747
        %765 = vmatprep.subr.bf16.mxu0 0
        %766 = vmatpush2.bf16.msra.mxu0 0
        %767 = vmatprep.subr.bf16.mxu0 0
        %768 = vmatpush2.bf16.msra.mxu0 0
        %769 = vmatprep.subr.bf16.mxu0 0
        %770 = vmatpush2.bf16.msra.mxu0 0
        %771 = vmatprep.subr.bf16.mxu0 0
        %772 = vmatpush2.bf16.msra.mxu0 0
        %773 = vmatprep.subr.bf16.mxu0 0
        %774 = vmatpush2.bf16.msra.mxu0 0
        %775 = vmatprep.subr.bf16.mxu0 0
        %776 = vmatpush2.bf16.msra.mxu0 0
        %777 = vmatprep.subr.bf16.mxu0 0
        %778 = vmatpush2.bf16.msra.mxu0 0
        %779 = vmatprep.subr.bf16.mxu0 0
        %780 = vmatpush2.bf16.msra.mxu0 0
        %781 = vmatprep.mubr.bf16.mxu0 0
        %782 = vmatmul.mubr.bf16.gmra.mxu0 %v722
        %v783 = vpop.f32.mrf.mxu0
        %v784 = vadd.f32 0.0, %v783
        %v785 = vpop.f32.mrf.mxu0
        %v786 = vpop.f32.mrf.mxu0
        %v787 = vadd.f32 0.0, %v786
        %v788 = vpop.f32.mrf.mxu0
        %789 = vmatprep.mubr.bf16.mxu0 0
        %790 = vmatmul.mubr.bf16.gmra.mxu0 %v725
        %v791 = vpop.f32.mrf.mxu0
        %v792 = vadd.f32 0.0, %v791
        %v793 = vpop.f32.mrf.mxu0
        %v794 = vpop.f32.mrf.mxu0
        %v795 = vadd.f32 0.0, %v794
        %v796 = vpop.f32.mrf.mxu0
        %797 = vmatprep.mubr.bf16.mxu0 0
        %798 = vmatmul.mubr.bf16.gmra.mxu0 %v728
        %v799 = vpop.f32.mrf.mxu0
        %v800 = vadd.f32 0.0, %v799
        %v801 = vpop.f32.mrf.mxu0
        %v802 = vpop.f32.mrf.mxu0
        %v803 = vadd.f32 0.0, %v802
        %v804 = vpop.f32.mrf.mxu0
        %805 = vmatprep.mubr.bf16.mxu0 0
        %806 = vmatmul.mubr.bf16.gmra.mxu0 %v731
        %v807 = vpop.f32.mrf.mxu0
        %v808 = vadd.f32 0.0, %v807
        %v809 = vpop.f32.mrf.mxu0
        %v810 = vpop.f32.mrf.mxu0
        %v811 = vadd.f32 0.0, %v810
        %v812 = vpop.f32.mrf.mxu0
        %813 = vmatprep.mubr.bf16.mxu0 0
        %814 = vmatmul.mubr.bf16.gmra.mxu0 %v734
        %v815 = vpop.f32.mrf.mxu0
        %v816 = vadd.f32 0.0, %v815
        %v817 = vpop.f32.mrf.mxu0
        %v818 = vpop.f32.mrf.mxu0
        %v819 = vadd.f32 0.0, %v818
        %v820 = vpop.f32.mrf.mxu0
        %821 = vmatprep.mubr.bf16.mxu0 0
        %822 = vmatmul.mubr.bf16.gmra.mxu0 %v737
        %v823 = vpop.f32.mrf.mxu0
        %v824 = vadd.f32 0.0, %v823
        %v825 = vpop.f32.mrf.mxu0
        %v826 = vpop.f32.mrf.mxu0
        %v827 = vadd.f32 0.0, %v826
        %v828 = vpop.f32.mrf.mxu0
        %829 = vmatprep.mubr.bf16.mxu0 0
        %830 = vmatmul.mubr.bf16.gmra.mxu0 %v740
        %v831 = vpop.f32.mrf.mxu0
        %v832 = vadd.f32 0.0, %v831
        %v833 = vpop.f32.mrf.mxu0
        %v834 = vpop.f32.mrf.mxu0
        %v835 = vadd.f32 0.0, %v834
        %v836 = vpop.f32.mrf.mxu0
        %837 = vmatprep.mubr.bf16.mxu0 0
        %838 = vmatmul.mubr.bf16.gmra.mxu0 %v743
        %v839 = vpop.f32.mrf.mxu0
        %v840 = vadd.f32 0.0, %v839
        %v841 = vpop.f32.mrf.mxu0
        %v842 = vpop.f32.mrf.mxu0
        %v843 = vadd.f32 0.0, %v842
        %v844 = vpop.f32.mrf.mxu0
        %845 = vdwg.mxu0
        %v846 = vpack.c.bf16 %v787, %v784
        %v847 = vpack.c.bf16 %v795, %v792
        %v848 = vpack.c.bf16 %v803, %v800
        %v849 = vpack.c.bf16 %v811, %v808
        %v850 = vpack.c.bf16 %v819, %v816
        %v851 = vpack.c.bf16 %v827, %v824
        %v852 = vpack.c.bf16 %v835, %v832
        %v853 = vpack.c.bf16 %v843, %v840
        %v870 = vunpack.c.l.b16 %v304
        %v871 = vunpack.c.l.b16 %v305
        %v872 = vunpack.c.l.b16 %v306
        %v873 = vunpack.c.l.b16 %v307
        %v874 = vunpack.c.l.b16 %v308
        %v875 = vunpack.c.l.b16 %v309
        %v876 = vunpack.c.l.b16 %v310
        %v877 = vunpack.c.l.b16 %v311
        %v878 = vunpack.c.l.b16 %v312
        %v879 = vunpack.c.l.b16 %v313
        %v880 = vunpack.c.l.b16 %v314
        %v881 = vunpack.c.l.b16 %v315
        %v882 = vunpack.c.l.b16 %v316
        %v883 = vunpack.c.l.b16 %v317
        %v884 = vunpack.c.l.b16 %v318
        %v885 = vunpack.c.l.b16 %v319
        %v886 = vpack.c.b16 %v871, %v870
        %v887 = vpack.c.b16 %v873, %v872
        %v888 = vpack.c.b16 %v875, %v874
        %v889 = vpack.c.b16 %v877, %v876
        %v890 = vpack.c.b16 %v879, %v878
        %v891 = vpack.c.b16 %v881, %v880
        %v892 = vpack.c.b16 %v883, %v882
        %v893 = vpack.c.b16 %v885, %v884
        %910 = vrot.lane.b32.xlu0 %v846, 112
        %v911 = vpop.permute.xlu0 %910
        %912 = vrot.lane.b32.xlu0 %v847, 112
        %v913 = vpop.permute.xlu0 %912
        %914 = vrot.lane.b32.xlu0 %v848, 112
        %v915 = vpop.permute.xlu0 %914
        %916 = vrot.lane.b32.xlu0 %v849, 112
        %v917 = vpop.permute.xlu0 %916
        %918 = vrot.lane.b32.xlu0 %v850, 112
        %v919 = vpop.permute.xlu0 %918
        %920 = vrot.lane.b32.xlu0 %v851, 112
        %v921 = vpop.permute.xlu0 %920
        %922 = vrot.lane.b32.xlu0 %v852, 112
        %v923 = vpop.permute.xlu0 %922
        %924 = vrot.lane.b32.xlu0 %v853, 112
        %v925 = vpop.permute.xlu0 %924
        %934 = vmatprep.subr.bf16.mxu0 0
        %935 = vmatpush1.bf16.msra.mxu0 %v925
        %936 = vmatprep.subr.bf16.mxu0 0
        %937 = vmatpush1.bf16.msra.mxu0 %v923
        %938 = vmatprep.subr.bf16.mxu0 0
        %939 = vmatpush1.bf16.msra.mxu0 %v921
        %940 = vmatprep.subr.bf16.mxu0 0
        %941 = vmatpush1.bf16.msra.mxu0 %v919
        %942 = vmatprep.subr.bf16.mxu0 0
        %943 = vmatpush1.bf16.msra.mxu0 %v917
        %944 = vmatprep.subr.bf16.mxu0 0
        %945 = vmatpush1.bf16.msra.mxu0 %v915
        %946 = vmatprep.subr.bf16.mxu0 0
        %947 = vmatpush1.bf16.msra.mxu0 %v913
        %948 = vmatprep.subr.bf16.mxu0 0
        %949 = vmatpush1.bf16.msra.mxu0 %v911
        %950 = vmatprep.subr.bf16.mxu0 0
        %951 = vmatpush2.bf16.msra.mxu0 0
        %952 = vmatprep.subr.bf16.mxu0 0
        %953 = vmatpush2.bf16.msra.mxu0 0
        %954 = vmatprep.subr.bf16.mxu0 0
        %955 = vmatpush2.bf16.msra.mxu0 0
        %956 = vmatprep.subr.bf16.mxu0 0
        %957 = vmatpush2.bf16.msra.mxu0 0
        %958 = vmatprep.subr.bf16.mxu0 0
        %959 = vmatpush2.bf16.msra.mxu0 0
        %960 = vmatprep.subr.bf16.mxu0 0
        %961 = vmatpush2.bf16.msra.mxu0 0
        %962 = vmatprep.subr.bf16.mxu0 0
        %963 = vmatpush2.bf16.msra.mxu0 0
        %964 = vmatprep.subr.bf16.mxu0 0
        %965 = vmatpush2.bf16.msra.mxu0 0
        %966 = vmatprep.mubr.bf16.mxu0 0
        %967 = vmatmul.mubr.bf16.gmra.mxu0 %v886
        %v968 = vpop.f32.mrf.mxu0
        %v969 = vadd.f32 0.0, %v968
        %v970 = vpop.f32.mrf.mxu0
        %v971 = vpop.f32.mrf.mxu0
        %v972 = vadd.f32 0.0, %v971
        %v973 = vpop.f32.mrf.mxu0
        %974 = vmatprep.mubr.bf16.mxu0 0
        %975 = vmatmul.mubr.bf16.gmra.mxu0 %v887
        %v976 = vpop.f32.mrf.mxu0
        %v977 = vadd.f32 0.0, %v976
        %v978 = vpop.f32.mrf.mxu0
        %v979 = vpop.f32.mrf.mxu0
        %v980 = vadd.f32 0.0, %v979
        %v981 = vpop.f32.mrf.mxu0
        %982 = vmatprep.mubr.bf16.mxu0 0
        %983 = vmatmul.mubr.bf16.gmra.mxu0 %v888
        %v984 = vpop.f32.mrf.mxu0
        %v985 = vadd.f32 0.0, %v984
        %v986 = vpop.f32.mrf.mxu0
        %v987 = vpop.f32.mrf.mxu0
        %v988 = vadd.f32 0.0, %v987
        %v989 = vpop.f32.mrf.mxu0
        %990 = vmatprep.mubr.bf16.mxu0 0
        %991 = vmatmul.mubr.bf16.gmra.mxu0 %v889
        %v992 = vpop.f32.mrf.mxu0
        %v993 = vadd.f32 0.0, %v992
        %v994 = vpop.f32.mrf.mxu0
        %v995 = vpop.f32.mrf.mxu0
        %v996 = vadd.f32 0.0, %v995
        %v997 = vpop.f32.mrf.mxu0
        %998 = vmatprep.mubr.bf16.mxu0 0
        %999 = vmatmul.mubr.bf16.gmra.mxu0 %v890
        %v1000 = vpop.f32.mrf.mxu0
        %v1001 = vadd.f32 0.0, %v1000
        %v1002 = vpop.f32.mrf.mxu0
        %v1003 = vpop.f32.mrf.mxu0
        %v1004 = vadd.f32 0.0, %v1003
        %v1005 = vpop.f32.mrf.mxu0
        %1006 = vmatprep.mubr.bf16.mxu0 0
        %1007 = vmatmul.mubr.bf16.gmra.mxu0 %v891
        %v1008 = vpop.f32.mrf.mxu0
        %v1009 = vadd.f32 0.0, %v1008
        %v1010 = vpop.f32.mrf.mxu0
        %v1011 = vpop.f32.mrf.mxu0
        %v1012 = vadd.f32 0.0, %v1011
        %v1013 = vpop.f32.mrf.mxu0
        %1014 = vmatprep.mubr.bf16.mxu0 0
        %1015 = vmatmul.mubr.bf16.gmra.mxu0 %v892
        %v1016 = vpop.f32.mrf.mxu0
        %v1017 = vadd.f32 0.0, %v1016
        %v1018 = vpop.f32.mrf.mxu0
        %v1019 = vpop.f32.mrf.mxu0
        %v1020 = vadd.f32 0.0, %v1019
        %v1021 = vpop.f32.mrf.mxu0
        %1022 = vmatprep.mubr.bf16.mxu0 0
        %1023 = vmatmul.mubr.bf16.gmra.mxu0 %v893
        %v1024 = vpop.f32.mrf.mxu0
        %v1025 = vadd.f32 0.0, %v1024
        %v1026 = vpop.f32.mrf.mxu0
        %v1027 = vpop.f32.mrf.mxu0
        %v1028 = vadd.f32 0.0, %v1027
        %v1029 = vpop.f32.mrf.mxu0
        %1030 = vdwg.mxu0
        %1047 = vrot.lane.b32.xlu0 %v969, 8
        %v1048 = vpop.permute.xlu0 %1047
        %1049 = vrot.lane.b32.xlu0 %v972, 8
        %v1050 = vpop.permute.xlu0 %1049
        %1051 = vrot.lane.b32.xlu0 %v977, 8
        %v1052 = vpop.permute.xlu0 %1051
        %1053 = vrot.lane.b32.xlu0 %v980, 8
        %v1054 = vpop.permute.xlu0 %1053
        %1055 = vrot.lane.b32.xlu0 %v985, 8
        %v1056 = vpop.permute.xlu0 %1055
        %1057 = vrot.lane.b32.xlu0 %v988, 8
        %v1058 = vpop.permute.xlu0 %1057
        %1059 = vrot.lane.b32.xlu0 %v993, 8
        %v1060 = vpop.permute.xlu0 %1059
        %1061 = vrot.lane.b32.xlu0 %v996, 8
        %v1062 = vpop.permute.xlu0 %1061
        %1063 = vrot.lane.b32.xlu0 %v1001, 8
        %v1064 = vpop.permute.xlu0 %1063
        %1065 = vrot.lane.b32.xlu0 %v1004, 8
        %v1066 = vpop.permute.xlu0 %1065
        %1067 = vrot.lane.b32.xlu0 %v1009, 8
        %v1068 = vpop.permute.xlu0 %1067
        %1069 = vrot.lane.b32.xlu0 %v1012, 8
        %v1070 = vpop.permute.xlu0 %1069
        %1071 = vrot.lane.b32.xlu0 %v1017, 8
        %v1072 = vpop.permute.xlu0 %1071
        %1073 = vrot.lane.b32.xlu0 %v1020, 8
        %v1074 = vpop.permute.xlu0 %1073
        %1075 = vrot.lane.b32.xlu0 %v1025, 8
        %v1076 = vpop.permute.xlu0 %1075
        %1077 = vrot.lane.b32.xlu0 %v1028, 8
        %v1078 = vpop.permute.xlu0 %1077
        %v1095 = vadd.f32 %v784, %v1048
        %v1096 = vadd.f32 %v787, %v1050
        %v1097 = vadd.f32 %v792, %v1052
        %v1098 = vadd.f32 %v795, %v1054
        %v1099 = vadd.f32 %v800, %v1056
        %v1100 = vadd.f32 %v803, %v1058
        %v1101 = vadd.f32 %v808, %v1060
        %v1102 = vadd.f32 %v811, %v1062
        %v1103 = vadd.f32 %v816, %v1064
        %v1104 = vadd.f32 %v819, %v1066
        %v1105 = vadd.f32 %v824, %v1068
        %v1106 = vadd.f32 %v827, %v1070
        %v1107 = vadd.f32 %v832, %v1072
        %v1108 = vadd.f32 %v835, %v1074
        %v1109 = vadd.f32 %v840, %v1076
        %v1110 = vadd.f32 %v843, %v1078
        %v1111 = vpack.c.bf16 %v1096, %v1095
        %v1112 = vpack.c.bf16 %v1098, %v1097
        %v1113 = vpack.c.bf16 %v1100, %v1099
        %v1114 = vpack.c.bf16 %v1102, %v1101
        %v1115 = vpack.c.bf16 %v1104, %v1103
        %v1116 = vpack.c.bf16 %v1106, %v1105
        %v1117 = vpack.c.bf16 %v1108, %v1107
        %v1118 = vpack.c.bf16 %v1110, %v1109
        %1127 = vrot.lane.b32.xlu0 %v1111, 120
        %v1128 = vpop.permute.xlu0 %1127
        %1129 = vrot.lane.b32.xlu0 %v1112, 120
        %v1130 = vpop.permute.xlu0 %1129
        %1131 = vrot.lane.b32.xlu0 %v1113, 120
        %v1132 = vpop.permute.xlu0 %1131
        %1133 = vrot.lane.b32.xlu0 %v1114, 120
        %v1134 = vpop.permute.xlu0 %1133
        %1135 = vrot.lane.b32.xlu0 %v1115, 120
        %v1136 = vpop.permute.xlu0 %1135
        %1137 = vrot.lane.b32.xlu0 %v1116, 120
        %v1138 = vpop.permute.xlu0 %1137
        %1139 = vrot.lane.b32.xlu0 %v1117, 120
        %v1140 = vpop.permute.xlu0 %1139
        %1141 = vrot.lane.b32.xlu0 %v1118, 120
        %v1142 = vpop.permute.xlu0 %1141
        %1151 = vmatprep.subr.bf16.mxu0 0
        %1152 = vmatpush1.bf16.msra.mxu0 %v1142
        %1153 = vmatprep.subr.bf16.mxu0 0
        %1154 = vmatpush1.bf16.msra.mxu0 %v1140
        %1155 = vmatprep.subr.bf16.mxu0 0
        %1156 = vmatpush1.bf16.msra.mxu0 %v1138
        %1157 = vmatprep.subr.bf16.mxu0 0
        %1158 = vmatpush1.bf16.msra.mxu0 %v1136
        %1159 = vmatprep.subr.bf16.mxu0 0
        %1160 = vmatpush1.bf16.msra.mxu0 %v1134
        %1161 = vmatprep.subr.bf16.mxu0 0
        %1162 = vmatpush1.bf16.msra.mxu0 %v1132
        %1163 = vmatprep.subr.bf16.mxu0 0
        %1164 = vmatpush1.bf16.msra.mxu0 %v1130
        %1165 = vmatprep.subr.bf16.mxu0 0
        %1166 = vmatpush1.bf16.msra.mxu0 %v1128
        %1167 = vmatprep.subr.bf16.mxu0 0
        %1168 = vmatpush2.bf16.msra.mxu0 0
        %1169 = vmatprep.subr.bf16.mxu0 0
        %1170 = vmatpush2.bf16.msra.mxu0 0
        %1171 = vmatprep.subr.bf16.mxu0 0
        %1172 = vmatpush2.bf16.msra.mxu0 0
        %1173 = vmatprep.subr.bf16.mxu0 0
        %1174 = vmatpush2.bf16.msra.mxu0 0
        %1175 = vmatprep.subr.bf16.mxu0 0
        %1176 = vmatpush2.bf16.msra.mxu0 0
        %1177 = vmatprep.subr.bf16.mxu0 0
        %1178 = vmatpush2.bf16.msra.mxu0 0
        %1179 = vmatprep.subr.bf16.mxu0 0
        %1180 = vmatpush2.bf16.msra.mxu0 0
        %1181 = vmatprep.subr.bf16.mxu0 0
        %1182 = vmatpush2.bf16.msra.mxu0 0
        %1183 = vmatprep.mubr.bf16.mxu0 0
        %1184 = vmatmul.mubr.bf16.gmra.mxu0 %v886
        %v1185 = vpop.f32.mrf.mxu0
        %v1186 = vadd.f32 0.0, %v1185
        %v1187 = vpop.f32.mrf.mxu0
        %v1188 = vpop.f32.mrf.mxu0
        %v1189 = vadd.f32 0.0, %v1188
        %v1190 = vpop.f32.mrf.mxu0
        %1191 = vmatprep.mubr.bf16.mxu0 0
        %1192 = vmatmul.mubr.bf16.gmra.mxu0 %v887
        %v1193 = vpop.f32.mrf.mxu0
        %v1194 = vadd.f32 0.0, %v1193
        %v1195 = vpop.f32.mrf.mxu0
        %v1196 = vpop.f32.mrf.mxu0
        %v1197 = vadd.f32 0.0, %v1196
        %v1198 = vpop.f32.mrf.mxu0
        %1199 = vmatprep.mubr.bf16.mxu0 0
        %1200 = vmatmul.mubr.bf16.gmra.mxu0 %v888
        %v1201 = vpop.f32.mrf.mxu0
        %v1202 = vadd.f32 0.0, %v1201
        %v1203 = vpop.f32.mrf.mxu0
        %v1204 = vpop.f32.mrf.mxu0
        %v1205 = vadd.f32 0.0, %v1204
        %v1206 = vpop.f32.mrf.mxu0
        %1207 = vmatprep.mubr.bf16.mxu0 0
        %1208 = vmatmul.mubr.bf16.gmra.mxu0 %v889
        %v1209 = vpop.f32.mrf.mxu0
        %v1210 = vadd.f32 0.0, %v1209
        %v1211 = vpop.f32.mrf.mxu0
        %v1212 = vpop.f32.mrf.mxu0
        %v1213 = vadd.f32 0.0, %v1212
        %v1214 = vpop.f32.mrf.mxu0
        %1215 = vmatprep.mubr.bf16.mxu0 0
        %1216 = vmatmul.mubr.bf16.gmra.mxu0 %v890
        %v1217 = vpop.f32.mrf.mxu0
        %v1218 = vadd.f32 0.0, %v1217
        %v1219 = vpop.f32.mrf.mxu0
        %v1220 = vpop.f32.mrf.mxu0
        %v1221 = vadd.f32 0.0, %v1220
        %v1222 = vpop.f32.mrf.mxu0
        %1223 = vmatprep.mubr.bf16.mxu0 0
        %1224 = vmatmul.mubr.bf16.gmra.mxu0 %v891
        %v1225 = vpop.f32.mrf.mxu0
        %v1226 = vadd.f32 0.0, %v1225
        %v1227 = vpop.f32.mrf.mxu0
        %v1228 = vpop.f32.mrf.mxu0
        %v1229 = vadd.f32 0.0, %v1228
        %v1230 = vpop.f32.mrf.mxu0
        %1231 = vmatprep.mubr.bf16.mxu0 0
        %1232 = vmatmul.mubr.bf16.gmra.mxu0 %v892
        %v1233 = vpop.f32.mrf.mxu0
        %v1234 = vadd.f32 0.0, %v1233
        %v1235 = vpop.f32.mrf.mxu0
        %v1236 = vpop.f32.mrf.mxu0
        %v1237 = vadd.f32 0.0, %v1236
        %v1238 = vpop.f32.mrf.mxu0
        %1239 = vmatprep.mubr.bf16.mxu0 0
        %1240 = vmatmul.mubr.bf16.gmra.mxu0 %v893
        %v1241 = vpop.f32.mrf.mxu0
        %v1242 = vadd.f32 0.0, %v1241
        %v1243 = vpop.f32.mrf.mxu0
        %v1244 = vpop.f32.mrf.mxu0
        %v1245 = vadd.f32 0.0, %v1244
        %v1246 = vpop.f32.mrf.mxu0
        %1247 = vdwg.mxu0
        %v1248 = vadd.f32 %v784, %v1186
        %v1249 = vadd.f32 %v787, %v1189
        %v1250 = vadd.f32 %v792, %v1194
        %v1251 = vadd.f32 %v795, %v1197
        %v1252 = vadd.f32 %v800, %v1202
        %v1253 = vadd.f32 %v803, %v1205
        %v1254 = vadd.f32 %v808, %v1210
        %v1255 = vadd.f32 %v811, %v1213
        %v1256 = vadd.f32 %v816, %v1218
        %v1257 = vadd.f32 %v819, %v1221
        %v1258 = vadd.f32 %v824, %v1226
        %v1259 = vadd.f32 %v827, %v1229
        %v1260 = vadd.f32 %v832, %v1234
        %v1261 = vadd.f32 %v835, %v1237
        %v1262 = vadd.f32 %v840, %v1242
        %v1263 = vadd.f32 %v843, %v1245
        %1264 = vmatprep.subr.mxu0 0.0
        %1265 = vmatpush1.msra.mxu0 %v1263
        %1266 = vmatprep.subr.mxu0 0.0
        %1267 = vmatpush1.msra.mxu0 %v1262
        %1268 = vmatprep.subr.mxu0 0.0
        %1269 = vmatpush1.msra.mxu0 %v1261
        %1270 = vmatprep.subr.mxu0 0.0
        %1271 = vmatpush1.msra.mxu0 %v1260
        %1272 = vmatprep.subr.mxu0 0.0
        %1273 = vmatpush1.msra.mxu0 %v1259
        %1274 = vmatprep.subr.mxu0 0.0
        %1275 = vmatpush1.msra.mxu0 %v1258
        %1276 = vmatprep.subr.mxu0 0.0
        %1277 = vmatpush1.msra.mxu0 %v1257
        %1278 = vmatprep.subr.mxu0 0.0
        %1279 = vmatpush1.msra.mxu0 %v1256
        %1280 = vmatprep.subr.mxu0 0.0
        %1281 = vmatpush1.msra.mxu0 %v1255
        %1282 = vmatprep.subr.mxu0 0.0
        %1283 = vmatpush1.msra.mxu0 %v1254
        %1284 = vmatprep.subr.mxu0 0.0
        %1285 = vmatpush1.msra.mxu0 %v1253
        %1286 = vmatprep.subr.mxu0 0.0
        %1287 = vmatpush1.msra.mxu0 %v1252
        %1288 = vmatprep.subr.mxu0 0.0
        %1289 = vmatpush1.msra.mxu0 %v1251
        %1290 = vmatprep.subr.mxu0 0.0
        %1291 = vmatpush1.msra.mxu0 %v1250
        %1292 = vmatprep.subr.mxu0 0.0
        %1293 = vmatpush1.msra.mxu0 %v1249
        %1294 = vmatprep.subr.mxu0 0.0
        %1295 = vmatpush1.msra.mxu0 %v1248
        %1296 = vmatprep.subr.mxu0 0.0
        %1297 = vmatpush2.msra.mxu0 0.0
        %1298 = vmatprep.subr.mxu0 0.0
        %1299 = vmatpush2.msra.mxu0 0.0
        %1300 = vmatprep.subr.mxu0 0.0
        %1301 = vmatpush2.msra.mxu0 0.0
        %1302 = vmatprep.subr.mxu0 0.0
        %1303 = vmatpush2.msra.mxu0 0.0
        %1304 = vmatprep.subr.mxu0 0.0
        %1305 = vmatpush2.msra.mxu0 0.0
        %1306 = vmatprep.subr.mxu0 0.0
        %1307 = vmatpush2.msra.mxu0 0.0
        %1308 = vmatprep.subr.mxu0 0.0
        %1309 = vmatpush2.msra.mxu0 0.0
        %1310 = vmatprep.subr.mxu0 0.0
        %1311 = vmatpush2.msra.mxu0 0.0
        %1312 = vmatprep.subr.mxu0 0.0
        %1313 = vmatpush2.msra.mxu0 0.0
        %1314 = vmatprep.subr.mxu0 0.0
        %1315 = vmatpush2.msra.mxu0 0.0
        %1316 = vmatprep.subr.mxu0 0.0
        %1317 = vmatpush2.msra.mxu0 0.0
        %1318 = vmatprep.subr.mxu0 0.0
        %1319 = vmatpush2.msra.mxu0 0.0
        %1320 = vmatprep.subr.mxu0 0.0
        %1321 = vmatpush2.msra.mxu0 0.0
        %1322 = vmatprep.subr.mxu0 0.0
        %1323 = vmatpush2.msra.mxu0 0.0
        %1324 = vmatprep.subr.mxu0 0.0
        %1325 = vmatpush2.msra.mxu0 0.0
        %1326 = vmatprep.subr.mxu0 0.0
        %1327 = vmatpush2.msra.mxu0 0.0
        %1328 = vmatprep.mubr.f32.mxu0 0.0
        %1329 = vmatmul.mubr.f32.gmra.mxu0 %v331
        %v1330 = vpop.f32.mrf.mxu0
        %v1331 = vadd.f32 0.0, %v1330
        %v1332 = vpop.f32.mrf.mxu0
        %1333 = vdwg.mxu0
        %v1334 = vmul.f32 %v1331, 0.0625
        %v1336 = vsel %vm720, %v414, 0
        %v1339 = vsel %vm720, %v415, 0
        %v1342 = vsel %vm720, %v416, 0
        %v1345 = vsel %vm720, %v417, 0
        %v1348 = vsel %vm720, %v418, 0
        %v1351 = vsel %vm720, %v419, 0
        %v1354 = vsel %vm720, %v420, 0
        %v1357 = vsel %vm720, %v421, 0
        %v1360 = vsel %vm720, %v422, 0
        %v1363 = vsel %vm720, %v423, 0
        %v1366 = vsel %vm720, %v424, 0
        %v1369 = vsel %vm720, %v425, 0
        %v1372 = vsel %vm720, %v426, 0
        %v1375 = vsel %vm720, %v427, 0
        %v1378 = vsel %vm720, %v428, 0
        %v1381 = vsel %vm720, %v429, 0
        %1383 = vmatprep.subr.mxu0 0.0
        %1384 = vmatpush1.msra.mxu0 0.0
        %1385 = vmatprep.subr.mxu0 0.0
        %1386 = vmatpush1.msra.mxu0 0.0
        %1387 = vmatprep.subr.mxu0 0.0
        %1388 = vmatpush1.msra.mxu0 0.0
        %1389 = vmatprep.subr.mxu0 0.0
        %1390 = vmatpush1.msra.mxu0 0.0
        %1391 = vmatprep.subr.mxu0 0.0
        %1392 = vmatpush1.msra.mxu0 0.0
        %1393 = vmatprep.subr.mxu0 0.0
        %1394 = vmatpush1.msra.mxu0 0.0
        %1395 = vmatprep.subr.mxu0 0.0
        %1396 = vmatpush1.msra.mxu0 0.0
        %1397 = vmatprep.subr.mxu0 0.0
        %1398 = vmatpush1.msra.mxu0 0.0
        %1399 = vmatprep.subr.mxu0 0.0
        %1400 = vmatpush1.msra.mxu0 0.0
        %1401 = vmatprep.subr.mxu0 0.0
        %1402 = vmatpush1.msra.mxu0 0.0
        %1403 = vmatprep.subr.mxu0 0.0
        %1404 = vmatpush1.msra.mxu0 0.0
        %1405 = vmatprep.subr.mxu0 0.0
        %1406 = vmatpush1.msra.mxu0 0.0
        %1407 = vmatprep.subr.mxu0 0.0
        %1408 = vmatpush1.msra.mxu0 0.0
        %1409 = vmatprep.subr.mxu0 0.0
        %1410 = vmatpush1.msra.mxu0 0.0
        %1411 = vmatprep.subr.mxu0 0.0
        %1412 = vmatpush1.msra.mxu0 0.0
        %1413 = vmatprep.subr.mxu0 0.0
        %1414 = vmatpush1.msra.mxu0 %v1334
        %1415 = vmatprep.subr.mxu0 0.0
        %1416 = vmatpush2.msra.mxu0 0.0
        %1417 = vmatprep.subr.mxu0 0.0
        %1418 = vmatpush2.msra.mxu0 0.0
        %1419 = vmatprep.subr.mxu0 0.0
        %1420 = vmatpush2.msra.mxu0 0.0
        %1421 = vmatprep.subr.mxu0 0.0
        %1422 = vmatpush2.msra.mxu0 0.0
        %1423 = vmatprep.subr.mxu0 0.0
        %1424 = vmatpush2.msra.mxu0 0.0
        %1425 = vmatprep.subr.mxu0 0.0
        %1426 = vmatpush2.msra.mxu0 0.0
        %1427 = vmatprep.subr.mxu0 0.0
        %1428 = vmatpush2.msra.mxu0 0.0
        %1429 = vmatprep.subr.mxu0 0.0
        %1430 = vmatpush2.msra.mxu0 0.0
        %1431 = vmatprep.subr.mxu0 0.0
        %1432 = vmatpush2.msra.mxu0 0.0
        %1433 = vmatprep.subr.mxu0 0.0
        %1434 = vmatpush2.msra.mxu0 0.0
        %1435 = vmatprep.subr.mxu0 0.0
        %1436 = vmatpush2.msra.mxu0 0.0
        %1437 = vmatprep.subr.mxu0 0.0
        %1438 = vmatpush2.msra.mxu0 0.0
        %1439 = vmatprep.subr.mxu0 0.0
        %1440 = vmatpush2.msra.mxu0 0.0
        %1441 = vmatprep.subr.mxu0 0.0
        %1442 = vmatpush2.msra.mxu0 0.0
        %1443 = vmatprep.subr.mxu0 0.0
        %1444 = vmatpush2.msra.mxu0 0.0
        %1445 = vmatprep.subr.mxu0 0.0
        %1446 = vmatpush2.msra.mxu0 0.0
        %1447 = vmatprep.mubr.f32.mxu0 0.0
        %1448 = vmatmul.mubr.f32.gmra.mxu0 %v1336
        %v1449 = vpop.f32.mrf.mxu0
        %v1450 = vadd.f32 0.0, %v1449
        %v1451 = vpop.f32.mrf.mxu0
        %1452 = vmatprep.mubr.f32.mxu0 0.0
        %1453 = vmatmul.mubr.f32.gmra.mxu0 %v1339
        %v1454 = vpop.f32.mrf.mxu0
        %v1455 = vadd.f32 0.0, %v1454
        %v1456 = vpop.f32.mrf.mxu0
        %1457 = vmatprep.mubr.f32.mxu0 0.0
        %1458 = vmatmul.mubr.f32.gmra.mxu0 %v1342
        %v1459 = vpop.f32.mrf.mxu0
        %v1460 = vadd.f32 0.0, %v1459
        %v1461 = vpop.f32.mrf.mxu0
        %1462 = vmatprep.mubr.f32.mxu0 0.0
        %1463 = vmatmul.mubr.f32.gmra.mxu0 %v1345
        %v1464 = vpop.f32.mrf.mxu0
        %v1465 = vadd.f32 0.0, %v1464
        %v1466 = vpop.f32.mrf.mxu0
        %1467 = vmatprep.mubr.f32.mxu0 0.0
        %1468 = vmatmul.mubr.f32.gmra.mxu0 %v1348
        %v1469 = vpop.f32.mrf.mxu0
        %v1470 = vadd.f32 0.0, %v1469
        %v1471 = vpop.f32.mrf.mxu0
        %1472 = vmatprep.mubr.f32.mxu0 0.0
        %1473 = vmatmul.mubr.f32.gmra.mxu0 %v1351
        %v1474 = vpop.f32.mrf.mxu0
        %v1475 = vadd.f32 0.0, %v1474
        %v1476 = vpop.f32.mrf.mxu0
        %1477 = vmatprep.mubr.f32.mxu0 0.0
        %1478 = vmatmul.mubr.f32.gmra.mxu0 %v1354
        %v1479 = vpop.f32.mrf.mxu0
        %v1480 = vadd.f32 0.0, %v1479
        %v1481 = vpop.f32.mrf.mxu0
        %1482 = vmatprep.mubr.f32.mxu0 0.0
        %1483 = vmatmul.mubr.f32.gmra.mxu0 %v1357
        %v1484 = vpop.f32.mrf.mxu0
        %v1485 = vadd.f32 0.0, %v1484
        %v1486 = vpop.f32.mrf.mxu0
        %1487 = vmatprep.mubr.f32.mxu0 0.0
        %1488 = vmatmul.mubr.f32.gmra.mxu0 %v1360
        %v1489 = vpop.f32.mrf.mxu0
        %v1490 = vadd.f32 0.0, %v1489
        %v1491 = vpop.f32.mrf.mxu0
        %1492 = vmatprep.mubr.f32.mxu0 0.0
        %1493 = vmatmul.mubr.f32.gmra.mxu0 %v1363
        %v1494 = vpop.f32.mrf.mxu0
        %v1495 = vadd.f32 0.0, %v1494
        %v1496 = vpop.f32.mrf.mxu0
        %1497 = vmatprep.mubr.f32.mxu0 0.0
        %1498 = vmatmul.mubr.f32.gmra.mxu0 %v1366
        %v1499 = vpop.f32.mrf.mxu0
        %v1500 = vadd.f32 0.0, %v1499
        %v1501 = vpop.f32.mrf.mxu0
        %1502 = vmatprep.mubr.f32.mxu0 0.0
        %1503 = vmatmul.mubr.f32.gmra.mxu0 %v1369
        %v1504 = vpop.f32.mrf.mxu0
        %v1505 = vadd.f32 0.0, %v1504
        %v1506 = vpop.f32.mrf.mxu0
        %1507 = vmatprep.mubr.f32.mxu0 0.0
        %1508 = vmatmul.mubr.f32.gmra.mxu0 %v1372
        %v1509 = vpop.f32.mrf.mxu0
        %v1510 = vadd.f32 0.0, %v1509
        %v1511 = vpop.f32.mrf.mxu0
        %1512 = vmatprep.mubr.f32.mxu0 0.0
        %1513 = vmatmul.mubr.f32.gmra.mxu0 %v1375
        %v1514 = vpop.f32.mrf.mxu0
        %v1515 = vadd.f32 0.0, %v1514
        %v1516 = vpop.f32.mrf.mxu0
        %1517 = vmatprep.mubr.f32.mxu0 0.0
        %1518 = vmatmul.mubr.f32.gmra.mxu0 %v1378
        %v1519 = vpop.f32.mrf.mxu0
        %v1520 = vadd.f32 0.0, %v1519
        %v1521 = vpop.f32.mrf.mxu0
        %1522 = vmatprep.mubr.f32.mxu0 0.0
        %1523 = vmatmul.mubr.f32.gmra.mxu0 %v1381
        %v1524 = vpop.f32.mrf.mxu0
        %v1525 = vadd.f32 0.0, %v1524
        %v1526 = vpop.f32.mrf.mxu0
        %1527 = vdwg.mxu0
        %v1528 = vsub.f32 %v1248, %v1450
        %v1529 = vsub.f32 %v1249, %v1455
        %v1530 = vsub.f32 %v1250, %v1460
        %v1531 = vsub.f32 %v1251, %v1465
        %v1532 = vsub.f32 %v1252, %v1470
        %v1533 = vsub.f32 %v1253, %v1475
        %v1534 = vsub.f32 %v1254, %v1480
        %v1535 = vsub.f32 %v1255, %v1485
        %v1536 = vsub.f32 %v1256, %v1490
        %v1537 = vsub.f32 %v1257, %v1495
        %v1538 = vsub.f32 %v1258, %v1500
        %v1539 = vsub.f32 %v1259, %v1505
        %v1540 = vsub.f32 %v1260, %v1510
        %v1541 = vsub.f32 %v1261, %v1515
        %v1542 = vsub.f32 %v1262, %v1520
        %v1543 = vsub.f32 %v1263, %v1525
        %v1544 = vmul.f32 %v1528, %v1528
        %v1545 = vmul.f32 %v1529, %v1529
        %v1546 = vmul.f32 %v1530, %v1530
        %v1547 = vmul.f32 %v1531, %v1531
        %v1548 = vmul.f32 %v1532, %v1532
        %v1549 = vmul.f32 %v1533, %v1533
        %v1550 = vmul.f32 %v1534, %v1534
        %v1551 = vmul.f32 %v1535, %v1535
        %v1552 = vmul.f32 %v1536, %v1536
        %v1553 = vmul.f32 %v1537, %v1537
        %v1554 = vmul.f32 %v1538, %v1538
        %v1555 = vmul.f32 %v1539, %v1539
        %v1556 = vmul.f32 %v1540, %v1540
        %v1557 = vmul.f32 %v1541, %v1541
        %v1558 = vmul.f32 %v1542, %v1542
        %v1559 = vmul.f32 %v1543, %v1543
        %1560 = vmatprep.subr.mxu0 0.0
        %1561 = vmatpush1.msra.mxu0 %v1559
        %1562 = vmatprep.subr.mxu0 0.0
        %1563 = vmatpush1.msra.mxu0 %v1558
        %1564 = vmatprep.subr.mxu0 0.0
        %1565 = vmatpush1.msra.mxu0 %v1557
        %1566 = vmatprep.subr.mxu0 0.0
        %1567 = vmatpush1.msra.mxu0 %v1556
        %1568 = vmatprep.subr.mxu0 0.0
        %1569 = vmatpush1.msra.mxu0 %v1555
        %1570 = vmatprep.subr.mxu0 0.0
        %1571 = vmatpush1.msra.mxu0 %v1554
        %1572 = vmatprep.subr.mxu0 0.0
        %1573 = vmatpush1.msra.mxu0 %v1553
        %1574 = vmatprep.subr.mxu0 0.0
        %1575 = vmatpush1.msra.mxu0 %v1552
        %1576 = vmatprep.subr.mxu0 0.0
        %1577 = vmatpush1.msra.mxu0 %v1551
        %1578 = vmatprep.subr.mxu0 0.0
        %1579 = vmatpush1.msra.mxu0 %v1550
        %1580 = vmatprep.subr.mxu0 0.0
        %1581 = vmatpush1.msra.mxu0 %v1549
        %1582 = vmatprep.subr.mxu0 0.0
        %1583 = vmatpush1.msra.mxu0 %v1548
        %1584 = vmatprep.subr.mxu0 0.0
        %1585 = vmatpush1.msra.mxu0 %v1547
        %1586 = vmatprep.subr.mxu0 0.0
        %1587 = vmatpush1.msra.mxu0 %v1546
        %1588 = vmatprep.subr.mxu0 0.0
        %1589 = vmatpush1.msra.mxu0 %v1545
        %1590 = vmatprep.subr.mxu0 0.0
        %1591 = vmatpush1.msra.mxu0 %v1544
        %1592 = vmatprep.subr.mxu0 0.0
        %1593 = vmatpush2.msra.mxu0 0.0
        %1594 = vmatprep.subr.mxu0 0.0
        %1595 = vmatpush2.msra.mxu0 0.0
        %1596 = vmatprep.subr.mxu0 0.0
        %1597 = vmatpush2.msra.mxu0 0.0
        %1598 = vmatprep.subr.mxu0 0.0
        %1599 = vmatpush2.msra.mxu0 0.0
        %1600 = vmatprep.subr.mxu0 0.0
        %1601 = vmatpush2.msra.mxu0 0.0
        %1602 = vmatprep.subr.mxu0 0.0
        %1603 = vmatpush2.msra.mxu0 0.0
        %1604 = vmatprep.subr.mxu0 0.0
        %1605 = vmatpush2.msra.mxu0 0.0
        %1606 = vmatprep.subr.mxu0 0.0
        %1607 = vmatpush2.msra.mxu0 0.0
        %1608 = vmatprep.subr.mxu0 0.0
        %1609 = vmatpush2.msra.mxu0 0.0
        %1610 = vmatprep.subr.mxu0 0.0
        %1611 = vmatpush2.msra.mxu0 0.0
        %1612 = vmatprep.subr.mxu0 0.0
        %1613 = vmatpush2.msra.mxu0 0.0
        %1614 = vmatprep.subr.mxu0 0.0
        %1615 = vmatpush2.msra.mxu0 0.0
        %1616 = vmatprep.subr.mxu0 0.0
        %1617 = vmatpush2.msra.mxu0 0.0
        %1618 = vmatprep.subr.mxu0 0.0
        %1619 = vmatpush2.msra.mxu0 0.0
        %1620 = vmatprep.subr.mxu0 0.0
        %1621 = vmatpush2.msra.mxu0 0.0
        %1622 = vmatprep.subr.mxu0 0.0
        %1623 = vmatpush2.msra.mxu0 0.0
        %1624 = vmatprep.mubr.f32.mxu0 0.0
        %1625 = vmatmul.mubr.f32.gmra.mxu0 %v331
        %v1626 = vpop.f32.mrf.mxu0
        %v1627 = vadd.f32 0.0, %v1626
        %v1628 = vpop.f32.mrf.mxu0
        %1629 = vdwg.mxu0
        %v1630 = vmul.f32 %v1627, 0.0625
        %v1631 = vadd.f32 %v1630, 1e-05
        %v1632 = vrsqrt.pop %v1631
        %v1633 = vlaneseq
        %v1634 = vshrl.u32 %v1633, 7
        %v1635 = vsub.s32 0, %v1634
        %v1636 = vrot.slane %v710, %v1635
        %v1637 = vmul.f32 %v1636, %v1632
        %1638 = vmatprep.subr.mxu0 0.0
        %1639 = vmatpush1.msra.mxu0 0.0
        %1640 = vmatprep.subr.mxu0 0.0
        %1641 = vmatpush1.msra.mxu0 0.0
        %1642 = vmatprep.subr.mxu0 0.0
        %1643 = vmatpush1.msra.mxu0 0.0
        %1644 = vmatprep.subr.mxu0 0.0
        %1645 = vmatpush1.msra.mxu0 0.0
        %1646 = vmatprep.subr.mxu0 0.0
        %1647 = vmatpush1.msra.mxu0 0.0
        %1648 = vmatprep.subr.mxu0 0.0
        %1649 = vmatpush1.msra.mxu0 0.0
        %1650 = vmatprep.subr.mxu0 0.0
        %1651 = vmatpush1.msra.mxu0 0.0
        %1652 = vmatprep.subr.mxu0 0.0
        %1653 = vmatpush1.msra.mxu0 0.0
        %1654 = vmatprep.subr.mxu0 0.0
        %1655 = vmatpush1.msra.mxu0 0.0
        %1656 = vmatprep.subr.mxu0 0.0
        %1657 = vmatpush1.msra.mxu0 0.0
        %1658 = vmatprep.subr.mxu0 0.0
        %1659 = vmatpush1.msra.mxu0 0.0
        %1660 = vmatprep.subr.mxu0 0.0
        %1661 = vmatpush1.msra.mxu0 0.0
        %1662 = vmatprep.subr.mxu0 0.0
        %1663 = vmatpush1.msra.mxu0 0.0
        %1664 = vmatprep.subr.mxu0 0.0
        %1665 = vmatpush1.msra.mxu0 0.0
        %1666 = vmatprep.subr.mxu0 0.0
        %1667 = vmatpush1.msra.mxu0 0.0
        %1668 = vmatprep.subr.mxu0 0.0
        %1669 = vmatpush1.msra.mxu0 %v1637
        %1670 = vmatprep.subr.mxu0 0.0
        %1671 = vmatpush2.msra.mxu0 0.0
        %1672 = vmatprep.subr.mxu0 0.0
        %1673 = vmatpush2.msra.mxu0 0.0
        %1674 = vmatprep.subr.mxu0 0.0
        %1675 = vmatpush2.msra.mxu0 0.0
        %1676 = vmatprep.subr.mxu0 0.0
        %1677 = vmatpush2.msra.mxu0 0.0
        %1678 = vmatprep.subr.mxu0 0.0
        %1679 = vmatpush2.msra.mxu0 0.0
        %1680 = vmatprep.subr.mxu0 0.0
        %1681 = vmatpush2.msra.mxu0 0.0
        %1682 = vmatprep.subr.mxu0 0.0
        %1683 = vmatpush2.msra.mxu0 0.0
        %1684 = vmatprep.subr.mxu0 0.0
        %1685 = vmatpush2.msra.mxu0 0.0
        %1686 = vmatprep.subr.mxu0 0.0
        %1687 = vmatpush2.msra.mxu0 0.0
        %1688 = vmatprep.subr.mxu0 0.0
        %1689 = vmatpush2.msra.mxu0 0.0
        %1690 = vmatprep.subr.mxu0 0.0
        %1691 = vmatpush2.msra.mxu0 0.0
        %1692 = vmatprep.subr.mxu0 0.0
        %1693 = vmatpush2.msra.mxu0 0.0
        %1694 = vmatprep.subr.mxu0 0.0
        %1695 = vmatpush2.msra.mxu0 0.0
        %1696 = vmatprep.subr.mxu0 0.0
        %1697 = vmatpush2.msra.mxu0 0.0
        %1698 = vmatprep.subr.mxu0 0.0
        %1699 = vmatpush2.msra.mxu0 0.0
        %1700 = vmatprep.subr.mxu0 0.0
        %1701 = vmatpush2.msra.mxu0 0.0
        %1702 = vmatprep.mubr.f32.mxu0 0.0
        %1703 = vmatmul.mubr.f32.gmra.mxu0 %v1336
        %v1704 = vpop.f32.mrf.mxu0
        %v1705 = vadd.f32 0.0, %v1704
        %v1706 = vpop.f32.mrf.mxu0
        %1707 = vmatprep.mubr.f32.mxu0 0.0
        %1708 = vmatmul.mubr.f32.gmra.mxu0 %v1339
        %v1709 = vpop.f32.mrf.mxu0
        %v1710 = vadd.f32 0.0, %v1709
        %v1711 = vpop.f32.mrf.mxu0
        %1712 = vmatprep.mubr.f32.mxu0 0.0
        %1713 = vmatmul.mubr.f32.gmra.mxu0 %v1342
        %v1714 = vpop.f32.mrf.mxu0
        %v1715 = vadd.f32 0.0, %v1714
        %v1716 = vpop.f32.mrf.mxu0
        %1717 = vmatprep.mubr.f32.mxu0 0.0
        %1718 = vmatmul.mubr.f32.gmra.mxu0 %v1345
        %v1719 = vpop.f32.mrf.mxu0
        %v1720 = vadd.f32 0.0, %v1719
        %v1721 = vpop.f32.mrf.mxu0
        %1722 = vmatprep.mubr.f32.mxu0 0.0
        %1723 = vmatmul.mubr.f32.gmra.mxu0 %v1348
        %v1724 = vpop.f32.mrf.mxu0
        %v1725 = vadd.f32 0.0, %v1724
        %v1726 = vpop.f32.mrf.mxu0
        %1727 = vmatprep.mubr.f32.mxu0 0.0
        %1728 = vmatmul.mubr.f32.gmra.mxu0 %v1351
        %v1729 = vpop.f32.mrf.mxu0
        %v1730 = vadd.f32 0.0, %v1729
        %v1731 = vpop.f32.mrf.mxu0
        %1732 = vmatprep.mubr.f32.mxu0 0.0
        %1733 = vmatmul.mubr.f32.gmra.mxu0 %v1354
        %v1734 = vpop.f32.mrf.mxu0
        %v1735 = vadd.f32 0.0, %v1734
        %v1736 = vpop.f32.mrf.mxu0
        %1737 = vmatprep.mubr.f32.mxu0 0.0
        %1738 = vmatmul.mubr.f32.gmra.mxu0 %v1357
        %v1739 = vpop.f32.mrf.mxu0
        %v1740 = vadd.f32 0.0, %v1739
        %v1741 = vpop.f32.mrf.mxu0
        %1742 = vmatprep.mubr.f32.mxu0 0.0
        %1743 = vmatmul.mubr.f32.gmra.mxu0 %v1360
        %v1744 = vpop.f32.mrf.mxu0
        %v1745 = vadd.f32 0.0, %v1744
        %v1746 = vpop.f32.mrf.mxu0
        %1747 = vmatprep.mubr.f32.mxu0 0.0
        %1748 = vmatmul.mubr.f32.gmra.mxu0 %v1363
        %v1749 = vpop.f32.mrf.mxu0
        %v1750 = vadd.f32 0.0, %v1749
        %v1751 = vpop.f32.mrf.mxu0
        %1752 = vmatprep.mubr.f32.mxu0 0.0
        %1753 = vmatmul.mubr.f32.gmra.mxu0 %v1366
        %v1754 = vpop.f32.mrf.mxu0
        %v1755 = vadd.f32 0.0, %v1754
        %v1756 = vpop.f32.mrf.mxu0
        %1757 = vmatprep.mubr.f32.mxu0 0.0
        %1758 = vmatmul.mubr.f32.gmra.mxu0 %v1369
        %v1759 = vpop.f32.mrf.mxu0
        %v1760 = vadd.f32 0.0, %v1759
        %v1761 = vpop.f32.mrf.mxu0
        %1762 = vmatprep.mubr.f32.mxu0 0.0
        %1763 = vmatmul.mubr.f32.gmra.mxu0 %v1372
        %v1764 = vpop.f32.mrf.mxu0
        %v1765 = vadd.f32 0.0, %v1764
        %v1766 = vpop.f32.mrf.mxu0
        %1767 = vmatprep.mubr.f32.mxu0 0.0
        %1768 = vmatmul.mubr.f32.gmra.mxu0 %v1375
        %v1769 = vpop.f32.mrf.mxu0
        %v1770 = vadd.f32 0.0, %v1769
        %v1771 = vpop.f32.mrf.mxu0
        %1772 = vmatprep.mubr.f32.mxu0 0.0
        %1773 = vmatmul.mubr.f32.gmra.mxu0 %v1378
        %v1774 = vpop.f32.mrf.mxu0
        %v1775 = vadd.f32 0.0, %v1774
        %v1776 = vpop.f32.mrf.mxu0
        %1777 = vmatprep.mubr.f32.mxu0 0.0
        %1778 = vmatmul.mubr.f32.gmra.mxu0 %v1381
        %v1779 = vpop.f32.mrf.mxu0
        %v1780 = vadd.f32 0.0, %v1779
        %v1781 = vpop.f32.mrf.mxu0
        %1782 = vdwg.mxu0
        %v1783 = vmul.f32 %v1528, %v1705
        %v1784 = vmul.f32 %v1529, %v1710
        %v1785 = vmul.f32 %v1530, %v1715
        %v1786 = vmul.f32 %v1531, %v1720
        %v1787 = vmul.f32 %v1532, %v1725
        %v1788 = vmul.f32 %v1533, %v1730
        %v1789 = vmul.f32 %v1534, %v1735
        %v1790 = vmul.f32 %v1535, %v1740
        %v1791 = vmul.f32 %v1536, %v1745
        %v1792 = vmul.f32 %v1537, %v1750
        %v1793 = vmul.f32 %v1538, %v1755
        %v1794 = vmul.f32 %v1539, %v1760
        %v1795 = vmul.f32 %v1540, %v1765
        %v1796 = vmul.f32 %v1541, %v1770
        %v1797 = vmul.f32 %v1542, %v1775
        %v1798 = vmul.f32 %v1543, %v1780
        %v1799 = vlaneseq
        %v1800 = vshrl.u32 %v1799, 7
        %v1801 = vsub.s32 0, %v1800
        %v1802 = vrot.slane %v711, %v1801
        %v1803 = vadd.f32 %v1783, %v1802
        %v1804 = vadd.f32 %v1784, %v1802
        %v1805 = vadd.f32 %v1785, %v1802
        %v1806 = vadd.f32 %v1786, %v1802
        %v1807 = vadd.f32 %v1787, %v1802
        %v1808 = vadd.f32 %v1788, %v1802
        %v1809 = vadd.f32 %v1789, %v1802
        %v1810 = vadd.f32 %v1790, %v1802
        %v1811 = vadd.f32 %v1791, %v1802
        %v1812 = vadd.f32 %v1792, %v1802
        %v1813 = vadd.f32 %v1793, %v1802
        %v1814 = vadd.f32 %v1794, %v1802
        %v1815 = vadd.f32 %v1795, %v1802
        %v1816 = vadd.f32 %v1796, %v1802
        %v1817 = vadd.f32 %v1797, %v1802
        %v1818 = vadd.f32 %v1798, %v1802
        %v1819 = vmax.f32 %v1803, 0.0
        %v1820 = vmax.f32 %v1804, 0.0
        %v1821 = vmax.f32 %v1805, 0.0
        %v1822 = vmax.f32 %v1806, 0.0
        %v1823 = vmax.f32 %v1807, 0.0
        %v1824 = vmax.f32 %v1808, 0.0
        %v1825 = vmax.f32 %v1809, 0.0
        %v1826 = vmax.f32 %v1810, 0.0
        %v1827 = vmax.f32 %v1811, 0.0
        %v1828 = vmax.f32 %v1812, 0.0
        %v1829 = vmax.f32 %v1813, 0.0
        %v1830 = vmax.f32 %v1814, 0.0
        %v1831 = vmax.f32 %v1815, 0.0
        %v1832 = vmax.f32 %v1816, 0.0
        %v1833 = vmax.f32 %v1817, 0.0
        %v1834 = vmax.f32 %v1818, 0.0
        %v1835 = vld [vmem:[%s3 + $0x14] sm:$0xf]
        %v1836 = vld [vmem:[%s4 + $0x3] sm:$0x1]
        %v1837 = vld [vmem:[%s4 + $0x4] sm:$0x1]
        %v1838 = vpack.c.bf16 %v1820, %v1819
        %v1839 = vpack.c.bf16 %v1822, %v1821
        %v1840 = vpack.c.bf16 %v1824, %v1823
        %v1841 = vpack.c.bf16 %v1826, %v1825
        %v1842 = vpack.c.bf16 %v1828, %v1827
        %v1843 = vpack.c.bf16 %v1830, %v1829
        %v1844 = vpack.c.bf16 %v1832, %v1831
        %v1845 = vpack.c.bf16 %v1834, %v1833
        %v1847 = vsel %vm720, %v1838, 0
        %v1850 = vsel %vm720, %v1839, 0
        %v1853 = vsel %vm720, %v1840, 0
        %v1856 = vsel %vm720, %v1841, 0
        %v1859 = vsel %vm720, %v1842, 0
        %v1862 = vsel %vm720, %v1843, 0
        %v1865 = vsel %vm720, %v1844, 0
        %v1868 = vsel %vm720, %v1845, 0
        %v1871 = vsel %vm745, %v1835, 0
        %1873 = vmatprep.subr.bf16.mxu0 0
        %1874 = vmatpush1.bf16.msra.mxu0 0
        %1875 = vmatprep.subr.bf16.mxu0 0
        %1876 = vmatpush1.bf16.msra.mxu0 0
        %1877 = vmatprep.subr.bf16.mxu0 0
        %1878 = vmatpush1.bf16.msra.mxu0 0
        %1879 = vmatprep.subr.bf16.mxu0 0
        %1880 = vmatpush1.bf16.msra.mxu0 0
        %1881 = vmatprep.subr.bf16.mxu0 0
        %1882 = vmatpush1.bf16.msra.mxu0 0
        %1883 = vmatprep.subr.bf16.mxu0 0
        %1884 = vmatpush1.bf16.msra.mxu0 0
        %1885 = vmatprep.subr.bf16.mxu0 0
        %1886 = vmatpush1.bf16.msra.mxu0 0
        %1887 = vmatprep.subr.bf16.mxu0 0
        %1888 = vmatpush1.bf16.msra.mxu0 %v1871
        %1889 = vmatprep.subr.bf16.mxu0 0
        %1890 = vmatpush2.bf16.msra.mxu0 0
        %1891 = vmatprep.subr.bf16.mxu0 0
        %1892 = vmatpush2.bf16.msra.mxu0 0
        %1893 = vmatprep.subr.bf16.mxu0 0
        %1894 = vmatpush2.bf16.msra.mxu0 0
        %1895 = vmatprep.subr.bf16.mxu0 0
        %1896 = vmatpush2.bf16.msra.mxu0 0
        %1897 = vmatprep.subr.bf16.mxu0 0
        %1898 = vmatpush2.bf16.msra.mxu0 0
        %1899 = vmatprep.subr.bf16.mxu0 0
        %1900 = vmatpush2.bf16.msra.mxu0 0
        %1901 = vmatprep.subr.bf16.mxu0 0
        %1902 = vmatpush2.bf16.msra.mxu0 0
        %1903 = vmatprep.subr.bf16.mxu0 0
        %1904 = vmatpush2.bf16.msra.mxu0 0
        %1905 = vmatprep.mubr.bf16.mxu0 0
        %1906 = vmatmul.mubr.bf16.gmra.mxu0 %v1847
        %v1907 = vpop.f32.mrf.mxu0
        %v1908 = vadd.f32 0.0, %v1907
        %v1909 = vpop.f32.mrf.mxu0
        %v1910 = vpop.f32.mrf.mxu0
        %v1911 = vadd.f32 0.0, %v1910
        %v1912 = vpop.f32.mrf.mxu0
        %1913 = vmatprep.mubr.bf16.mxu0 0
        %1914 = vmatmul.mubr.bf16.gmra.mxu0 %v1850
        %v1915 = vpop.f32.mrf.mxu0
        %v1916 = vadd.f32 0.0, %v1915
        %v1917 = vpop.f32.mrf.mxu0
        %v1918 = vpop.f32.mrf.mxu0
        %v1919 = vadd.f32 0.0, %v1918
        %v1920 = vpop.f32.mrf.mxu0
        %1921 = vmatprep.mubr.bf16.mxu0 0
        %1922 = vmatmul.mubr.bf16.gmra.mxu0 %v1853
        %v1923 = vpop.f32.mrf.mxu0
        %v1924 = vadd.f32 0.0, %v1923
        %v1925 = vpop.f32.mrf.mxu0
        %v1926 = vpop.f32.mrf.mxu0
        %v1927 = vadd.f32 0.0, %v1926
        %v1928 = vpop.f32.mrf.mxu0
        %1929 = vmatprep.mubr.bf16.mxu0 0
        %1930 = vmatmul.mubr.bf16.gmra.mxu0 %v1856
        %v1931 = vpop.f32.mrf.mxu0
        %v1932 = vadd.f32 0.0, %v1931
        %v1933 = vpop.f32.mrf.mxu0
        %v1934 = vpop.f32.mrf.mxu0
        %v1935 = vadd.f32 0.0, %v1934
        %v1936 = vpop.f32.mrf.mxu0
        %1937 = vmatprep.mubr.bf16.mxu0 0
        %1938 = vmatmul.mubr.bf16.gmra.mxu0 %v1859
        %v1939 = vpop.f32.mrf.mxu0
        %v1940 = vadd.f32 0.0, %v1939
        %v1941 = vpop.f32.mrf.mxu0
        %v1942 = vpop.f32.mrf.mxu0
        %v1943 = vadd.f32 0.0, %v1942
        %v1944 = vpop.f32.mrf.mxu0
        %1945 = vmatprep.mubr.bf16.mxu0 0
        %1946 = vmatmul.mubr.bf16.gmra.mxu0 %v1862
        %v1947 = vpop.f32.mrf.mxu0
        %v1948 = vadd.f32 0.0, %v1947
        %v1949 = vpop.f32.mrf.mxu0
        %v1950 = vpop.f32.mrf.mxu0
        %v1951 = vadd.f32 0.0, %v1950
        %v1952 = vpop.f32.mrf.mxu0
        %1953 = vmatprep.mubr.bf16.mxu0 0
        %1954 = vmatmul.mubr.bf16.gmra.mxu0 %v1865
        %v1955 = vpop.f32.mrf.mxu0
        %v1956 = vadd.f32 0.0, %v1955
        %v1957 = vpop.f32.mrf.mxu0
        %v1958 = vpop.f32.mrf.mxu0
        %v1959 = vadd.f32 0.0, %v1958
        %v1960 = vpop.f32.mrf.mxu0
        %1961 = vmatprep.mubr.bf16.mxu0 0
        %1962 = vmatmul.mubr.bf16.gmra.mxu0 %v1868
        %v1963 = vpop.f32.mrf.mxu0
        %v1964 = vadd.f32 0.0, %v1963
        %v1965 = vpop.f32.mrf.mxu0
        %v1966 = vpop.f32.mrf.mxu0
        %v1967 = vadd.f32 0.0, %v1966
        %v1968 = vpop.f32.mrf.mxu0
        %1969 = vdwg.mxu0
        %v1970 = vpack.c.bf16 %v1911, %v1908
        %v1971 = vpack.c.bf16 %v1919, %v1916
        %v1972 = vpack.c.bf16 %v1927, %v1924
        %v1973 = vpack.c.bf16 %v1935, %v1932
        %v1974 = vpack.c.bf16 %v1943, %v1940
        %v1975 = vpack.c.bf16 %v1951, %v1948
        %v1976 = vpack.c.bf16 %v1959, %v1956
        %v1977 = vpack.c.bf16 %v1967, %v1964
        %1986 = vrot.lane.b32.xlu0 %v1970, 112
        %v1987 = vpop.permute.xlu0 %1986
        %1988 = vrot.lane.b32.xlu0 %v1971, 112
        %v1989 = vpop.permute.xlu0 %1988
        %1990 = vrot.lane.b32.xlu0 %v1972, 112
        %v1991 = vpop.permute.xlu0 %1990
        %1992 = vrot.lane.b32.xlu0 %v1973, 112
        %v1993 = vpop.permute.xlu0 %1992
        %1994 = vrot.lane.b32.xlu0 %v1974, 112
        %v1995 = vpop.permute.xlu0 %1994
        %1996 = vrot.lane.b32.xlu0 %v1975, 112
        %v1997 = vpop.permute.xlu0 %1996
        %1998 = vrot.lane.b32.xlu0 %v1976, 112
        %v1999 = vpop.permute.xlu0 %1998
        %2000 = vrot.lane.b32.xlu0 %v1977, 112
        %v2001 = vpop.permute.xlu0 %2000
        %2010 = vmatprep.subr.bf16.mxu0 0
        %2011 = vmatpush1.bf16.msra.mxu0 %v2001
        %2012 = vmatprep.subr.bf16.mxu0 0
        %2013 = vmatpush1.bf16.msra.mxu0 %v1999
        %2014 = vmatprep.subr.bf16.mxu0 0
        %2015 = vmatpush1.bf16.msra.mxu0 %v1997
        %2016 = vmatprep.subr.bf16.mxu0 0
        %2017 = vmatpush1.bf16.msra.mxu0 %v1995
        %2018 = vmatprep.subr.bf16.mxu0 0
        %2019 = vmatpush1.bf16.msra.mxu0 %v1993
        %2020 = vmatprep.subr.bf16.mxu0 0
        %2021 = vmatpush1.bf16.msra.mxu0 %v1991
        %2022 = vmatprep.subr.bf16.mxu0 0
        %2023 = vmatpush1.bf16.msra.mxu0 %v1989
        %2024 = vmatprep.subr.bf16.mxu0 0
        %2025 = vmatpush1.bf16.msra.mxu0 %v1987
        %2026 = vmatprep.subr.bf16.mxu0 0
        %2027 = vmatpush2.bf16.msra.mxu0 0
        %2028 = vmatprep.subr.bf16.mxu0 0
        %2029 = vmatpush2.bf16.msra.mxu0 0
        %2030 = vmatprep.subr.bf16.mxu0 0
        %2031 = vmatpush2.bf16.msra.mxu0 0
        %2032 = vmatprep.subr.bf16.mxu0 0
        %2033 = vmatpush2.bf16.msra.mxu0 0
        %2034 = vmatprep.subr.bf16.mxu0 0
        %2035 = vmatpush2.bf16.msra.mxu0 0
        %2036 = vmatprep.subr.bf16.mxu0 0
        %2037 = vmatpush2.bf16.msra.mxu0 0
        %2038 = vmatprep.subr.bf16.mxu0 0
        %2039 = vmatpush2.bf16.msra.mxu0 0
        %2040 = vmatprep.subr.bf16.mxu0 0
        %2041 = vmatpush2.bf16.msra.mxu0 0
        %2042 = vmatprep.mubr.bf16.mxu0 0
        %2043 = vmatmul.mubr.bf16.gmra.mxu0 %v886
        %v2044 = vpop.f32.mrf.mxu0
        %v2045 = vadd.f32 0.0, %v2044
        %v2046 = vpop.f32.mrf.mxu0
        %v2047 = vpop.f32.mrf.mxu0
        %v2048 = vadd.f32 0.0, %v2047
        %v2049 = vpop.f32.mrf.mxu0
        %2050 = vmatprep.mubr.bf16.mxu0 0
        %2051 = vmatmul.mubr.bf16.gmra.mxu0 %v887
        %v2052 = vpop.f32.mrf.mxu0
        %v2053 = vadd.f32 0.0, %v2052
        %v2054 = vpop.f32.mrf.mxu0
        %v2055 = vpop.f32.mrf.mxu0
        %v2056 = vadd.f32 0.0, %v2055
        %v2057 = vpop.f32.mrf.mxu0
        %2058 = vmatprep.mubr.bf16.mxu0 0
        %2059 = vmatmul.mubr.bf16.gmra.mxu0 %v888
        %v2060 = vpop.f32.mrf.mxu0
        %v2061 = vadd.f32 0.0, %v2060
        %v2062 = vpop.f32.mrf.mxu0
        %v2063 = vpop.f32.mrf.mxu0
        %v2064 = vadd.f32 0.0, %v2063
        %v2065 = vpop.f32.mrf.mxu0
        %2066 = vmatprep.mubr.bf16.mxu0 0
        %2067 = vmatmul.mubr.bf16.gmra.mxu0 %v889
        %v2068 = vpop.f32.mrf.mxu0
        %v2069 = vadd.f32 0.0, %v2068
        %v2070 = vpop.f32.mrf.mxu0
        %v2071 = vpop.f32.mrf.mxu0
        %v2072 = vadd.f32 0.0, %v2071
        %v2073 = vpop.f32.mrf.mxu0
        %2074 = vmatprep.mubr.bf16.mxu0 0
        %2075 = vmatmul.mubr.bf16.gmra.mxu0 %v890
        %v2076 = vpop.f32.mrf.mxu0
        %v2077 = vadd.f32 0.0, %v2076
        %v2078 = vpop.f32.mrf.mxu0
        %v2079 = vpop.f32.mrf.mxu0
        %v2080 = vadd.f32 0.0, %v2079
        %v2081 = vpop.f32.mrf.mxu0
        %2082 = vmatprep.mubr.bf16.mxu0 0
        %2083 = vmatmul.mubr.bf16.gmra.mxu0 %v891
        %v2084 = vpop.f32.mrf.mxu0
        %v2085 = vadd.f32 0.0, %v2084
        %v2086 = vpop.f32.mrf.mxu0
        %v2087 = vpop.f32.mrf.mxu0
        %v2088 = vadd.f32 0.0, %v2087
        %v2089 = vpop.f32.mrf.mxu0
        %2090 = vmatprep.mubr.bf16.mxu0 0
        %2091 = vmatmul.mubr.bf16.gmra.mxu0 %v892
        %v2092 = vpop.f32.mrf.mxu0
        %v2093 = vadd.f32 0.0, %v2092
        %v2094 = vpop.f32.mrf.mxu0
        %v2095 = vpop.f32.mrf.mxu0
        %v2096 = vadd.f32 0.0, %v2095
        %v2097 = vpop.f32.mrf.mxu0
        %2098 = vmatprep.mubr.bf16.mxu0 0
        %2099 = vmatmul.mubr.bf16.gmra.mxu0 %v893
        %v2100 = vpop.f32.mrf.mxu0
        %v2101 = vadd.f32 0.0, %v2100
        %v2102 = vpop.f32.mrf.mxu0
        %v2103 = vpop.f32.mrf.mxu0
        %v2104 = vadd.f32 0.0, %v2103
        %v2105 = vpop.f32.mrf.mxu0
        %2106 = vdwg.mxu0
        %2123 = vrot.lane.b32.xlu0 %v2045, 8
        %v2124 = vpop.permute.xlu0 %2123
        %2125 = vrot.lane.b32.xlu0 %v2048, 8
        %v2126 = vpop.permute.xlu0 %2125
        %2127 = vrot.lane.b32.xlu0 %v2053, 8
        %v2128 = vpop.permute.xlu0 %2127
        %2129 = vrot.lane.b32.xlu0 %v2056, 8
        %v2130 = vpop.permute.xlu0 %2129
        %2131 = vrot.lane.b32.xlu0 %v2061, 8
        %v2132 = vpop.permute.xlu0 %2131
        %2133 = vrot.lane.b32.xlu0 %v2064, 8
        %v2134 = vpop.permute.xlu0 %2133
        %2135 = vrot.lane.b32.xlu0 %v2069, 8
        %v2136 = vpop.permute.xlu0 %2135
        %2137 = vrot.lane.b32.xlu0 %v2072, 8
        %v2138 = vpop.permute.xlu0 %2137
        %2139 = vrot.lane.b32.xlu0 %v2077, 8
        %v2140 = vpop.permute.xlu0 %2139
        %2141 = vrot.lane.b32.xlu0 %v2080, 8
        %v2142 = vpop.permute.xlu0 %2141
        %2143 = vrot.lane.b32.xlu0 %v2085, 8
        %v2144 = vpop.permute.xlu0 %2143
        %2145 = vrot.lane.b32.xlu0 %v2088, 8
        %v2146 = vpop.permute.xlu0 %2145
        %2147 = vrot.lane.b32.xlu0 %v2093, 8
        %v2148 = vpop.permute.xlu0 %2147
        %2149 = vrot.lane.b32.xlu0 %v2096, 8
        %v2150 = vpop.permute.xlu0 %2149
        %2151 = vrot.lane.b32.xlu0 %v2101, 8
        %v2152 = vpop.permute.xlu0 %2151
        %2153 = vrot.lane.b32.xlu0 %v2104, 8
        %v2154 = vpop.permute.xlu0 %2153
        %v2171 = vadd.f32 %v1908, %v2124
        %v2172 = vadd.f32 %v1911, %v2126
        %v2173 = vadd.f32 %v1916, %v2128
        %v2174 = vadd.f32 %v1919, %v2130
        %v2175 = vadd.f32 %v1924, %v2132
        %v2176 = vadd.f32 %v1927, %v2134
        %v2177 = vadd.f32 %v1932, %v2136
        %v2178 = vadd.f32 %v1935, %v2138
        %v2179 = vadd.f32 %v1940, %v2140
        %v2180 = vadd.f32 %v1943, %v2142
        %v2181 = vadd.f32 %v1948, %v2144
        %v2182 = vadd.f32 %v1951, %v2146
        %v2183 = vadd.f32 %v1956, %v2148
        %v2184 = vadd.f32 %v1959, %v2150
        %v2185 = vadd.f32 %v1964, %v2152
        %v2186 = vadd.f32 %v1967, %v2154
        %v2187 = vpack.c.bf16 %v2172, %v2171
        %v2188 = vpack.c.bf16 %v2174, %v2173
        %v2189 = vpack.c.bf16 %v2176, %v2175
        %v2190 = vpack.c.bf16 %v2178, %v2177
        %v2191 = vpack.c.bf16 %v2180, %v2179
        %v2192 = vpack.c.bf16 %v2182, %v2181
        %v2193 = vpack.c.bf16 %v2184, %v2183
        %v2194 = vpack.c.bf16 %v2186, %v2185
        %2203 = vrot.lane.b32.xlu0 %v2187, 120
        %v2204 = vpop.permute.xlu0 %2203
        %2205 = vrot.lane.b32.xlu0 %v2188, 120
        %v2206 = vpop.permute.xlu0 %2205
        %2207 = vrot.lane.b32.xlu0 %v2189, 120
        %v2208 = vpop.permute.xlu0 %2207
        %2209 = vrot.lane.b32.xlu0 %v2190, 120
        %v2210 = vpop.permute.xlu0 %2209
        %2211 = vrot.lane.b32.xlu0 %v2191, 120
        %v2212 = vpop.permute.xlu0 %2211
        %2213 = vrot.lane.b32.xlu0 %v2192, 120
        %v2214 = vpop.permute.xlu0 %2213
        %2215 = vrot.lane.b32.xlu0 %v2193, 120
        %v2216 = vpop.permute.xlu0 %2215
        %2217 = vrot.lane.b32.xlu0 %v2194, 120
        %v2218 = vpop.permute.xlu0 %2217
        %2227 = vmatprep.subr.bf16.mxu0 0
        %2228 = vmatpush1.bf16.msra.mxu0 %v2218
        %2229 = vmatprep.subr.bf16.mxu0 0
        %2230 = vmatpush1.bf16.msra.mxu0 %v2216
        %2231 = vmatprep.subr.bf16.mxu0 0
        %2232 = vmatpush1.bf16.msra.mxu0 %v2214
        %2233 = vmatprep.subr.bf16.mxu0 0
        %2234 = vmatpush1.bf16.msra.mxu0 %v2212
        %2235 = vmatprep.subr.bf16.mxu0 0
        %2236 = vmatpush1.bf16.msra.mxu0 %v2210
        %2237 = vmatprep.subr.bf16.mxu0 0
        %2238 = vmatpush1.bf16.msra.mxu0 %v2208
        %2239 = vmatprep.subr.bf16.mxu0 0
        %2240 = vmatpush1.bf16.msra.mxu0 %v2206
        %2241 = vmatprep.subr.bf16.mxu0 0
        %2242 = vmatpush1.bf16.msra.mxu0 %v2204
        %2243 = vmatprep.subr.bf16.mxu0 0
        %2244 = vmatpush2.bf16.msra.mxu0 0
        %2245 = vmatprep.subr.bf16.mxu0 0
        %2246 = vmatpush2.bf16.msra.mxu0 0
        %2247 = vmatprep.subr.bf16.mxu0 0
        %2248 = vmatpush2.bf16.msra.mxu0 0
        %2249 = vmatprep.subr.bf16.mxu0 0
        %2250 = vmatpush2.bf16.msra.mxu0 0
        %2251 = vmatprep.subr.bf16.mxu0 0
        %2252 = vmatpush2.bf16.msra.mxu0 0
        %2253 = vmatprep.subr.bf16.mxu0 0
        %2254 = vmatpush2.bf16.msra.mxu0 0
        %2255 = vmatprep.subr.bf16.mxu0 0
        %2256 = vmatpush2.bf16.msra.mxu0 0
        %2257 = vmatprep.subr.bf16.mxu0 0
        %2258 = vmatpush2.bf16.msra.mxu0 0
        %2259 = vmatprep.mubr.bf16.mxu0 0
        %2260 = vmatmul.mubr.bf16.gmra.mxu0 %v886
        %v2261 = vpop.f32.mrf.mxu0
        %v2262 = vadd.f32 0.0, %v2261
        %v2263 = vpop.f32.mrf.mxu0
        %v2264 = vpop.f32.mrf.mxu0
        %v2265 = vadd.f32 0.0, %v2264
        %v2266 = vpop.f32.mrf.mxu0
        %2267 = vmatprep.mubr.bf16.mxu0 0
        %2268 = vmatmul.mubr.bf16.gmra.mxu0 %v887
        %v2269 = vpop.f32.mrf.mxu0
        %v2270 = vadd.f32 0.0, %v2269
        %v2271 = vpop.f32.mrf.mxu0
        %v2272 = vpop.f32.mrf.mxu0
        %v2273 = vadd.f32 0.0, %v2272
        %v2274 = vpop.f32.mrf.mxu0
        %2275 = vmatprep.mubr.bf16.mxu0 0
        %2276 = vmatmul.mubr.bf16.gmra.mxu0 %v888
        %v2277 = vpop.f32.mrf.mxu0
        %v2278 = vadd.f32 0.0, %v2277
        %v2279 = vpop.f32.mrf.mxu0
        %v2280 = vpop.f32.mrf.mxu0
        %v2281 = vadd.f32 0.0, %v2280
        %v2282 = vpop.f32.mrf.mxu0
        %2283 = vmatprep.mubr.bf16.mxu0 0
        %2284 = vmatmul.mubr.bf16.gmra.mxu0 %v889
        %v2285 = vpop.f32.mrf.mxu0
        %v2286 = vadd.f32 0.0, %v2285
        %v2287 = vpop.f32.mrf.mxu0
        %v2288 = vpop.f32.mrf.mxu0
        %v2289 = vadd.f32 0.0, %v2288
        %v2290 = vpop.f32.mrf.mxu0
        %2291 = vmatprep.mubr.bf16.mxu0 0
        %2292 = vmatmul.mubr.bf16.gmra.mxu0 %v890
        %v2293 = vpop.f32.mrf.mxu0
        %v2294 = vadd.f32 0.0, %v2293
        %v2295 = vpop.f32.mrf.mxu0
        %v2296 = vpop.f32.mrf.mxu0
        %v2297 = vadd.f32 0.0, %v2296
        %v2298 = vpop.f32.mrf.mxu0
        %2299 = vmatprep.mubr.bf16.mxu0 0
        %2300 = vmatmul.mubr.bf16.gmra.mxu0 %v891
        %v2301 = vpop.f32.mrf.mxu0
        %v2302 = vadd.f32 0.0, %v2301
        %v2303 = vpop.f32.mrf.mxu0
        %v2304 = vpop.f32.mrf.mxu0
        %v2305 = vadd.f32 0.0, %v2304
        %v2306 = vpop.f32.mrf.mxu0
        %2307 = vmatprep.mubr.bf16.mxu0 0
        %2308 = vmatmul.mubr.bf16.gmra.mxu0 %v892
        %v2309 = vpop.f32.mrf.mxu0
        %v2310 = vadd.f32 0.0, %v2309
        %v2311 = vpop.f32.mrf.mxu0
        %v2312 = vpop.f32.mrf.mxu0
        %v2313 = vadd.f32 0.0, %v2312
        %v2314 = vpop.f32.mrf.mxu0
        %2315 = vmatprep.mubr.bf16.mxu0 0
        %2316 = vmatmul.mubr.bf16.gmra.mxu0 %v893
        %v2317 = vpop.f32.mrf.mxu0
        %v2318 = vadd.f32 0.0, %v2317
        %v2319 = vpop.f32.mrf.mxu0
        %v2320 = vpop.f32.mrf.mxu0
        %v2321 = vadd.f32 0.0, %v2320
        %v2322 = vpop.f32.mrf.mxu0
        %2323 = vdwg.mxu0
        %v2324 = vadd.f32 %v1908, %v2262
        %v2325 = vadd.f32 %v1911, %v2265
        %v2326 = vadd.f32 %v1916, %v2270
        %v2327 = vadd.f32 %v1919, %v2273
        %v2328 = vadd.f32 %v1924, %v2278
        %v2329 = vadd.f32 %v1927, %v2281
        %v2330 = vadd.f32 %v1932, %v2286
        %v2331 = vadd.f32 %v1935, %v2289
        %v2332 = vadd.f32 %v1940, %v2294
        %v2333 = vadd.f32 %v1943, %v2297
        %v2334 = vadd.f32 %v1948, %v2302
        %v2335 = vadd.f32 %v1951, %v2305
        %v2336 = vadd.f32 %v1956, %v2310
        %v2337 = vadd.f32 %v1959, %v2313
        %v2338 = vadd.f32 %v1964, %v2318
        %v2339 = vadd.f32 %v1967, %v2321
        %2340 = vmatprep.subr.mxu0 0.0
        %2341 = vmatpush1.msra.mxu0 %v2339
        %2342 = vmatprep.subr.mxu0 0.0
        %2343 = vmatpush1.msra.mxu0 %v2338
        %2344 = vmatprep.subr.mxu0 0.0
        %2345 = vmatpush1.msra.mxu0 %v2337
        %2346 = vmatprep.subr.mxu0 0.0
        %2347 = vmatpush1.msra.mxu0 %v2336
        %2348 = vmatprep.subr.mxu0 0.0
        %2349 = vmatpush1.msra.mxu0 %v2335
        %2350 = vmatprep.subr.mxu0 0.0
        %2351 = vmatpush1.msra.mxu0 %v2334
        %2352 = vmatprep.subr.mxu0 0.0
        %2353 = vmatpush1.msra.mxu0 %v2333
        %2354 = vmatprep.subr.mxu0 0.0
        %2355 = vmatpush1.msra.mxu0 %v2332
        %2356 = vmatprep.subr.mxu0 0.0
        %2357 = vmatpush1.msra.mxu0 %v2331
        %2358 = vmatprep.subr.mxu0 0.0
        %2359 = vmatpush1.msra.mxu0 %v2330
        %2360 = vmatprep.subr.mxu0 0.0
        %2361 = vmatpush1.msra.mxu0 %v2329
        %2362 = vmatprep.subr.mxu0 0.0
        %2363 = vmatpush1.msra.mxu0 %v2328
        %2364 = vmatprep.subr.mxu0 0.0
        %2365 = vmatpush1.msra.mxu0 %v2327
        %2366 = vmatprep.subr.mxu0 0.0
        %2367 = vmatpush1.msra.mxu0 %v2326
        %2368 = vmatprep.subr.mxu0 0.0
        %2369 = vmatpush1.msra.mxu0 %v2325
        %2370 = vmatprep.subr.mxu0 0.0
        %2371 = vmatpush1.msra.mxu0 %v2324
        %2372 = vmatprep.subr.mxu0 0.0
        %2373 = vmatpush2.msra.mxu0 0.0
        %2374 = vmatprep.subr.mxu0 0.0
        %2375 = vmatpush2.msra.mxu0 0.0
        %2376 = vmatprep.subr.mxu0 0.0
        %2377 = vmatpush2.msra.mxu0 0.0
        %2378 = vmatprep.subr.mxu0 0.0
        %2379 = vmatpush2.msra.mxu0 0.0
        %2380 = vmatprep.subr.mxu0 0.0
        %2381 = vmatpush2.msra.mxu0 0.0
        %2382 = vmatprep.subr.mxu0 0.0
        %2383 = vmatpush2.msra.mxu0 0.0
        %2384 = vmatprep.subr.mxu0 0.0
        %2385 = vmatpush2.msra.mxu0 0.0
        %2386 = vmatprep.subr.mxu0 0.0
        %2387 = vmatpush2.msra.mxu0 0.0
        %2388 = vmatprep.subr.mxu0 0.0
        %2389 = vmatpush2.msra.mxu0 0.0
        %2390 = vmatprep.subr.mxu0 0.0
        %2391 = vmatpush2.msra.mxu0 0.0
        %2392 = vmatprep.subr.mxu0 0.0
        %2393 = vmatpush2.msra.mxu0 0.0
        %2394 = vmatprep.subr.mxu0 0.0
        %2395 = vmatpush2.msra.mxu0 0.0
        %2396 = vmatprep.subr.mxu0 0.0
        %2397 = vmatpush2.msra.mxu0 0.0
        %2398 = vmatprep.subr.mxu0 0.0
        %2399 = vmatpush2.msra.mxu0 0.0
        %2400 = vmatprep.subr.mxu0 0.0
        %2401 = vmatpush2.msra.mxu0 0.0
        %2402 = vmatprep.subr.mxu0 0.0
        %2403 = vmatpush2.msra.mxu0 0.0
        %2404 = vmatprep.mubr.f32.mxu0 0.0
        %2405 = vmatmul.mubr.f32.gmra.mxu0 %v331
        %v2406 = vpop.f32.mrf.mxu0
        %v2407 = vadd.f32 0.0, %v2406
        %v2408 = vpop.f32.mrf.mxu0
        %2409 = vdwg.mxu0
        %v2410 = vmul.f32 %v2407, 0.0625
        %2411 = vmatprep.subr.mxu0 0.0
        %2412 = vmatpush1.msra.mxu0 0.0
        %2413 = vmatprep.subr.mxu0 0.0
        %2414 = vmatpush1.msra.mxu0 0.0
        %2415 = vmatprep.subr.mxu0 0.0
        %2416 = vmatpush1.msra.mxu0 0.0
        %2417 = vmatprep.subr.mxu0 0.0
        %2418 = vmatpush1.msra.mxu0 0.0
        %2419 = vmatprep.subr.mxu0 0.0
        %2420 = vmatpush1.msra.mxu0 0.0
        %2421 = vmatprep.subr.mxu0 0.0
        %2422 = vmatpush1.msra.mxu0 0.0
        %2423 = vmatprep.subr.mxu0 0.0
        %2424 = vmatpush1.msra.mxu0 0.0
        %2425 = vmatprep.subr.mxu0 0.0
        %2426 = vmatpush1.msra.mxu0 0.0
        %2427 = vmatprep.subr.mxu0 0.0
        %2428 = vmatpush1.msra.mxu0 0.0
        %2429 = vmatprep.subr.mxu0 0.0
        %2430 = vmatpush1.msra.mxu0 0.0
        %2431 = vmatprep.subr.mxu0 0.0
        %2432 = vmatpush1.msra.mxu0 0.0
        %2433 = vmatprep.subr.mxu0 0.0
        %2434 = vmatpush1.msra.mxu0 0.0
        %2435 = vmatprep.subr.mxu0 0.0
        %2436 = vmatpush1.msra.mxu0 0.0
        %2437 = vmatprep.subr.mxu0 0.0
        %2438 = vmatpush1.msra.mxu0 0.0
        %2439 = vmatprep.subr.mxu0 0.0
        %2440 = vmatpush1.msra.mxu0 0.0
        %2441 = vmatprep.subr.mxu0 0.0
        %2442 = vmatpush1.msra.mxu0 %v2410
        %2443 = vmatprep.subr.mxu0 0.0
        %2444 = vmatpush2.msra.mxu0 0.0
        %2445 = vmatprep.subr.mxu0 0.0
        %2446 = vmatpush2.msra.mxu0 0.0
        %2447 = vmatprep.subr.mxu0 0.0
        %2448 = vmatpush2.msra.mxu0 0.0
        %2449 = vmatprep.subr.mxu0 0.0
        %2450 = vmatpush2.msra.mxu0 0.0
        %2451 = vmatprep.subr.mxu0 0.0
        %2452 = vmatpush2.msra.mxu0 0.0
        %2453 = vmatprep.subr.mxu0 0.0
        %2454 = vmatpush2.msra.mxu0 0.0
        %2455 = vmatprep.subr.mxu0 0.0
        %2456 = vmatpush2.msra.mxu0 0.0
        %2457 = vmatprep.subr.mxu0 0.0
        %2458 = vmatpush2.msra.mxu0 0.0
        %2459 = vmatprep.subr.mxu0 0.0
        %2460 = vmatpush2.msra.mxu0 0.0
        %2461 = vmatprep.subr.mxu0 0.0
        %2462 = vmatpush2.msra.mxu0 0.0
        %2463 = vmatprep.subr.mxu0 0.0
        %2464 = vmatpush2.msra.mxu0 0.0
        %2465 = vmatprep.subr.mxu0 0.0
        %2466 = vmatpush2.msra.mxu0 0.0
        %2467 = vmatprep.subr.mxu0 0.0
        %2468 = vmatpush2.msra.mxu0 0.0
        %2469 = vmatprep.subr.mxu0 0.0
        %2470 = vmatpush2.msra.mxu0 0.0
        %2471 = vmatprep.subr.mxu0 0.0
        %2472 = vmatpush2.msra.mxu0 0.0
        %2473 = vmatprep.subr.mxu0 0.0
        %2474 = vmatpush2.msra.mxu0 0.0
        %2475 = vmatprep.mubr.f32.mxu0 0.0
        %2476 = vmatmul.mubr.f32.gmra.mxu0 %v1336
        %v2477 = vpop.f32.mrf.mxu0
        %v2478 = vadd.f32 0.0, %v2477
        %v2479 = vpop.f32.mrf.mxu0
        %2480 = vmatprep.mubr.f32.mxu0 0.0
        %2481 = vmatmul.mubr.f32.gmra.mxu0 %v1339
        %v2482 = vpop.f32.mrf.mxu0
        %v2483 = vadd.f32 0.0, %v2482
        %v2484 = vpop.f32.mrf.mxu0
        %2485 = vmatprep.mubr.f32.mxu0 0.0
        %2486 = vmatmul.mubr.f32.gmra.mxu0 %v1342
        %v2487 = vpop.f32.mrf.mxu0
        %v2488 = vadd.f32 0.0, %v2487
        %v2489 = vpop.f32.mrf.mxu0
        %2490 = vmatprep.mubr.f32.mxu0 0.0
        %2491 = vmatmul.mubr.f32.gmra.mxu0 %v1345
        %v2492 = vpop.f32.mrf.mxu0
        %v2493 = vadd.f32 0.0, %v2492
        %v2494 = vpop.f32.mrf.mxu0
        %2495 = vmatprep.mubr.f32.mxu0 0.0
        %2496 = vmatmul.mubr.f32.gmra.mxu0 %v1348
        %v2497 = vpop.f32.mrf.mxu0
        %v2498 = vadd.f32 0.0, %v2497
        %v2499 = vpop.f32.mrf.mxu0
        %2500 = vmatprep.mubr.f32.mxu0 0.0
        %2501 = vmatmul.mubr.f32.gmra.mxu0 %v1351
        %v2502 = vpop.f32.mrf.mxu0
        %v2503 = vadd.f32 0.0, %v2502
        %v2504 = vpop.f32.mrf.mxu0
        %2505 = vmatprep.mubr.f32.mxu0 0.0
        %2506 = vmatmul.mubr.f32.gmra.mxu0 %v1354
        %v2507 = vpop.f32.mrf.mxu0
        %v2508 = vadd.f32 0.0, %v2507
        %v2509 = vpop.f32.mrf.mxu0
        %2510 = vmatprep.mubr.f32.mxu0 0.0
        %2511 = vmatmul.mubr.f32.gmra.mxu0 %v1357
        %v2512 = vpop.f32.mrf.mxu0
        %v2513 = vadd.f32 0.0, %v2512
        %v2514 = vpop.f32.mrf.mxu0
        %2515 = vmatprep.mubr.f32.mxu0 0.0
        %2516 = vmatmul.mubr.f32.gmra.mxu0 %v1360
        %v2517 = vpop.f32.mrf.mxu0
        %v2518 = vadd.f32 0.0, %v2517
        %v2519 = vpop.f32.mrf.mxu0
        %2520 = vmatprep.mubr.f32.mxu0 0.0
        %2521 = vmatmul.mubr.f32.gmra.mxu0 %v1363
        %v2522 = vpop.f32.mrf.mxu0
        %v2523 = vadd.f32 0.0, %v2522
        %v2524 = vpop.f32.mrf.mxu0
        %2525 = vmatprep.mubr.f32.mxu0 0.0
        %2526 = vmatmul.mubr.f32.gmra.mxu0 %v1366
        %v2527 = vpop.f32.mrf.mxu0
        %v2528 = vadd.f32 0.0, %v2527
        %v2529 = vpop.f32.mrf.mxu0
        %2530 = vmatprep.mubr.f32.mxu0 0.0
        %2531 = vmatmul.mubr.f32.gmra.mxu0 %v1369
        %v2532 = vpop.f32.mrf.mxu0
        %v2533 = vadd.f32 0.0, %v2532
        %v2534 = vpop.f32.mrf.mxu0
        %2535 = vmatprep.mubr.f32.mxu0 0.0
        %2536 = vmatmul.mubr.f32.gmra.mxu0 %v1372
        %v2537 = vpop.f32.mrf.mxu0
        %v2538 = vadd.f32 0.0, %v2537
        %v2539 = vpop.f32.mrf.mxu0
        %2540 = vmatprep.mubr.f32.mxu0 0.0
        %2541 = vmatmul.mubr.f32.gmra.mxu0 %v1375
        %v2542 = vpop.f32.mrf.mxu0
        %v2543 = vadd.f32 0.0, %v2542
        %v2544 = vpop.f32.mrf.mxu0
        %2545 = vmatprep.mubr.f32.mxu0 0.0
        %2546 = vmatmul.mubr.f32.gmra.mxu0 %v1378
        %v2547 = vpop.f32.mrf.mxu0
        %v2548 = vadd.f32 0.0, %v2547
        %v2549 = vpop.f32.mrf.mxu0
        %2550 = vmatprep.mubr.f32.mxu0 0.0
        %2551 = vmatmul.mubr.f32.gmra.mxu0 %v1381
        %v2552 = vpop.f32.mrf.mxu0
        %v2553 = vadd.f32 0.0, %v2552
        %v2554 = vpop.f32.mrf.mxu0
        %2555 = vdwg.mxu0
        %v2556 = vsub.f32 %v2324, %v2478
        %v2557 = vsub.f32 %v2325, %v2483
        %v2558 = vsub.f32 %v2326, %v2488
        %v2559 = vsub.f32 %v2327, %v2493
        %v2560 = vsub.f32 %v2328, %v2498
        %v2561 = vsub.f32 %v2329, %v2503
        %v2562 = vsub.f32 %v2330, %v2508
        %v2563 = vsub.f32 %v2331, %v2513
        %v2564 = vsub.f32 %v2332, %v2518
        %v2565 = vsub.f32 %v2333, %v2523
        %v2566 = vsub.f32 %v2334, %v2528
        %v2567 = vsub.f32 %v2335, %v2533
        %v2568 = vsub.f32 %v2336, %v2538
        %v2569 = vsub.f32 %v2337, %v2543
        %v2570 = vsub.f32 %v2338, %v2548
        %v2571 = vsub.f32 %v2339, %v2553
        %v2572 = vmul.f32 %v2556, %v2556
        %v2573 = vmul.f32 %v2557, %v2557
        %v2574 = vmul.f32 %v2558, %v2558
        %v2575 = vmul.f32 %v2559, %v2559
        %v2576 = vmul.f32 %v2560, %v2560
        %v2577 = vmul.f32 %v2561, %v2561
        %v2578 = vmul.f32 %v2562, %v2562
        %v2579 = vmul.f32 %v2563, %v2563
        %v2580 = vmul.f32 %v2564, %v2564
        %v2581 = vmul.f32 %v2565, %v2565
        %v2582 = vmul.f32 %v2566, %v2566
        %v2583 = vmul.f32 %v2567, %v2567
        %v2584 = vmul.f32 %v2568, %v2568
        %v2585 = vmul.f32 %v2569, %v2569
        %v2586 = vmul.f32 %v2570, %v2570
        %v2587 = vmul.f32 %v2571, %v2571
        %2588 = vmatprep.subr.mxu0 0.0
        %2589 = vmatpush1.msra.mxu0 %v2587
        %2590 = vmatprep.subr.mxu0 0.0
        %2591 = vmatpush1.msra.mxu0 %v2586
        %2592 = vmatprep.subr.mxu0 0.0
        %2593 = vmatpush1.msra.mxu0 %v2585
        %2594 = vmatprep.subr.mxu0 0.0
        %2595 = vmatpush1.msra.mxu0 %v2584
        %2596 = vmatprep.subr.mxu0 0.0
        %2597 = vmatpush1.msra.mxu0 %v2583
        %2598 = vmatprep.subr.mxu0 0.0
        %2599 = vmatpush1.msra.mxu0 %v2582
        %2600 = vmatprep.subr.mxu0 0.0
        %2601 = vmatpush1.msra.mxu0 %v2581
        %2602 = vmatprep.subr.mxu0 0.0
        %2603 = vmatpush1.msra.mxu0 %v2580
        %2604 = vmatprep.subr.mxu0 0.0
        %2605 = vmatpush1.msra.mxu0 %v2579
        %2606 = vmatprep.subr.mxu0 0.0
        %2607 = vmatpush1.msra.mxu0 %v2578
        %2608 = vmatprep.subr.mxu0 0.0
        %2609 = vmatpush1.msra.mxu0 %v2577
        %2610 = vmatprep.subr.mxu0 0.0
        %2611 = vmatpush1.msra.mxu0 %v2576
        %2612 = vmatprep.subr.mxu0 0.0
        %2613 = vmatpush1.msra.mxu0 %v2575
        %2614 = vmatprep.subr.mxu0 0.0
        %2615 = vmatpush1.msra.mxu0 %v2574
        %2616 = vmatprep.subr.mxu0 0.0
        %2617 = vmatpush1.msra.mxu0 %v2573
        %2618 = vmatprep.subr.mxu0 0.0
        %2619 = vmatpush1.msra.mxu0 %v2572
        %2620 = vmatprep.subr.mxu0 0.0
        %2621 = vmatpush2.msra.mxu0 0.0
        %2622 = vmatprep.subr.mxu0 0.0
        %2623 = vmatpush2.msra.mxu0 0.0
        %2624 = vmatprep.subr.mxu0 0.0
        %2625 = vmatpush2.msra.mxu0 0.0
        %2626 = vmatprep.subr.mxu0 0.0
        %2627 = vmatpush2.msra.mxu0 0.0
        %2628 = vmatprep.subr.mxu0 0.0
        %2629 = vmatpush2.msra.mxu0 0.0
        %2630 = vmatprep.subr.mxu0 0.0
        %2631 = vmatpush2.msra.mxu0 0.0
        %2632 = vmatprep.subr.mxu0 0.0
        %2633 = vmatpush2.msra.mxu0 0.0
        %2634 = vmatprep.subr.mxu0 0.0
        %2635 = vmatpush2.msra.mxu0 0.0
        %2636 = vmatprep.subr.mxu0 0.0
        %2637 = vmatpush2.msra.mxu0 0.0
        %2638 = vmatprep.subr.mxu0 0.0
        %2639 = vmatpush2.msra.mxu0 0.0
        %2640 = vmatprep.subr.mxu0 0.0
        %2641 = vmatpush2.msra.mxu0 0.0
        %2642 = vmatprep.subr.mxu0 0.0
        %2643 = vmatpush2.msra.mxu0 0.0
        %2644 = vmatprep.subr.mxu0 0.0
        %2645 = vmatpush2.msra.mxu0 0.0
        %2646 = vmatprep.subr.mxu0 0.0
        %2647 = vmatpush2.msra.mxu0 0.0
        %2648 = vmatprep.subr.mxu0 0.0
        %2649 = vmatpush2.msra.mxu0 0.0
        %2650 = vmatprep.subr.mxu0 0.0
        %2651 = vmatpush2.msra.mxu0 0.0
        %2652 = vmatprep.mubr.f32.mxu0 0.0
        %2653 = vmatmul.mubr.f32.gmra.mxu0 %v331
        %v2654 = vpop.f32.mrf.mxu0
        %v2655 = vadd.f32 0.0, %v2654
        %v2656 = vpop.f32.mrf.mxu0
        %2657 = vdwg.mxu0
        %v2658 = vmul.f32 %v2655, 0.0625
        %v2659 = vadd.f32 %v2658, 1e-05
        %v2660 = vrsqrt.pop %v2659
        %v2661 = vlaneseq
        %v2662 = vshrl.u32 %v2661, 7
        %v2663 = vsub.s32 0, %v2662
        %v2664 = vrot.slane %v1836, %v2663
        %v2665 = vmul.f32 %v2664, %v2660
        %2666 = vmatprep.subr.mxu0 0.0
        %2667 = vmatpush1.msra.mxu0 0.0
        %2668 = vmatprep.subr.mxu0 0.0
        %2669 = vmatpush1.msra.mxu0 0.0
        %2670 = vmatprep.subr.mxu0 0.0
        %2671 = vmatpush1.msra.mxu0 0.0
        %2672 = vmatprep.subr.mxu0 0.0
        %2673 = vmatpush1.msra.mxu0 0.0
        %2674 = vmatprep.subr.mxu0 0.0
        %2675 = vmatpush1.msra.mxu0 0.0
        %2676 = vmatprep.subr.mxu0 0.0
        %2677 = vmatpush1.msra.mxu0 0.0
        %2678 = vmatprep.subr.mxu0 0.0
        %2679 = vmatpush1.msra.mxu0 0.0
        %2680 = vmatprep.subr.mxu0 0.0
        %2681 = vmatpush1.msra.mxu0 0.0
        %2682 = vmatprep.subr.mxu0 0.0
        %2683 = vmatpush1.msra.mxu0 0.0
        %2684 = vmatprep.subr.mxu0 0.0
        %2685 = vmatpush1.msra.mxu0 0.0
        %2686 = vmatprep.subr.mxu0 0.0
        %2687 = vmatpush1.msra.mxu0 0.0
        %2688 = vmatprep.subr.mxu0 0.0
        %2689 = vmatpush1.msra.mxu0 0.0
        %2690 = vmatprep.subr.mxu0 0.0
        %2691 = vmatpush1.msra.mxu0 0.0
        %2692 = vmatprep.subr.mxu0 0.0
        %2693 = vmatpush1.msra.mxu0 0.0
        %2694 = vmatprep.subr.mxu0 0.0
        %2695 = vmatpush1.msra.mxu0 0.0
        %2696 = vmatprep.subr.mxu0 0.0
        %2697 = vmatpush1.msra.mxu0 %v2665
        %2698 = vmatprep.subr.mxu0 0.0
        %2699 = vmatpush2.msra.mxu0 0.0
        %2700 = vmatprep.subr.mxu0 0.0
        %2701 = vmatpush2.msra.mxu0 0.0
        %2702 = vmatprep.subr.mxu0 0.0
        %2703 = vmatpush2.msra.mxu0 0.0
        %2704 = vmatprep.subr.mxu0 0.0
        %2705 = vmatpush2.msra.mxu0 0.0
        %2706 = vmatprep.subr.mxu0 0.0
        %2707 = vmatpush2.msra.mxu0 0.0
        %2708 = vmatprep.subr.mxu0 0.0
        %2709 = vmatpush2.msra.mxu0 0.0
        %2710 = vmatprep.subr.mxu0 0.0
        %2711 = vmatpush2.msra.mxu0 0.0
        %2712 = vmatprep.subr.mxu0 0.0
        %2713 = vmatpush2.msra.mxu0 0.0
        %2714 = vmatprep.subr.mxu0 0.0
        %2715 = vmatpush2.msra.mxu0 0.0
        %2716 = vmatprep.subr.mxu0 0.0
        %2717 = vmatpush2.msra.mxu0 0.0
        %2718 = vmatprep.subr.mxu0 0.0
        %2719 = vmatpush2.msra.mxu0 0.0
        %2720 = vmatprep.subr.mxu0 0.0
        %2721 = vmatpush2.msra.mxu0 0.0
        %2722 = vmatprep.subr.mxu0 0.0
        %2723 = vmatpush2.msra.mxu0 0.0
        %2724 = vmatprep.subr.mxu0 0.0
        %2725 = vmatpush2.msra.mxu0 0.0
        %2726 = vmatprep.subr.mxu0 0.0
        %2727 = vmatpush2.msra.mxu0 0.0
        %2728 = vmatprep.subr.mxu0 0.0
        %2729 = vmatpush2.msra.mxu0 0.0
        %2730 = vmatprep.mubr.f32.mxu0 0.0
        %2731 = vmatmul.mubr.f32.gmra.mxu0 %v1336
        %v2732 = vpop.f32.mrf.mxu0
        %v2733 = vadd.f32 0.0, %v2732
        %v2734 = vpop.f32.mrf.mxu0
        %2735 = vmatprep.mubr.f32.mxu0 0.0
        %2736 = vmatmul.mubr.f32.gmra.mxu0 %v1339
        %v2737 = vpop.f32.mrf.mxu0
        %v2738 = vadd.f32 0.0, %v2737
        %v2739 = vpop.f32.mrf.mxu0
        %2740 = vmatprep.mubr.f32.mxu0 0.0
        %2741 = vmatmul.mubr.f32.gmra.mxu0 %v1342
        %v2742 = vpop.f32.mrf.mxu0
        %v2743 = vadd.f32 0.0, %v2742
        %v2744 = vpop.f32.mrf.mxu0
        %2745 = vmatprep.mubr.f32.mxu0 0.0
        %2746 = vmatmul.mubr.f32.gmra.mxu0 %v1345
        %v2747 = vpop.f32.mrf.mxu0
        %v2748 = vadd.f32 0.0, %v2747
        %v2749 = vpop.f32.mrf.mxu0
        %2750 = vmatprep.mubr.f32.mxu0 0.0
        %2751 = vmatmul.mubr.f32.gmra.mxu0 %v1348
        %v2752 = vpop.f32.mrf.mxu0
        %v2753 = vadd.f32 0.0, %v2752
        %v2754 = vpop.f32.mrf.mxu0
        %2755 = vmatprep.mubr.f32.mxu0 0.0
        %2756 = vmatmul.mubr.f32.gmra.mxu0 %v1351
        %v2757 = vpop.f32.mrf.mxu0
        %v2758 = vadd.f32 0.0, %v2757
        %v2759 = vpop.f32.mrf.mxu0
        %2760 = vmatprep.mubr.f32.mxu0 0.0
        %2761 = vmatmul.mubr.f32.gmra.mxu0 %v1354
        %v2762 = vpop.f32.mrf.mxu0
        %v2763 = vadd.f32 0.0, %v2762
        %v2764 = vpop.f32.mrf.mxu0
        %2765 = vmatprep.mubr.f32.mxu0 0.0
        %2766 = vmatmul.mubr.f32.gmra.mxu0 %v1357
        %v2767 = vpop.f32.mrf.mxu0
        %v2768 = vadd.f32 0.0, %v2767
        %v2769 = vpop.f32.mrf.mxu0
        %2770 = vmatprep.mubr.f32.mxu0 0.0
        %2771 = vmatmul.mubr.f32.gmra.mxu0 %v1360
        %v2772 = vpop.f32.mrf.mxu0
        %v2773 = vadd.f32 0.0, %v2772
        %v2774 = vpop.f32.mrf.mxu0
        %2775 = vmatprep.mubr.f32.mxu0 0.0
        %2776 = vmatmul.mubr.f32.gmra.mxu0 %v1363
        %v2777 = vpop.f32.mrf.mxu0
        %v2778 = vadd.f32 0.0, %v2777
        %v2779 = vpop.f32.mrf.mxu0
        %2780 = vmatprep.mubr.f32.mxu0 0.0
        %2781 = vmatmul.mubr.f32.gmra.mxu0 %v1366
        %v2782 = vpop.f32.mrf.mxu0
        %v2783 = vadd.f32 0.0, %v2782
        %v2784 = vpop.f32.mrf.mxu0
        %2785 = vmatprep.mubr.f32.mxu0 0.0
        %2786 = vmatmul.mubr.f32.gmra.mxu0 %v1369
        %v2787 = vpop.f32.mrf.mxu0
        %v2788 = vadd.f32 0.0, %v2787
        %v2789 = vpop.f32.mrf.mxu0
        %2790 = vmatprep.mubr.f32.mxu0 0.0
        %2791 = vmatmul.mubr.f32.gmra.mxu0 %v1372
        %v2792 = vpop.f32.mrf.mxu0
        %v2793 = vadd.f32 0.0, %v2792
        %v2794 = vpop.f32.mrf.mxu0
        %2795 = vmatprep.mubr.f32.mxu0 0.0
        %2796 = vmatmul.mubr.f32.gmra.mxu0 %v1375
        %v2797 = vpop.f32.mrf.mxu0
        %v2798 = vadd.f32 0.0, %v2797
        %v2799 = vpop.f32.mrf.mxu0
        %2800 = vmatprep.mubr.f32.mxu0 0.0
        %2801 = vmatmul.mubr.f32.gmra.mxu0 %v1378
        %v2802 = vpop.f32.mrf.mxu0
        %v2803 = vadd.f32 0.0, %v2802
        %v2804 = vpop.f32.mrf.mxu0
        %2805 = vmatprep.mubr.f32.mxu0 0.0
        %2806 = vmatmul.mubr.f32.gmra.mxu0 %v1381
        %v2807 = vpop.f32.mrf.mxu0
        %v2808 = vadd.f32 0.0, %v2807
        %v2809 = vpop.f32.mrf.mxu0
        %2810 = vdwg.mxu0
        %v2811 = vmul.f32 %v2556, %v2733
        %v2812 = vmul.f32 %v2557, %v2738
        %v2813 = vmul.f32 %v2558, %v2743
        %v2814 = vmul.f32 %v2559, %v2748
        %v2815 = vmul.f32 %v2560, %v2753
        %v2816 = vmul.f32 %v2561, %v2758
        %v2817 = vmul.f32 %v2562, %v2763
        %v2818 = vmul.f32 %v2563, %v2768
        %v2819 = vmul.f32 %v2564, %v2773
        %v2820 = vmul.f32 %v2565, %v2778
        %v2821 = vmul.f32 %v2566, %v2783
        %v2822 = vmul.f32 %v2567, %v2788
        %v2823 = vmul.f32 %v2568, %v2793
        %v2824 = vmul.f32 %v2569, %v2798
        %v2825 = vmul.f32 %v2570, %v2803
        %v2826 = vmul.f32 %v2571, %v2808
        %v2827 = vlaneseq
        %v2828 = vshrl.u32 %v2827, 7
        %v2829 = vsub.s32 0, %v2828
        %v2830 = vrot.slane %v1837, %v2829
        %v2831 = vadd.f32 %v2811, %v2830
        %v2832 = vadd.f32 %v2812, %v2830
        %v2833 = vadd.f32 %v2813, %v2830
        %v2834 = vadd.f32 %v2814, %v2830
        %v2835 = vadd.f32 %v2815, %v2830
        %v2836 = vadd.f32 %v2816, %v2830
        %v2837 = vadd.f32 %v2817, %v2830
        %v2838 = vadd.f32 %v2818, %v2830
        %v2839 = vadd.f32 %v2819, %v2830
        %v2840 = vadd.f32 %v2820, %v2830
        %v2841 = vadd.f32 %v2821, %v2830
        %v2842 = vadd.f32 %v2822, %v2830
        %v2843 = vadd.f32 %v2823, %v2830
        %v2844 = vadd.f32 %v2824, %v2830
        %v2845 = vadd.f32 %v2825, %v2830
        %v2846 = vadd.f32 %v2826, %v2830
        %v2847 = vmax.f32 %v2831, 0.0
        %v2848 = vmax.f32 %v2832, 0.0
        %v2849 = vmax.f32 %v2833, 0.0
        %v2850 = vmax.f32 %v2834, 0.0
        %v2851 = vmax.f32 %v2835, 0.0
        %v2852 = vmax.f32 %v2836, 0.0
        %v2853 = vmax.f32 %v2837, 0.0
        %v2854 = vmax.f32 %v2838, 0.0
        %v2855 = vmax.f32 %v2839, 0.0
        %v2856 = vmax.f32 %v2840, 0.0
        %v2857 = vmax.f32 %v2841, 0.0
        %v2858 = vmax.f32 %v2842, 0.0
        %v2859 = vmax.f32 %v2843, 0.0
        %v2860 = vmax.f32 %v2844, 0.0
        %v2861 = vmax.f32 %v2845, 0.0
        %v2862 = vmax.f32 %v2846, 0.0
        %v2863 = vld [vmem:[%s3 + $0x18] sm:$0xf]
        %v2864 = vpack.c.bf16 %v2848, %v2847
        %v2865 = vpack.c.bf16 %v2850, %v2849
        %v2866 = vpack.c.bf16 %v2852, %v2851
        %v2867 = vpack.c.bf16 %v2854, %v2853
        %v2868 = vpack.c.bf16 %v2856, %v2855
        %v2869 = vpack.c.bf16 %v2858, %v2857
        %v2870 = vpack.c.bf16 %v2860, %v2859
        %v2871 = vpack.c.bf16 %v2862, %v2861
        %v2872 = vld [vmem:[%s4 + $0x5] sm:$0x1]
        %v2873 = vlaneseq
        %v2874 = vshrl.u32 %v2873, 7
        %v2875 = vsub.s32 0, %v2874
        %v2876 = vrot.slane %v2872, %v2875
        %v2878 = vsel %vm720, %v2864, 0
        %v2881 = vsel %vm720, %v2865, 0
        %v2884 = vsel %vm720, %v2866, 0
        %v2887 = vsel %vm720, %v2867, 0
        %v2890 = vsel %vm720, %v2868, 0
        %v2893 = vsel %vm720, %v2869, 0
        %v2896 = vsel %vm720, %v2870, 0
        %v2899 = vsel %vm720, %v2871, 0
        %v2902 = vsel %vm745, %v2863, 0
        %2904 = vmatprep.subr.bf16.mxu0 0
        %2905 = vmatpush1.bf16.msra.mxu0 0
        %2906 = vmatprep.subr.bf16.mxu0 0
        %2907 = vmatpush1.bf16.msra.mxu0 0
        %2908 = vmatprep.subr.bf16.mxu0 0
        %2909 = vmatpush1.bf16.msra.mxu0 0
        %2910 = vmatprep.subr.bf16.mxu0 0
        %2911 = vmatpush1.bf16.msra.mxu0 0
        %2912 = vmatprep.subr.bf16.mxu0 0
        %2913 = vmatpush1.bf16.msra.mxu0 0
        %2914 = vmatprep.subr.bf16.mxu0 0
        %2915 = vmatpush1.bf16.msra.mxu0 0
        %2916 = vmatprep.subr.bf16.mxu0 0
        %2917 = vmatpush1.bf16.msra.mxu0 0
        %2918 = vmatprep.subr.bf16.mxu0 0
        %2919 = vmatpush1.bf16.msra.mxu0 %v2902
        %2920 = vmatprep.subr.bf16.mxu0 0
        %2921 = vmatpush2.bf16.msra.mxu0 0
        %2922 = vmatprep.subr.bf16.mxu0 0
        %2923 = vmatpush2.bf16.msra.mxu0 0
        %2924 = vmatprep.subr.bf16.mxu0 0
        %2925 = vmatpush2.bf16.msra.mxu0 0
        %2926 = vmatprep.subr.bf16.mxu0 0
        %2927 = vmatpush2.bf16.msra.mxu0 0
        %2928 = vmatprep.subr.bf16.mxu0 0
        %2929 = vmatpush2.bf16.msra.mxu0 0
        %2930 = vmatprep.subr.bf16.mxu0 0
        %2931 = vmatpush2.bf16.msra.mxu0 0
        %2932 = vmatprep.subr.bf16.mxu0 0
        %2933 = vmatpush2.bf16.msra.mxu0 0
        %2934 = vmatprep.subr.bf16.mxu0 0
        %2935 = vmatpush2.bf16.msra.mxu0 0
        %2936 = vmatprep.mubr.bf16.mxu0 0
        %2937 = vmatmul.mubr.bf16.gmra.mxu0 %v2878
        %v2938 = vpop.f32.mrf.mxu0
        %v2939 = vadd.f32 %v2876, %v2938
        %v2940 = vpop.f32.mrf.mxu0
        %v2941 = vpop.f32.mrf.mxu0
        %v2942 = vadd.f32 %v2876, %v2941
        %v2943 = vpop.f32.mrf.mxu0
        %2944 = vmatprep.mubr.bf16.mxu0 0
        %2945 = vmatmul.mubr.bf16.gmra.mxu0 %v2881
        %v2946 = vpop.f32.mrf.mxu0
        %v2947 = vadd.f32 %v2876, %v2946
        %v2948 = vpop.f32.mrf.mxu0
        %v2949 = vpop.f32.mrf.mxu0
        %v2950 = vadd.f32 %v2876, %v2949
        %v2951 = vpop.f32.mrf.mxu0
        %2952 = vmatprep.mubr.bf16.mxu0 0
        %2953 = vmatmul.mubr.bf16.gmra.mxu0 %v2884
        %v2954 = vpop.f32.mrf.mxu0
        %v2955 = vadd.f32 %v2876, %v2954
        %v2956 = vpop.f32.mrf.mxu0
        %v2957 = vpop.f32.mrf.mxu0
        %v2958 = vadd.f32 %v2876, %v2957
        %v2959 = vpop.f32.mrf.mxu0
        %2960 = vmatprep.mubr.bf16.mxu0 0
        %2961 = vmatmul.mubr.bf16.gmra.mxu0 %v2887
        %v2962 = vpop.f32.mrf.mxu0
        %v2963 = vadd.f32 %v2876, %v2962
        %v2964 = vpop.f32.mrf.mxu0
        %v2965 = vpop.f32.mrf.mxu0
        %v2966 = vadd.f32 %v2876, %v2965
        %v2967 = vpop.f32.mrf.mxu0
        %2968 = vmatprep.mubr.bf16.mxu0 0
        %2969 = vmatmul.mubr.bf16.gmra.mxu0 %v2890
        %v2970 = vpop.f32.mrf.mxu0
        %v2971 = vadd.f32 %v2876, %v2970
        %v2972 = vpop.f32.mrf.mxu0
        %v2973 = vpop.f32.mrf.mxu0
        %v2974 = vadd.f32 %v2876, %v2973
        %v2975 = vpop.f32.mrf.mxu0
        %2976 = vmatprep.mubr.bf16.mxu0 0
        %2977 = vmatmul.mubr.bf16.gmra.mxu0 %v2893
        %v2978 = vpop.f32.mrf.mxu0
        %v2979 = vadd.f32 %v2876, %v2978
        %v2980 = vpop.f32.mrf.mxu0
        %v2981 = vpop.f32.mrf.mxu0
        %v2982 = vadd.f32 %v2876, %v2981
        %v2983 = vpop.f32.mrf.mxu0
        %2984 = vmatprep.mubr.bf16.mxu0 0
        %2985 = vmatmul.mubr.bf16.gmra.mxu0 %v2896
        %v2986 = vpop.f32.mrf.mxu0
        %v2987 = vadd.f32 %v2876, %v2986
        %v2988 = vpop.f32.mrf.mxu0
        %v2989 = vpop.f32.mrf.mxu0
        %v2990 = vadd.f32 %v2876, %v2989
        %v2991 = vpop.f32.mrf.mxu0
        %2992 = vmatprep.mubr.bf16.mxu0 0
        %2993 = vmatmul.mubr.bf16.gmra.mxu0 %v2899
        %v2994 = vpop.f32.mrf.mxu0
        %v2995 = vadd.f32 %v2876, %v2994
        %v2996 = vpop.f32.mrf.mxu0
        %v2997 = vpop.f32.mrf.mxu0
        %v2998 = vadd.f32 %v2876, %v2997
        %v2999 = vpop.f32.mrf.mxu0
        %3000 = vdwg.mxu0
        %3001 = vmatprep.subr.mxu0 0.0
        %3002 = vmatpush1.msra.mxu0 %v2998
        %3003 = vmatprep.subr.mxu0 0.0
        %3004 = vmatpush1.msra.mxu0 %v2995
        %3005 = vmatprep.subr.mxu0 0.0
        %3006 = vmatpush1.msra.mxu0 %v2990
        %3007 = vmatprep.subr.mxu0 0.0
        %3008 = vmatpush1.msra.mxu0 %v2987
        %3009 = vmatprep.subr.mxu0 0.0
        %3010 = vmatpush1.msra.mxu0 %v2982
        %3011 = vmatprep.subr.mxu0 0.0
        %3012 = vmatpush1.msra.mxu0 %v2979
        %3013 = vmatprep.subr.mxu0 0.0
        %3014 = vmatpush1.msra.mxu0 %v2974
        %3015 = vmatprep.subr.mxu0 0.0
        %3016 = vmatpush1.msra.mxu0 %v2971
        %3017 = vmatprep.subr.mxu0 0.0
        %3018 = vmatpush1.msra.mxu0 %v2966
        %3019 = vmatprep.subr.mxu0 0.0
        %3020 = vmatpush1.msra.mxu0 %v2963
        %3021 = vmatprep.subr.mxu0 0.0
        %3022 = vmatpush1.msra.mxu0 %v2958
        %3023 = vmatprep.subr.mxu0 0.0
        %3024 = vmatpush1.msra.mxu0 %v2955
        %3025 = vmatprep.subr.mxu0 0.0
        %3026 = vmatpush1.msra.mxu0 %v2950
        %3027 = vmatprep.subr.mxu0 0.0
        %3028 = vmatpush1.msra.mxu0 %v2947
        %3029 = vmatprep.subr.mxu0 0.0
        %3030 = vmatpush1.msra.mxu0 %v2942
        %3031 = vmatprep.subr.mxu0 0.0
        %3032 = vmatpush1.msra.mxu0 %v2939
        %3033 = vmatprep.subr.mxu0 0.0
        %3034 = vmatpush2.msra.mxu0 0.0
        %3035 = vmatprep.subr.mxu0 0.0
        %3036 = vmatpush2.msra.mxu0 0.0
        %3037 = vmatprep.subr.mxu0 0.0
        %3038 = vmatpush2.msra.mxu0 0.0
        %3039 = vmatprep.subr.mxu0 0.0
        %3040 = vmatpush2.msra.mxu0 0.0
        %3041 = vmatprep.subr.mxu0 0.0
        %3042 = vmatpush2.msra.mxu0 0.0
        %3043 = vmatprep.subr.mxu0 0.0
        %3044 = vmatpush2.msra.mxu0 0.0
        %3045 = vmatprep.subr.mxu0 0.0
        %3046 = vmatpush2.msra.mxu0 0.0
        %3047 = vmatprep.subr.mxu0 0.0
        %3048 = vmatpush2.msra.mxu0 0.0
        %3049 = vmatprep.subr.mxu0 0.0
        %3050 = vmatpush2.msra.mxu0 0.0
        %3051 = vmatprep.subr.mxu0 0.0
        %3052 = vmatpush2.msra.mxu0 0.0
        %3053 = vmatprep.subr.mxu0 0.0
        %3054 = vmatpush2.msra.mxu0 0.0
        %3055 = vmatprep.subr.mxu0 0.0
        %3056 = vmatpush2.msra.mxu0 0.0
        %3057 = vmatprep.subr.mxu0 0.0
        %3058 = vmatpush2.msra.mxu0 0.0
        %3059 = vmatprep.subr.mxu0 0.0
        %3060 = vmatpush2.msra.mxu0 0.0
        %3061 = vmatprep.subr.mxu0 0.0
        %3062 = vmatpush2.msra.mxu0 0.0
        %3063 = vmatprep.subr.mxu0 0.0
        %3064 = vmatpush2.msra.mxu0 0.0
        %3065 = vmatprep.mubr.f32.mxu0 0.0
        %3066 = vmatmul.mubr.f32.gmra.mxu0 %v331
        %v3067 = vpop.f32.mrf.mxu0
        %v3068 = vadd.f32 0.0, %v3067
        %v3069 = vpop.f32.mrf.mxu0
        %3070 = vdwg.mxu0
        %v3071 = vmul.f32 %v3068, 0.0625
        %v3072 = vld [vmem:[%s3 + $0x1c] sm:$0xf]
        %v3073 = vld [vmem:[%s3 + $0x20] sm:$0xf]
        %v3074 = vld [vmem:[%s3 + $0x24] sm:$0xf]
        %v3075 = vld [vmem:[%s3 + $0x28] sm:$0xf]
        %v3076 = vpack.c.bf16 %v3071, %v3071
        %v3077 = vld [vmem:[%s4 + $0x6] sm:$0x1]
        %v3078 = vlaneseq
        %v3079 = vshrl.u32 %v3078, 7
        %v3080 = vsub.s32 0, %v3079
        %v3081 = vrot.slane %v3077, %v3080
        %v3086 = vunpack.c.l.b16 %v3072
        %v3087 = vunpack.c.l.b16 %v3073
        %v3088 = vunpack.c.l.b16 %v3074
        %v3089 = vunpack.c.l.b16 %v3075
        %v3090 = vpack.c.b16 %v3087, %v3086
        %v3091 = vpack.c.b16 %v3089, %v3088
        %v3095 = vsel %vm491, %v3076, 0
        %3097 = vmatprep.subr.bf16.mxu0 0
        %3098 = vmatpush1.bf16.msra.mxu0 0
        %3099 = vmatprep.subr.bf16.mxu0 0
        %3100 = vmatpush1.bf16.msra.mxu0 0
        %3101 = vmatprep.subr.bf16.mxu0 0
        %3102 = vmatpush1.bf16.msra.mxu0 0
        %3103 = vmatprep.subr.bf16.mxu0 0
        %3104 = vmatpush1.bf16.msra.mxu0 0
        %3105 = vmatprep.subr.bf16.mxu0 0
        %3106 = vmatpush1.bf16.msra.mxu0 0
        %3107 = vmatprep.subr.bf16.mxu0 0
        %3108 = vmatpush1.bf16.msra.mxu0 0
        %3109 = vmatprep.subr.bf16.mxu0 0
        %3110 = vmatpush1.bf16.msra.mxu0 %v3091
        %3111 = vmatprep.subr.bf16.mxu0 0
        %3112 = vmatpush1.bf16.msra.mxu0 %v3090
        %3113 = vmatprep.subr.bf16.mxu0 0
        %3114 = vmatpush2.bf16.msra.mxu0 0
        %3115 = vmatprep.subr.bf16.mxu0 0
        %3116 = vmatpush2.bf16.msra.mxu0 0
        %3117 = vmatprep.subr.bf16.mxu0 0
        %3118 = vmatpush2.bf16.msra.mxu0 0
        %3119 = vmatprep.subr.bf16.mxu0 0
        %3120 = vmatpush2.bf16.msra.mxu0 0
        %3121 = vmatprep.subr.bf16.mxu0 0
        %3122 = vmatpush2.bf16.msra.mxu0 0
        %3123 = vmatprep.subr.bf16.mxu0 0
        %3124 = vmatpush2.bf16.msra.mxu0 0
        %3125 = vmatprep.subr.bf16.mxu0 0
        %3126 = vmatpush2.bf16.msra.mxu0 0
        %3127 = vmatprep.subr.bf16.mxu0 0
        %3128 = vmatpush2.bf16.msra.mxu0 0
        %3129 = vmatprep.mubr.bf16.mxu0 0
        %3130 = vmatmul.mubr.bf16.gmra.mxu0 %v3095
        %v3131 = vpop.f32.mrf.mxu0
        %v3132 = vadd.f32 %v3081, %v3131
        %v3133 = vpop.f32.mrf.mxu0
        %v3134 = vpop.f32.mrf.mxu0
        %v3135 = vpop.f32.mrf.mxu0
        %3136 = vdwg.mxu0
        %v3137 = vmax.f32 %v3132, 0.0
        %v3138 = vld [vmem:[%s3 + $0x2c] sm:$0xf]
        %v3139 = vld [vmem:[%s3 + $0x30] sm:$0xf]
        %v3140 = vpack.c.bf16 %v3137, %v3137
        %v3141 = vld [vmem:[%s4 + $0x7] sm:$0x1]
        %v3142 = vlaneseq
        %v3143 = vshrl.u32 %v3142, 7
        %v3144 = vsub.s32 0, %v3143
        %v3145 = vrot.slane %v3141, %v3144
        %v3148 = vunpack.c.l.b16 %v3138
        %v3149 = vunpack.c.l.b16 %v3139
        %v3150 = vpack.c.b16 %v3149, %v3148
        %vm3152 = vcmask 130048
        %v3154 = vsel %vm3152, %v3140, 0
        %3156 = vmatprep.subr.bf16.mxu0 0
        %3157 = vmatpush1.bf16.msra.mxu0 0
        %3158 = vmatprep.subr.bf16.mxu0 0
        %3159 = vmatpush1.bf16.msra.mxu0 0
        %3160 = vmatprep.subr.bf16.mxu0 0
        %3161 = vmatpush1.bf16.msra.mxu0 0
        %3162 = vmatprep.subr.bf16.mxu0 0
        %3163 = vmatpush1.bf16.msra.mxu0 0
        %3164 = vmatprep.subr.bf16.mxu0 0
        %3165 = vmatpush1.bf16.msra.mxu0 0
        %3166 = vmatprep.subr.bf16.mxu0 0
        %3167 = vmatpush1.bf16.msra.mxu0 0
        %3168 = vmatprep.subr.bf16.mxu0 0
        %3169 = vmatpush1.bf16.msra.mxu0 0
        %3170 = vmatprep.subr.bf16.mxu0 0
        %3171 = vmatpush1.bf16.msra.mxu0 %v3150
        %3172 = vmatprep.subr.bf16.mxu0 0
        %3173 = vmatpush2.bf16.msra.mxu0 0
        %3174 = vmatprep.subr.bf16.mxu0 0
        %3175 = vmatpush2.bf16.msra.mxu0 0
        %3176 = vmatprep.subr.bf16.mxu0 0
        %3177 = vmatpush2.bf16.msra.mxu0 0
        %3178 = vmatprep.subr.bf16.mxu0 0
        %3179 = vmatpush2.bf16.msra.mxu0 0
        %3180 = vmatprep.subr.bf16.mxu0 0
        %3181 = vmatpush2.bf16.msra.mxu0 0
        %3182 = vmatprep.subr.bf16.mxu0 0
        %3183 = vmatpush2.bf16.msra.mxu0 0
        %3184 = vmatprep.subr.bf16.mxu0 0
        %3185 = vmatpush2.bf16.msra.mxu0 0
        %3186 = vmatprep.subr.bf16.mxu0 0
        %3187 = vmatpush2.bf16.msra.mxu0 0
        %3188 = vmatprep.mubr.bf16.mxu0 0
        %3189 = vmatmul.mubr.bf16.gmra.mxu0 %v3154
        %v3190 = vpop.f32.mrf.mxu0
        %v3191 = vadd.f32 %v3145, %v3190
        %v3192 = vpop.f32.mrf.mxu0
        %v3193 = vpop.f32.mrf.mxu0
        %v3194 = vpop.f32.mrf.mxu0
        %3195 = vdwg.mxu0
        %v3196 = vmul.f32 %v3191, 0.5
        %v3197 = vmul.f32 %v3196, 1.442695
        %v3198 = vpow.pop %v3197
        %v3199 = vld [vmem:[%s282] sm:$0xff]
        %3201 = vrot.lane.b32.xlu0 %v3198, 120
        %v3202 = vpop.permute.xlu0 %3201
        %v3204 = vmul.f32 %v3199, %v3202
        %v3205 = vadd.f32 %v3191, %v3204
        %v3206 = vld [vmem:[%s3 + $0x34] sm:$0xf]
        %v3207 = vpack.c.bf16 %v3205, %v3205
        %v3208 = vld [vmem:[%s4 + $0x8] sm:$0x1]
        %v3209 = vlaneseq
        %v3210 = vshrl.u32 %v3209, 7
        %v3211 = vsub.s32 0, %v3210
        %v3212 = vrot.slane %v3208, %v3211
        %v3214 = vsel %vm720, %v3207, 0
        %v3217 = vsel %vm745, %v3206, 0
        %3219 = vmatprep.subr.bf16.mxu0 0
        %3220 = vmatpush1.bf16.msra.mxu0 0
        %3221 = vmatprep.subr.bf16.mxu0 0
        %3222 = vmatpush1.bf16.msra.mxu0 0
        %3223 = vmatprep.subr.bf16.mxu0 0
        %3224 = vmatpush1.bf16.msra.mxu0 0
        %3225 = vmatprep.subr.bf16.mxu0 0
        %3226 = vmatpush1.bf16.msra.mxu0 0
        %3227 = vmatprep.subr.bf16.mxu0 0
        %3228 = vmatpush1.bf16.msra.mxu0 0
        %3229 = vmatprep.subr.bf16.mxu0 0
        %3230 = vmatpush1.bf16.msra.mxu0 0
        %3231 = vmatprep.subr.bf16.mxu0 0
        %3232 = vmatpush1.bf16.msra.mxu0 0
        %3233 = vmatprep.subr.bf16.mxu0 0
        %3234 = vmatpush1.bf16.msra.mxu0 %v3217
        %3235 = vmatprep.subr.bf16.mxu0 0
        %3236 = vmatpush2.bf16.msra.mxu0 0
        %3237 = vmatprep.subr.bf16.mxu0 0
        %3238 = vmatpush2.bf16.msra.mxu0 0
        %3239 = vmatprep.subr.bf16.mxu0 0
        %3240 = vmatpush2.bf16.msra.mxu0 0
        %3241 = vmatprep.subr.bf16.mxu0 0
        %3242 = vmatpush2.bf16.msra.mxu0 0
        %3243 = vmatprep.subr.bf16.mxu0 0
        %3244 = vmatpush2.bf16.msra.mxu0 0
        %3245 = vmatprep.subr.bf16.mxu0 0
        %3246 = vmatpush2.bf16.msra.mxu0 0
        %3247 = vmatprep.subr.bf16.mxu0 0
        %3248 = vmatpush2.bf16.msra.mxu0 0
        %3249 = vmatprep.subr.bf16.mxu0 0
        %3250 = vmatpush2.bf16.msra.mxu0 0
        %3251 = vmatprep.mubr.bf16.mxu0 0
        %3252 = vmatmul.mubr.bf16.gmra.mxu0 %v3214
        %v3253 = vpop.f32.mrf.mxu0
        %v3254 = vadd.f32 %v3212, %v3253
        %v3255 = vpop.f32.mrf.mxu0
        %v3256 = vpop.f32.mrf.mxu0
        %v3257 = vpop.f32.mrf.mxu0
        %3258 = vdwg.mxu0
        %v3259 = vmax.f32 %v3254, 0.0
        %v3260 = vld [vmem:[%s3 + $0x38] sm:$0xf]
        %v3261 = vld [vmem:[%s3 + $0x3c] sm:$0xf]
        %v3262 = vpack.c.bf16 %v3259, %v3259
        %v3263 = vld [vmem:[%s4 + $0x9] sm:$0x1]
        %v3264 = vlaneseq
        %v3265 = vshrl.u32 %v3264, 7
        %v3266 = vsub.s32 0, %v3265
        %v3267 = vrot.slane %v3263, %v3266
        %v3270 = vunpack.c.l.b16 %v3260
        %v3271 = vunpack.c.l.b16 %v3261
        %v3272 = vpack.c.b16 %v3271, %v3270
        %v3275 = vsel %vm3152, %v3262, 0
        %3277 = vmatprep.subr.bf16.mxu0 0
        %3278 = vmatpush1.bf16.msra.mxu0 0
        %3279 = vmatprep.subr.bf16.mxu0 0
        %3280 = vmatpush1.bf16.msra.mxu0 0
        %3281 = vmatprep.subr.bf16.mxu0 0
        %3282 = vmatpush1.bf16.msra.mxu0 0
        %3283 = vmatprep.subr.bf16.mxu0 0
        %3284 = vmatpush1.bf16.msra.mxu0 0
        %3285 = vmatprep.subr.bf16.mxu0 0
        %3286 = vmatpush1.bf16.msra.mxu0 0
        %3287 = vmatprep.subr.bf16.mxu0 0
        %3288 = vmatpush1.bf16.msra.mxu0 0
        %3289 = vmatprep.subr.bf16.mxu0 0
        %3290 = vmatpush1.bf16.msra.mxu0 0
        %3291 = vmatprep.subr.bf16.mxu0 0
        %3292 = vmatpush1.bf16.msra.mxu0 %v3272
        %3293 = vmatprep.subr.bf16.mxu0 0
        %3294 = vmatpush2.bf16.msra.mxu0 0
        %3295 = vmatprep.subr.bf16.mxu0 0
        %3296 = vmatpush2.bf16.msra.mxu0 0
        %3297 = vmatprep.subr.bf16.mxu0 0
        %3298 = vmatpush2.bf16.msra.mxu0 0
        %3299 = vmatprep.subr.bf16.mxu0 0
        %3300 = vmatpush2.bf16.msra.mxu0 0
        %3301 = vmatprep.subr.bf16.mxu0 0
        %3302 = vmatpush2.bf16.msra.mxu0 0
        %3303 = vmatprep.subr.bf16.mxu0 0
        %3304 = vmatpush2.bf16.msra.mxu0 0
        %3305 = vmatprep.subr.bf16.mxu0 0
        %3306 = vmatpush2.bf16.msra.mxu0 0
        %3307 = vmatprep.subr.bf16.mxu0 0
        %3308 = vmatpush2.bf16.msra.mxu0 0
        %3309 = vmatprep.mubr.bf16.mxu0 0
        %3310 = vmatmul.mubr.bf16.gmra.mxu0 %v3275
        %v3311 = vpop.f32.mrf.mxu0
        %v3312 = vadd.f32 %v3267, %v3311
        %v3313 = vpop.f32.mrf.mxu0
        %v3314 = vpop.f32.mrf.mxu0
        %v3315 = vpop.f32.mrf.mxu0
        %3316 = vdwg.mxu0
        %v3317 = vmul.f32 %v3312, 0.5
        %v3318 = vmul.f32 %v3317, 1.442695
        %v3319 = vpow.pop %v3318
        %3321 = vrot.lane.b32.xlu0 %v3319, 104
        %v3322 = vpop.permute.xlu0 %3321
        %v3324 = vmul.f32 %v3199, %v3322
        %3326 = vrot.lane.b32.xlu0 %v3324, 120
        %v3327 = vpop.permute.xlu0 %3326
        %v3329 = vadd.f32 %v3312, %v3327
        %v3330 = vadd.f32 %v3312, 1.6514962
        %v3331 = vsub.f32 %v3071, %v3312
        %v3332 = vmul.f32 %v3331, %v3331
        %v3333 = vmul.f32 %v3332, 0.5
        %v3334 = vmul.f32 %v3319, %v3319
        %v3335 = vrcp.pop %v3334
        %3337 = vrot.lane.b32.xlu0 %v3335, 96
        %v3338 = vpop.permute.xlu0 %3337
        %v3340 = vmul.f32 %v3333, %v3338
        %3342 = vrot.lane.b32.xlu0 %v3340, 32
        %v3343 = vpop.permute.xlu0 %3342
        %v3345 = vadd.f32 %v3330, %v3343
        %v3346 = vadd.f32 %v3191, 1.0
        %v3347 = vmul.f32 %v3191, %v3191
        %3349 = vrot.lane.b32.xlu0 %v3347, 8
        %v3350 = vpop.permute.xlu0 %3349
        %v3352 = vsub.f32 %v3346, %v3350
        %v3353 = vmul.f32 %v3198, %v3198
        %v3354 = vsub.f32 %v3352, %v3353
        %3356 = vrot.lane.b32.xlu0 %v3354, 120
        %v3357 = vpop.permute.xlu0 %3356
        %v3359 = vsel %vm720, %v3357, 0.0
        %3360 = vadd.xlane.f32.xlu0 %v3359
        %v3361 = vpop.xlane.xlu0 %3360
        %v3362 = vmul.f32 %v3361, -0.5
        %v3363 = vsel %vm491, %v3329, %v3345
        %vm3364 = vcmask 523264
        %v3365 = vsel %vm3364, %v3363, %v3362
        %vm3366 = vcmask 531456
        %v3367 = vsel %vm3366, %v3365, 0.0
        %3368 = vst [vmem:[%s286] sm:$0xff] %v3367
        %p3369 = scmp.lt.s32.totalorder %s19, 3
        %s3370 = scalar_select %p3369, %s19, 3
        %s3371 = smul.addr %s3370, 8
        %s3372 = scalar_lea.vmem %s5, %s3371
        // Predicated region
        $region45: #{forward.1} parent=39 // pred_check
          %p3373 = pneg %p159
        $region46: #{forward.1} parent=39 // pred_check_branch
          %3375 = sbr.rel (%p3373) target = $region48
        $region47: #{forward.1} parent=39 // pred_region
          _
        $region48: #{forward.1} parent=39 // pred_fallthru
          _
      $region40: #{forward.1} parent=5 // pred_fallthru
        _
      %p3376 = scmp.le.s32.totalorder 2, %s14
      // Predicated region
      $region49: #{forward.1} parent=5 // pred_check
        %p3377 = pneg %p3376
      $region50: #{forward.1} parent=5 // pred_check_branch
        %3379 = sbr.rel (%p3377) target = $region52
      $region51: #{forward.1} parent=5 // pred_region
        %s3380 = ssub.s32 %s14, 2
        // Predicated region
        $region53: #{forward.1} parent=51 // pred_check
          %p3381 = pneg %p165
        $region54: #{forward.1} parent=51 // pred_check_branch
          %3383 = sbr.rel (%p3381) target = $region56
        $region55: #{forward.1} parent=51 // pred_region
          %p3384 = scmp.lt.s32.totalorder %s20, 3
          %s3385 = scalar_select %p3384, %s20, 3
          %s3386 = smul.addr %s3385, 8
          %s3387 = scalar_lea.vmem %s5, %s3386
        $region56: #{forward.1} parent=51 // pred_fallthru
          _
      $region52: #{forward.1} parent=5 // pred_fallthru
        _
    $region6: #{forward.1} parent=1 // loop_footer
      %s18 = sadd.s32 1, %s14
    $region7: #{forward.1} parent=1 // loop_footer_branch
      %13 = sbr.rel target = $region3
    $region8: #{forward.1} parent=1 // loop_exit
      _
    %3388 = vsyncpa [#allocation3], 1
    %s3389 = scalar_lea.sflag [#allocation3], 1
    %3390 = vsyncpa %s3389, 1

</llo_original>
